<compile_context>
chip_gen: v6e
topology: v6e:2x2x1
jax: 0.10.0
libtpu: 0.0.40
codegen_flags: <defaults>
</compile_context>

<pallas_src>
import math

import jax
import jax.numpy as jnp
from jax import lax
from jax.experimental import pallas as pl
from jax.experimental.pallas import tpu as pltpu

# Constants from the PyTorch module.
d_Q = 64
d_V = 64
d_model = 256
n_head = 8
_LN_EPS = 1e-5


# ---------------------------------------------------------------------------
# Fused kernel: one grid step = one batch element.
# ---------------------------------------------------------------------------
def _mha_kernel(xq_ref, xk_ref, xv_ref, m_ref,
                wq_ref, wk_ref, wv_ref, wfc_ref, g_ref, b_ref, o_ref):
    # xq/xk/xv refs: (1, L, d_model) f32 ; m_ref: (1, Lq, Lk) int8
    # wq/wk/wv refs: (n_head*d, d_model) bf16 ; wfc: (d_model, n_head*d_V) bf16
    xq = xq_ref[0]                       # (Lq, d_model) f32 (also the residual)
    xk = xk_ref[0]                       # (Lk, d_model) f32
    xv = xv_ref[0]                       # (Lk, d_model) f32
    # Hoist the boolean mask once; reused by both jnp.where calls in every head.
    mask = m_ref[0] != 0                 # (Lq, Lk) bool

    def proj(x_f32, w_ref):
        # y = x @ W^T on the MXU, bf16 inputs / f32 accumulation.
        return lax.dot_general(
            x_f32.astype(jnp.bfloat16), w_ref[...],
            dimension_numbers=(((1,), (1,)), ((), ())),
            preferred_element_type=jnp.float32)          # (L, H*d) f32

    # Fold 1/sqrt(d_Q) into Q (touches L*H*d_Q elements, not H*L*Lk scores).
    q2d = proj(xq, wq_ref) * jnp.float32(1.0 / math.sqrt(d_Q))   # (Lq, H*d_Q)
    k2d = proj(xk, wk_ref)                                       # (Lk, H*d_Q)
    v2d = proj(xv, wv_ref)                                       # (Lk, H*d_V)

    # Per-head masked softmax attention, all in f32 (tiny matmuls).
    ctx_heads = []
    for h in range(n_head):
        qh = q2d[:, h * d_Q:(h + 1) * d_Q]           # (Lq, d_Q)
        kh = k2d[:, h * d_Q:(h + 1) * d_Q]           # (Lk, d_Q)
        vh = v2d[:, h * d_V:(h + 1) * d_V]           # (Lk, d_V)

        # score = Q_h @ K_h^T (contract last dims -> no materialized transpose)
        s = lax.dot_general(qh, kh,
                            dimension_numbers=(((1,), (1,)), ((), ())),
                            preferred_element_type=jnp.float32)  # (Lq, Lk)
        s = jnp.where(mask, jnp.float32(-1e9), s)

        # Numerically stable softmax over the key axis.
        s = s - jnp.max(s, axis=-1, keepdims=True)
        e = jnp.exp(s)
        attn = e / jnp.sum(e, axis=-1, keepdims=True)
        # attn.masked_fill_(attn_mask, 0): fully-masked rows become exactly 0.
        attn = jnp.where(mask, jnp.float32(0.0), attn)

        ctx_heads.append(
            lax.dot_general(attn, vh,
                            dimension_numbers=(((1,), (0,)), ((), ())),
                            preferred_element_type=jnp.float32))  # (Lq, d_V)

    ctx = jnp.concatenate(ctx_heads, axis=-1)        # (Lq, H*d_V) f32

    # Output projection (bf16 MXU, f32 acc) + residual + LayerNorm(d_model).
    y = lax.dot_general(ctx.astype(jnp.bfloat16), wfc_ref[...],
                        dimension_numbers=(((1,), (1,)), ((), ())),
                        preferred_element_type=jnp.float32)       # (Lq, d_model)
    y = y + xq                                        # residual add (f32)
    mean = jnp.mean(y, axis=-1, keepdims=True)
    yc = y - mean
    var = jnp.mean(yc * yc, axis=-1, keepdims=True)
    y_hat = yc * lax.rsqrt(var + jnp.float32(_LN_EPS))
    o_ref[0] = (y_hat * g_ref[...] + b_ref[...]).astype(o_ref.dtype)


# ---------------------------------------------------------------------------
# Full MultiHeadAttention forward (single pallas_call).
# ---------------------------------------------------------------------------
def multi_head_attention(input_Q, input_K, input_V, attn_mask, params):
    """input_*: [B, L, d_model]; attn_mask: [B, Lq, Lk] (True/nonzero = masked).
    params: W_Q/W_K/W_V [n_head*d, d_model], W_fc [d_model, n_head*d_V],
            ln_gamma/ln_beta [d_model]."""
    B, Lq, _ = input_Q.shape
    Lk = input_K.shape[1]

    xq = input_Q.astype(jnp.float32)
    xk = input_K.astype(jnp.float32)
    xv = input_V.astype(jnp.float32)
    m = attn_mask.astype(jnp.int8)

    # Pre-cast weights to bf16 once (halves weight DMA; f32 accumulation in-kernel).
    wq = params["W_Q"].astype(jnp.bfloat16)
    wk = params["W_K"].astype(jnp.bfloat16)
    wv = params["W_V"].astype(jnp.bfloat16)
    wfc = params["W_fc"].astype(jnp.bfloat16)
    g = params["ln_gamma"].reshape(1, d_model).astype(jnp.float32)
    b = params["ln_beta"].reshape(1, d_model).astype(jnp.float32)

    return pl.pallas_call(
        _mha_kernel,
        out_shape=jax.ShapeDtypeStruct((B, Lq, d_model), jnp.float32),
        grid_spec=pltpu.PrefetchScalarGridSpec(
            num_scalar_prefetch=0,
            grid=(B,),
            in_specs=[
                pl.BlockSpec((1, Lq, d_model), lambda bb: (bb, 0, 0)),     # x_q
                pl.BlockSpec((1, Lk, d_model), lambda bb: (bb, 0, 0)),     # x_k
                pl.BlockSpec((1, Lk, d_model), lambda bb: (bb, 0, 0)),     # x_v
                pl.BlockSpec((1, Lq, Lk), lambda bb: (bb, 0, 0)),          # mask
                pl.BlockSpec((n_head * d_Q, d_model), lambda bb: (0, 0)),  # W_Q
                pl.BlockSpec((n_head * d_Q, d_model), lambda bb: (0, 0)),  # W_K
                pl.BlockSpec((n_head * d_V, d_model), lambda bb: (0, 0)),  # W_V
                pl.BlockSpec((d_model, n_head * d_V), lambda bb: (0, 0)),  # W_fc
                pl.BlockSpec((1, d_model), lambda bb: (0, 0)),             # gamma
                pl.BlockSpec((1, d_model), lambda bb: (0, 0)),             # beta
            ],
            out_specs=pl.BlockSpec((1, Lq, d_model), lambda bb: (bb, 0, 0)),
        ),
        compiler_params=pltpu.CompilerParams(
            dimension_semantics=("parallel",)),
    )(xq, xk, xv, m, wq, wk, wv, wfc, g, b)


# ---------------------------------------------------------------------------
# Pure-JAX f32 reference (mirrors the PyTorch module forward).
# ---------------------------------------------------------------------------
def _reference(input_Q, input_K, input_V, attn_mask, params):
    B, Lq, _ = input_Q.shape

    def proj(x, w, d_head):
        return (x @ w.T).reshape(B, -1, n_head, d_head).transpose(0, 2, 1, 3)

    Q = proj(input_Q, params["W_Q"], d_Q)
    K = proj(input_K, params["W_K"], d_Q)
    V = proj(input_V, params["W_V"], d_V)
    mask4 = attn_mask[:, None, :, :]
    score = jnp.einsum("bhqd,bhkd->bhqk", Q, K) / math.sqrt(d_Q)
    score = jnp.where(mask4, -1e9, score)
    attn = jax.nn.softmax(score, axis=-1)
    attn = jnp.where(mask4, 0.0, attn)
    ctx = jnp.einsum("bhqk,bhkd->bhqd", attn, V)
    ctx = ctx.transpose(0, 2, 1, 3).reshape(B, Lq, n_head * d_V)
    out = ctx @ params["W_fc"].T + input_Q
    mean = out.mean(-1, keepdims=True)
    var = ((out - mean) ** 2).mean(-1, keepdims=True)
    return (out - mean) / jnp.sqrt(var + _LN_EPS) * params["ln_gamma"] + params["ln_beta"]


if __name__ == "__main__":
    key = jax.random.PRNGKey(0)
    B, L = 2, 8
    keys = jax.random.split(key, 6)

    x = jax.random.normal(keys[0], (B, L, d_model), dtype=jnp.float32)

    params = {
        "W_Q": jax.random.normal(keys[1], (n_head * d_Q, d_model), jnp.float32)
               / math.sqrt(d_model),
        "W_K": jax.random.normal(keys[2], (n_head * d_Q, d_model), jnp.float32)
               / math.sqrt(d_model),
        "W_V": jax.random.normal(keys[3], (n_head * d_V, d_model), jnp.float32)
               / math.sqrt(d_model),
        "W_fc": jax.random.normal(keys[4], (d_model, n_head * d_V), jnp.float32)
                / math.sqrt(n_head * d_V),
        # The PyTorch module builds a fresh nn.LayerNorm(d_model) each forward,
        # so its affine params are the defaults (gamma=1, beta=0).
        "ln_gamma": jnp.ones((d_model,), jnp.float32),
        "ln_beta": jnp.zeros((d_model,), jnp.float32),
    }

    # Padding-style mask: last two key positions of every batch element masked
    # (shared across heads, as in the module's unsqueeze(1).repeat(...)).
    attn_mask = jnp.zeros((B, L, L), dtype=jnp.bool_).at[:, :, -2:].set(True)

    out = multi_head_attention(x, x, x, attn_mask, params)
    jax.block_until_ready(out)

    ref = _reference(x, x, x, attn_mask, params)
    assert out.shape == ref.shape
    # bf16 MXU matmuls (f32 accumulation) for the four big projections ->
    # loosened tolerance vs the pure-f32 reference.
    assert jnp.allclose(out, ref, atol=3e-2, rtol=3e-2), (
        f"mismatch vs reference, max |err| = {jnp.max(jnp.abs(out - ref))}")

    print("KERNEL_OK")
</pallas_src>

<mosaic_0001>
module attributes {stable_mosaic.version = 11 : i64} {
  func.func @_mha_kernel(%arg0: i32, %arg1: memref<1x8x256xf32, #tpu.memory_space<vmem>>, %arg2: memref<1x8x256xf32, #tpu.memory_space<vmem>>, %arg3: memref<1x8x256xf32, #tpu.memory_space<vmem>>, %arg4: memref<1x8x8xi8, #tpu.memory_space<vmem>>, %arg5: memref<512x256xbf16, #tpu.memory_space<vmem>>, %arg6: memref<512x256xbf16, #tpu.memory_space<vmem>>, %arg7: memref<512x256xbf16, #tpu.memory_space<vmem>>, %arg8: memref<256x512xbf16, #tpu.memory_space<vmem>>, %arg9: memref<1x256xf32, #tpu.memory_space<vmem>>, %arg10: memref<1x256xf32, #tpu.memory_space<vmem>>, %arg11: memref<1x8x256xf32, #tpu.memory_space<vmem>>) attributes {dimension_semantics = [#tpu.dimension_semantics<parallel>], iteration_bounds = array<i64: 2>, scalar_prefetch = 0 : i64, scratch_operands = 0 : i64, tpu.core_type = #tpu.core_type<tc>, window_params = [{transform_indices = @transform_0, window_bounds = array<i64: 1, 8, 256>}, {transform_indices = @transform_1, window_bounds = array<i64: 1, 8, 256>}, {transform_indices = @transform_2, window_bounds = array<i64: 1, 8, 256>}, {transform_indices = @transform_3, window_bounds = array<i64: 1, 8, 8>}, {pipeline_mode = #tpu.pipeline_mode<synchronous>, transform_indices = @transform_4, window_bounds = array<i64: 512, 256>}, {pipeline_mode = #tpu.pipeline_mode<synchronous>, transform_indices = @transform_5, window_bounds = array<i64: 512, 256>}, {pipeline_mode = #tpu.pipeline_mode<synchronous>, transform_indices = @transform_6, window_bounds = array<i64: 512, 256>}, {pipeline_mode = #tpu.pipeline_mode<synchronous>, transform_indices = @transform_7, window_bounds = array<i64: 256, 512>}, {pipeline_mode = #tpu.pipeline_mode<synchronous>, transform_indices = @transform_8, window_bounds = array<i64: 1, 256>}, {pipeline_mode = #tpu.pipeline_mode<synchronous>, transform_indices = @transform_9, window_bounds = array<i64: 1, 256>}, {transform_indices = @transform_10, window_bounds = array<i64: 1, 8, 256>}]} {
    %c0 = arith.constant 0 : index
    %c0_0 = arith.constant 0 : index
    %c0_1 = arith.constant 0 : index
    %0 = vector.load %arg1[%c0, %c0_0, %c0_1] : memref<1x8x256xf32, #tpu.memory_space<vmem>>, vector<1x8x256xf32>
    %1 = vector.shape_cast %0 : vector<1x8x256xf32> to vector<8x256xf32>
    %c0_2 = arith.constant 0 : index
    %c0_3 = arith.constant 0 : index
    %c0_4 = arith.constant 0 : index
    %2 = vector.load %arg2[%c0_2, %c0_3, %c0_4] : memref<1x8x256xf32, #tpu.memory_space<vmem>>, vector<1x8x256xf32>
    %3 = vector.shape_cast %2 : vector<1x8x256xf32> to vector<8x256xf32>
    %c0_5 = arith.constant 0 : index
    %c0_6 = arith.constant 0 : index
    %c0_7 = arith.constant 0 : index
    %4 = vector.load %arg3[%c0_5, %c0_6, %c0_7] : memref<1x8x256xf32, #tpu.memory_space<vmem>>, vector<1x8x256xf32>
    %5 = vector.shape_cast %4 : vector<1x8x256xf32> to vector<8x256xf32>
    %c0_8 = arith.constant 0 : index
    %c0_9 = arith.constant 0 : index
    %c0_10 = arith.constant 0 : index
    %6 = vector.load %arg4[%c0_8, %c0_9, %c0_10] : memref<1x8x8xi8, #tpu.memory_space<vmem>>, vector<1x8x8xi8>
    %7 = vector.shape_cast %6 : vector<1x8x8xi8> to vector<8x8xi8>
    %c0_i8 = arith.constant 0 : i8
    %8 = vector.broadcast %c0_i8 : i8 to vector<8x8xi8>
    %9 = arith.cmpi ne, %7, %8 : vector<8x8xi8>
    %10 = arith.truncf %1 : vector<8x256xf32> to vector<8x256xbf16>
    %c0_11 = arith.constant 0 : index
    %c0_12 = arith.constant 0 : index
    %11 = vector.load %arg5[%c0_11, %c0_12] : memref<512x256xbf16, #tpu.memory_space<vmem>>, vector<512x256xbf16>
    %cst = arith.constant dense<0.000000e+00> : vector<8x512xf32>
    %12 = tpu.matmul %10, %11, %cst {dimension_numbers = #tpu.dot_dimension_numbers<[1], [1], [0], [0], [0, 0, 1, 0], [], []>} : vector<8x256xbf16>, vector<512x256xbf16>, vector<8x512xf32> -> vector<8x512xf32>
    %cst_13 = arith.constant 1.250000e-01 : f32
    %13 = vector.broadcast %cst_13 : f32 to vector<8x512xf32>
    %14 = arith.mulf %12, %13 : vector<8x512xf32>
    %15 = arith.truncf %3 : vector<8x256xf32> to vector<8x256xbf16>
    %c0_14 = arith.constant 0 : index
    %c0_15 = arith.constant 0 : index
    %16 = vector.load %arg6[%c0_14, %c0_15] : memref<512x256xbf16, #tpu.memory_space<vmem>>, vector<512x256xbf16>
    %cst_16 = arith.constant dense<0.000000e+00> : vector<8x512xf32>
    %17 = tpu.matmul %15, %16, %cst_16 {dimension_numbers = #tpu.dot_dimension_numbers<[1], [1], [0], [0], [0, 0, 1, 0], [], []>} : vector<8x256xbf16>, vector<512x256xbf16>, vector<8x512xf32> -> vector<8x512xf32>
    %18 = arith.truncf %5 : vector<8x256xf32> to vector<8x256xbf16>
    %c0_17 = arith.constant 0 : index
    %c0_18 = arith.constant 0 : index
    %19 = vector.load %arg7[%c0_17, %c0_18] : memref<512x256xbf16, #tpu.memory_space<vmem>>, vector<512x256xbf16>
    %cst_19 = arith.constant dense<0.000000e+00> : vector<8x512xf32>
    %20 = tpu.matmul %18, %19, %cst_19 {dimension_numbers = #tpu.dot_dimension_numbers<[1], [1], [0], [0], [0, 0, 1, 0], [], []>} : vector<8x256xbf16>, vector<512x256xbf16>, vector<8x512xf32> -> vector<8x512xf32>
    %21 = vector.extract_strided_slice %14 {offsets = [0, 0], sizes = [8, 64], strides = [1, 1]} : vector<8x512xf32> to vector<8x64xf32>
    %22 = vector.extract_strided_slice %17 {offsets = [0, 0], sizes = [8, 64], strides = [1, 1]} : vector<8x512xf32> to vector<8x64xf32>
    %23 = vector.extract_strided_slice %20 {offsets = [0, 0], sizes = [8, 64], strides = [1, 1]} : vector<8x512xf32> to vector<8x64xf32>
    %cst_20 = arith.constant dense<0.000000e+00> : vector<8x8xf32>
    %24 = tpu.matmul %21, %22, %cst_20 {dimension_numbers = #tpu.dot_dimension_numbers<[1], [1], [0], [0], [0, 0, 1, 0], [], []>} : vector<8x64xf32>, vector<8x64xf32>, vector<8x8xf32> -> vector<8x8xf32>
    %cst_21 = arith.constant -1.000000e+09 : f32
    %25 = vector.broadcast %cst_21 : f32 to vector<8x8xf32>
    %26 = arith.select %9, %25, %24 : vector<8x8xi1>, vector<8x8xf32>
    %cst_22 = arith.constant dense<0xFF800000> : vector<8xf32>
    %27 = vector.multi_reduction <maximumf>, %26, %cst_22 [1] : vector<8x8xf32> to vector<8xf32>
    %28 = vector.shape_cast %27 : vector<8xf32> to vector<8x1xf32>
    %29 = vector.broadcast %28 : vector<8x1xf32> to vector<8x8xf32>
    %30 = arith.subf %26, %29 : vector<8x8xf32>
    %31 = math.exp %30 : vector<8x8xf32>
    %cst_23 = arith.constant dense<0.000000e+00> : vector<8xf32>
    %32 = vector.multi_reduction <add>, %31, %cst_23 [1] : vector<8x8xf32> to vector<8xf32>
    %33 = vector.shape_cast %32 : vector<8xf32> to vector<8x1xf32>
    %34 = vector.broadcast %33 : vector<8x1xf32> to vector<8x8xf32>
    %35 = arith.divf %31, %34 : vector<8x8xf32>
    %cst_24 = arith.constant 0.000000e+00 : f32
    %36 = vector.broadcast %cst_24 : f32 to vector<8x8xf32>
    %37 = arith.select %9, %36, %35 : vector<8x8xi1>, vector<8x8xf32>
    %cst_25 = arith.constant dense<0.000000e+00> : vector<8x64xf32>
    %38 = tpu.matmul %37, %23, %cst_25 {dimension_numbers = #tpu.dot_dimension_numbers<[1], [0], [0], [1], [0, 0, 1, 1], [], []>} : vector<8x8xf32>, vector<8x64xf32>, vector<8x64xf32> -> vector<8x64xf32>
    %39 = vector.extract_strided_slice %14 {offsets = [0, 64], sizes = [8, 64], strides = [1, 1]} : vector<8x512xf32> to vector<8x64xf32>
    %40 = vector.extract_strided_slice %17 {offsets = [0, 64], sizes = [8, 64], strides = [1, 1]} : vector<8x512xf32> to vector<8x64xf32>
    %41 = vector.extract_strided_slice %20 {offsets = [0, 64], sizes = [8, 64], strides = [1, 1]} : vector<8x512xf32> to vector<8x64xf32>
    %cst_26 = arith.constant dense<0.000000e+00> : vector<8x8xf32>
    %42 = tpu.matmul %39, %40, %cst_26 {dimension_numbers = #tpu.dot_dimension_numbers<[1], [1], [0], [0], [0, 0, 1, 0], [], []>} : vector<8x64xf32>, vector<8x64xf32>, vector<8x8xf32> -> vector<8x8xf32>
    %cst_27 = arith.constant -1.000000e+09 : f32
    %43 = vector.broadcast %cst_27 : f32 to vector<8x8xf32>
    %44 = arith.select %9, %43, %42 : vector<8x8xi1>, vector<8x8xf32>
    %cst_28 = arith.constant dense<0xFF800000> : vector<8xf32>
    %45 = vector.multi_reduction <maximumf>, %44, %cst_28 [1] : vector<8x8xf32> to vector<8xf32>
    %46 = vector.shape_cast %45 : vector<8xf32> to vector<8x1xf32>
    %47 = vector.broadcast %46 : vector<8x1xf32> to vector<8x8xf32>
    %48 = arith.subf %44, %47 : vector<8x8xf32>
    %49 = math.exp %48 : vector<8x8xf32>
    %cst_29 = arith.constant dense<0.000000e+00> : vector<8xf32>
    %50 = vector.multi_reduction <add>, %49, %cst_29 [1] : vector<8x8xf32> to vector<8xf32>
    %51 = vector.shape_cast %50 : vector<8xf32> to vector<8x1xf32>
    %52 = vector.broadcast %51 : vector<8x1xf32> to vector<8x8xf32>
    %53 = arith.divf %49, %52 : vector<8x8xf32>
    %cst_30 = arith.constant 0.000000e+00 : f32
    %54 = vector.broadcast %cst_30 : f32 to vector<8x8xf32>
    %55 = arith.select %9, %54, %53 : vector<8x8xi1>, vector<8x8xf32>
    %cst_31 = arith.constant dense<0.000000e+00> : vector<8x64xf32>
    %56 = tpu.matmul %55, %41, %cst_31 {dimension_numbers = #tpu.dot_dimension_numbers<[1], [0], [0], [1], [0, 0, 1, 1], [], []>} : vector<8x8xf32>, vector<8x64xf32>, vector<8x64xf32> -> vector<8x64xf32>
    %57 = vector.extract_strided_slice %14 {offsets = [0, 128], sizes = [8, 64], strides = [1, 1]} : vector<8x512xf32> to vector<8x64xf32>
    %58 = vector.extract_strided_slice %17 {offsets = [0, 128], sizes = [8, 64], strides = [1, 1]} : vector<8x512xf32> to vector<8x64xf32>
    %59 = vector.extract_strided_slice %20 {offsets = [0, 128], sizes = [8, 64], strides = [1, 1]} : vector<8x512xf32> to vector<8x64xf32>
    %cst_32 = arith.constant dense<0.000000e+00> : vector<8x8xf32>
    %60 = tpu.matmul %57, %58, %cst_32 {dimension_numbers = #tpu.dot_dimension_numbers<[1], [1], [0], [0], [0, 0, 1, 0], [], []>} : vector<8x64xf32>, vector<8x64xf32>, vector<8x8xf32> -> vector<8x8xf32>
    %cst_33 = arith.constant -1.000000e+09 : f32
    %61 = vector.broadcast %cst_33 : f32 to vector<8x8xf32>
    %62 = arith.select %9, %61, %60 : vector<8x8xi1>, vector<8x8xf32>
    %cst_34 = arith.constant dense<0xFF800000> : vector<8xf32>
    %63 = vector.multi_reduction <maximumf>, %62, %cst_34 [1] : vector<8x8xf32> to vector<8xf32>
    %64 = vector.shape_cast %63 : vector<8xf32> to vector<8x1xf32>
    %65 = vector.broadcast %64 : vector<8x1xf32> to vector<8x8xf32>
    %66 = arith.subf %62, %65 : vector<8x8xf32>
    %67 = math.exp %66 : vector<8x8xf32>
    %cst_35 = arith.constant dense<0.000000e+00> : vector<8xf32>
    %68 = vector.multi_reduction <add>, %67, %cst_35 [1] : vector<8x8xf32> to vector<8xf32>
    %69 = vector.shape_cast %68 : vector<8xf32> to vector<8x1xf32>
    %70 = vector.broadcast %69 : vector<8x1xf32> to vector<8x8xf32>
    %71 = arith.divf %67, %70 : vector<8x8xf32>
    %cst_36 = arith.constant 0.000000e+00 : f32
    %72 = vector.broadcast %cst_36 : f32 to vector<8x8xf32>
    %73 = arith.select %9, %72, %71 : vector<8x8xi1>, vector<8x8xf32>
    %cst_37 = arith.constant dense<0.000000e+00> : vector<8x64xf32>
    %74 = tpu.matmul %73, %59, %cst_37 {dimension_numbers = #tpu.dot_dimension_numbers<[1], [0], [0], [1], [0, 0, 1, 1], [], []>} : vector<8x8xf32>, vector<8x64xf32>, vector<8x64xf32> -> vector<8x64xf32>
    %75 = vector.extract_strided_slice %14 {offsets = [0, 192], sizes = [8, 64], strides = [1, 1]} : vector<8x512xf32> to vector<8x64xf32>
    %76 = vector.extract_strided_slice %17 {offsets = [0, 192], sizes = [8, 64], strides = [1, 1]} : vector<8x512xf32> to vector<8x64xf32>
    %77 = vector.extract_strided_slice %20 {offsets = [0, 192], sizes = [8, 64], strides = [1, 1]} : vector<8x512xf32> to vector<8x64xf32>
    %cst_38 = arith.constant dense<0.000000e+00> : vector<8x8xf32>
    %78 = tpu.matmul %75, %76, %cst_38 {dimension_numbers = #tpu.dot_dimension_numbers<[1], [1], [0], [0], [0, 0, 1, 0], [], []>} : vector<8x64xf32>, vector<8x64xf32>, vector<8x8xf32> -> vector<8x8xf32>
    %cst_39 = arith.constant -1.000000e+09 : f32
    %79 = vector.broadcast %cst_39 : f32 to vector<8x8xf32>
    %80 = arith.select %9, %79, %78 : vector<8x8xi1>, vector<8x8xf32>
    %cst_40 = arith.constant dense<0xFF800000> : vector<8xf32>
    %81 = vector.multi_reduction <maximumf>, %80, %cst_40 [1] : vector<8x8xf32> to vector<8xf32>
    %82 = vector.shape_cast %81 : vector<8xf32> to vector<8x1xf32>
    %83 = vector.broadcast %82 : vector<8x1xf32> to vector<8x8xf32>
    %84 = arith.subf %80, %83 : vector<8x8xf32>
    %85 = math.exp %84 : vector<8x8xf32>
    %cst_41 = arith.constant dense<0.000000e+00> : vector<8xf32>
    %86 = vector.multi_reduction <add>, %85, %cst_41 [1] : vector<8x8xf32> to vector<8xf32>
    %87 = vector.shape_cast %86 : vector<8xf32> to vector<8x1xf32>
    %88 = vector.broadcast %87 : vector<8x1xf32> to vector<8x8xf32>
    %89 = arith.divf %85, %88 : vector<8x8xf32>
    %cst_42 = arith.constant 0.000000e+00 : f32
    %90 = vector.broadcast %cst_42 : f32 to vector<8x8xf32>
    %91 = arith.select %9, %90, %89 : vector<8x8xi1>, vector<8x8xf32>
    %cst_43 = arith.constant dense<0.000000e+00> : vector<8x64xf32>
    %92 = tpu.matmul %91, %77, %cst_43 {dimension_numbers = #tpu.dot_dimension_numbers<[1], [0], [0], [1], [0, 0, 1, 1], [], []>} : vector<8x8xf32>, vector<8x64xf32>, vector<8x64xf32> -> vector<8x64xf32>
    %93 = vector.extract_strided_slice %14 {offsets = [0, 256], sizes = [8, 64], strides = [1, 1]} : vector<8x512xf32> to vector<8x64xf32>
    %94 = vector.extract_strided_slice %17 {offsets = [0, 256], sizes = [8, 64], strides = [1, 1]} : vector<8x512xf32> to vector<8x64xf32>
    %95 = vector.extract_strided_slice %20 {offsets = [0, 256], sizes = [8, 64], strides = [1, 1]} : vector<8x512xf32> to vector<8x64xf32>
    %cst_44 = arith.constant dense<0.000000e+00> : vector<8x8xf32>
    %96 = tpu.matmul %93, %94, %cst_44 {dimension_numbers = #tpu.dot_dimension_numbers<[1], [1], [0], [0], [0, 0, 1, 0], [], []>} : vector<8x64xf32>, vector<8x64xf32>, vector<8x8xf32> -> vector<8x8xf32>
    %cst_45 = arith.constant -1.000000e+09 : f32
    %97 = vector.broadcast %cst_45 : f32 to vector<8x8xf32>
    %98 = arith.select %9, %97, %96 : vector<8x8xi1>, vector<8x8xf32>
    %cst_46 = arith.constant dense<0xFF800000> : vector<8xf32>
    %99 = vector.multi_reduction <maximumf>, %98, %cst_46 [1] : vector<8x8xf32> to vector<8xf32>
    %100 = vector.shape_cast %99 : vector<8xf32> to vector<8x1xf32>
    %101 = vector.broadcast %100 : vector<8x1xf32> to vector<8x8xf32>
    %102 = arith.subf %98, %101 : vector<8x8xf32>
    %103 = math.exp %102 : vector<8x8xf32>
    %cst_47 = arith.constant dense<0.000000e+00> : vector<8xf32>
    %104 = vector.multi_reduction <add>, %103, %cst_47 [1] : vector<8x8xf32> to vector<8xf32>
    %105 = vector.shape_cast %104 : vector<8xf32> to vector<8x1xf32>
    %106 = vector.broadcast %105 : vector<8x1xf32> to vector<8x8xf32>
    %107 = arith.divf %103, %106 : vector<8x8xf32>
    %cst_48 = arith.constant 0.000000e+00 : f32
    %108 = vector.broadcast %cst_48 : f32 to vector<8x8xf32>
    %109 = arith.select %9, %108, %107 : vector<8x8xi1>, vector<8x8xf32>
    %cst_49 = arith.constant dense<0.000000e+00> : vector<8x64xf32>
    %110 = tpu.matmul %109, %95, %cst_49 {dimension_numbers = #tpu.dot_dimension_numbers<[1], [0], [0], [1], [0, 0, 1, 1], [], []>} : vector<8x8xf32>, vector<8x64xf32>, vector<8x64xf32> -> vector<8x64xf32>
    %111 = vector.extract_strided_slice %14 {offsets = [0, 320], sizes = [8, 64], strides = [1, 1]} : vector<8x512xf32> to vector<8x64xf32>
    %112 = vector.extract_strided_slice %17 {offsets = [0, 320], sizes = [8, 64], strides = [1, 1]} : vector<8x512xf32> to vector<8x64xf32>
    %113 = vector.extract_strided_slice %20 {offsets = [0, 320], sizes = [8, 64], strides = [1, 1]} : vector<8x512xf32> to vector<8x64xf32>
    %cst_50 = arith.constant dense<0.000000e+00> : vector<8x8xf32>
    %114 = tpu.matmul %111, %112, %cst_50 {dimension_numbers = #tpu.dot_dimension_numbers<[1], [1], [0], [0], [0, 0, 1, 0], [], []>} : vector<8x64xf32>, vector<8x64xf32>, vector<8x8xf32> -> vector<8x8xf32>
    %cst_51 = arith.constant -1.000000e+09 : f32
    %115 = vector.broadcast %cst_51 : f32 to vector<8x8xf32>
    %116 = arith.select %9, %115, %114 : vector<8x8xi1>, vector<8x8xf32>
    %cst_52 = arith.constant dense<0xFF800000> : vector<8xf32>
    %117 = vector.multi_reduction <maximumf>, %116, %cst_52 [1] : vector<8x8xf32> to vector<8xf32>
    %118 = vector.shape_cast %117 : vector<8xf32> to vector<8x1xf32>
    %119 = vector.broadcast %118 : vector<8x1xf32> to vector<8x8xf32>
    %120 = arith.subf %116, %119 : vector<8x8xf32>
    %121 = math.exp %120 : vector<8x8xf32>
    %cst_53 = arith.constant dense<0.000000e+00> : vector<8xf32>
    %122 = vector.multi_reduction <add>, %121, %cst_53 [1] : vector<8x8xf32> to vector<8xf32>
    %123 = vector.shape_cast %122 : vector<8xf32> to vector<8x1xf32>
    %124 = vector.broadcast %123 : vector<8x1xf32> to vector<8x8xf32>
    %125 = arith.divf %121, %124 : vector<8x8xf32>
    %cst_54 = arith.constant 0.000000e+00 : f32
    %126 = vector.broadcast %cst_54 : f32 to vector<8x8xf32>
    %127 = arith.select %9, %126, %125 : vector<8x8xi1>, vector<8x8xf32>
    %cst_55 = arith.constant dense<0.000000e+00> : vector<8x64xf32>
    %128 = tpu.matmul %127, %113, %cst_55 {dimension_numbers = #tpu.dot_dimension_numbers<[1], [0], [0], [1], [0, 0, 1, 1], [], []>} : vector<8x8xf32>, vector<8x64xf32>, vector<8x64xf32> -> vector<8x64xf32>
    %129 = vector.extract_strided_slice %14 {offsets = [0, 384], sizes = [8, 64], strides = [1, 1]} : vector<8x512xf32> to vector<8x64xf32>
    %130 = vector.extract_strided_slice %17 {offsets = [0, 384], sizes = [8, 64], strides = [1, 1]} : vector<8x512xf32> to vector<8x64xf32>
    %131 = vector.extract_strided_slice %20 {offsets = [0, 384], sizes = [8, 64], strides = [1, 1]} : vector<8x512xf32> to vector<8x64xf32>
    %cst_56 = arith.constant dense<0.000000e+00> : vector<8x8xf32>
    %132 = tpu.matmul %129, %130, %cst_56 {dimension_numbers = #tpu.dot_dimension_numbers<[1], [1], [0], [0], [0, 0, 1, 0], [], []>} : vector<8x64xf32>, vector<8x64xf32>, vector<8x8xf32> -> vector<8x8xf32>
    %cst_57 = arith.constant -1.000000e+09 : f32
    %133 = vector.broadcast %cst_57 : f32 to vector<8x8xf32>
    %134 = arith.select %9, %133, %132 : vector<8x8xi1>, vector<8x8xf32>
    %cst_58 = arith.constant dense<0xFF800000> : vector<8xf32>
    %135 = vector.multi_reduction <maximumf>, %134, %cst_58 [1] : vector<8x8xf32> to vector<8xf32>
    %136 = vector.shape_cast %135 : vector<8xf32> to vector<8x1xf32>
    %137 = vector.broadcast %136 : vector<8x1xf32> to vector<8x8xf32>
    %138 = arith.subf %134, %137 : vector<8x8xf32>
    %139 = math.exp %138 : vector<8x8xf32>
    %cst_59 = arith.constant dense<0.000000e+00> : vector<8xf32>
    %140 = vector.multi_reduction <add>, %139, %cst_59 [1] : vector<8x8xf32> to vector<8xf32>
    %141 = vector.shape_cast %140 : vector<8xf32> to vector<8x1xf32>
    %142 = vector.broadcast %141 : vector<8x1xf32> to vector<8x8xf32>
    %143 = arith.divf %139, %142 : vector<8x8xf32>
    %cst_60 = arith.constant 0.000000e+00 : f32
    %144 = vector.broadcast %cst_60 : f32 to vector<8x8xf32>
    %145 = arith.select %9, %144, %143 : vector<8x8xi1>, vector<8x8xf32>
    %cst_61 = arith.constant dense<0.000000e+00> : vector<8x64xf32>
    %146 = tpu.matmul %145, %131, %cst_61 {dimension_numbers = #tpu.dot_dimension_numbers<[1], [0], [0], [1], [0, 0, 1, 1], [], []>} : vector<8x8xf32>, vector<8x64xf32>, vector<8x64xf32> -> vector<8x64xf32>
    %147 = vector.extract_strided_slice %14 {offsets = [0, 448], sizes = [8, 64], strides = [1, 1]} : vector<8x512xf32> to vector<8x64xf32>
    %148 = vector.extract_strided_slice %17 {offsets = [0, 448], sizes = [8, 64], strides = [1, 1]} : vector<8x512xf32> to vector<8x64xf32>
    %149 = vector.extract_strided_slice %20 {offsets = [0, 448], sizes = [8, 64], strides = [1, 1]} : vector<8x512xf32> to vector<8x64xf32>
    %cst_62 = arith.constant dense<0.000000e+00> : vector<8x8xf32>
    %150 = tpu.matmul %147, %148, %cst_62 {dimension_numbers = #tpu.dot_dimension_numbers<[1], [1], [0], [0], [0, 0, 1, 0], [], []>} : vector<8x64xf32>, vector<8x64xf32>, vector<8x8xf32> -> vector<8x8xf32>
    %cst_63 = arith.constant -1.000000e+09 : f32
    %151 = vector.broadcast %cst_63 : f32 to vector<8x8xf32>
    %152 = arith.select %9, %151, %150 : vector<8x8xi1>, vector<8x8xf32>
    %cst_64 = arith.constant dense<0xFF800000> : vector<8xf32>
    %153 = vector.multi_reduction <maximumf>, %152, %cst_64 [1] : vector<8x8xf32> to vector<8xf32>
    %154 = vector.shape_cast %153 : vector<8xf32> to vector<8x1xf32>
    %155 = vector.broadcast %154 : vector<8x1xf32> to vector<8x8xf32>
    %156 = arith.subf %152, %155 : vector<8x8xf32>
    %157 = math.exp %156 : vector<8x8xf32>
    %cst_65 = arith.constant dense<0.000000e+00> : vector<8xf32>
    %158 = vector.multi_reduction <add>, %157, %cst_65 [1] : vector<8x8xf32> to vector<8xf32>
    %159 = vector.shape_cast %158 : vector<8xf32> to vector<8x1xf32>
    %160 = vector.broadcast %159 : vector<8x1xf32> to vector<8x8xf32>
    %161 = arith.divf %157, %160 : vector<8x8xf32>
    %cst_66 = arith.constant 0.000000e+00 : f32
    %162 = vector.broadcast %cst_66 : f32 to vector<8x8xf32>
    %163 = arith.select %9, %162, %161 : vector<8x8xi1>, vector<8x8xf32>
    %cst_67 = arith.constant dense<0.000000e+00> : vector<8x64xf32>
    %164 = tpu.matmul %163, %149, %cst_67 {dimension_numbers = #tpu.dot_dimension_numbers<[1], [0], [0], [1], [0, 0, 1, 1], [], []>} : vector<8x8xf32>, vector<8x64xf32>, vector<8x64xf32> -> vector<8x64xf32>
    %165 = tpu.concatenate %38, %56, %74, %92, %110, %128, %146, %164 in 1 : vector<8x64xf32>, vector<8x64xf32>, vector<8x64xf32>, vector<8x64xf32>, vector<8x64xf32>, vector<8x64xf32>, vector<8x64xf32>, vector<8x64xf32> -> vector<8x512xf32>
    %166 = arith.truncf %165 : vector<8x512xf32> to vector<8x512xbf16>
    %c0_68 = arith.constant 0 : index
    %c0_69 = arith.constant 0 : index
    %167 = vector.load %arg8[%c0_68, %c0_69] : memref<256x512xbf16, #tpu.memory_space<vmem>>, vector<256x512xbf16>
    %cst_70 = arith.constant dense<0.000000e+00> : vector<8x256xf32>
    %168 = tpu.matmul %166, %167, %cst_70 {dimension_numbers = #tpu.dot_dimension_numbers<[1], [1], [0], [0], [0, 0, 1, 0], [], []>} : vector<8x512xbf16>, vector<256x512xbf16>, vector<8x256xf32> -> vector<8x256xf32>
    %169 = arith.addf %168, %1 : vector<8x256xf32>
    %cst_71 = arith.constant dense<0.000000e+00> : vector<8xf32>
    %170 = vector.multi_reduction <add>, %169, %cst_71 [1] : vector<8x256xf32> to vector<8xf32>
    %171 = vector.shape_cast %170 : vector<8xf32> to vector<8x1xf32>
    %cst_72 = arith.constant 2.560000e+02 : f32
    %172 = vector.broadcast %cst_72 : f32 to vector<8x1xf32>
    %173 = arith.divf %171, %172 : vector<8x1xf32>
    %174 = vector.broadcast %173 : vector<8x1xf32> to vector<8x256xf32>
    %175 = arith.subf %169, %174 : vector<8x256xf32>
    %176 = arith.mulf %175, %175 : vector<8x256xf32>
    %cst_73 = arith.constant dense<0.000000e+00> : vector<8xf32>
    %177 = vector.multi_reduction <add>, %176, %cst_73 [1] : vector<8x256xf32> to vector<8xf32>
    %178 = vector.shape_cast %177 : vector<8xf32> to vector<8x1xf32>
    %cst_74 = arith.constant 2.560000e+02 : f32
    %179 = vector.broadcast %cst_74 : f32 to vector<8x1xf32>
    %180 = arith.divf %178, %179 : vector<8x1xf32>
    %cst_75 = arith.constant 9.99999974E-6 : f32
    %181 = vector.broadcast %cst_75 : f32 to vector<8x1xf32>
    %182 = arith.addf %180, %181 : vector<8x1xf32>
    %183 = math.rsqrt %182 : vector<8x1xf32>
    %184 = vector.broadcast %183 : vector<8x1xf32> to vector<8x256xf32>
    %185 = arith.mulf %175, %184 : vector<8x256xf32>
    %c0_76 = arith.constant 0 : index
    %c0_77 = arith.constant 0 : index
    %186 = vector.load %arg9[%c0_76, %c0_77] : memref<1x256xf32, #tpu.memory_space<vmem>>, vector<1x256xf32>
    %187 = vector.broadcast %186 : vector<1x256xf32> to vector<8x256xf32>
    %188 = arith.mulf %185, %187 : vector<8x256xf32>
    %c0_78 = arith.constant 0 : index
    %c0_79 = arith.constant 0 : index
    %189 = vector.load %arg10[%c0_78, %c0_79] : memref<1x256xf32, #tpu.memory_space<vmem>>, vector<1x256xf32>
    %190 = vector.broadcast %189 : vector<1x256xf32> to vector<8x256xf32>
    %191 = arith.addf %188, %190 : vector<8x256xf32>
    %c0_80 = arith.constant 0 : index
    %c0_81 = arith.constant 0 : index
    %c0_82 = arith.constant 0 : index
    %192 = vector.load %arg11[%c0_80, %c0_81, %c0_82] : memref<1x8x256xf32, #tpu.memory_space<vmem>>, vector<1x8x256xf32>
    %193 = vector.shape_cast %192 : vector<1x8x256xf32> to vector<8x256xf32>
    %194 = vector.shape_cast %191 : vector<8x256xf32> to vector<1x8x256xf32>
    tpu.vector_store %arg11[%c0_80, %c0_81, %c0_82], %194 {strides = array<i32>} : memref<1x8x256xf32, #tpu.memory_space<vmem>>, vector<1x8x256xf32>,
    return
  }
  func.func @transform_0(%arg0: i32) -> (i32, i32, i32) {
    %c0_i32 = arith.constant 0 : i32
    %c0_i32_0 = arith.constant 0 : i32
    %c0_i32_1 = arith.constant 0 : i32
    return %arg0, %c0_i32, %c0_i32_0 : i32, i32, i32
  }
  func.func @transform_1(%arg0: i32) -> (i32, i32, i32) {
    %c0_i32 = arith.constant 0 : i32
    %c0_i32_0 = arith.constant 0 : i32
    %c0_i32_1 = arith.constant 0 : i32
    return %arg0, %c0_i32, %c0_i32_0 : i32, i32, i32
  }
  func.func @transform_2(%arg0: i32) -> (i32, i32, i32) {
    %c0_i32 = arith.constant 0 : i32
    %c0_i32_0 = arith.constant 0 : i32
    %c0_i32_1 = arith.constant 0 : i32
    return %arg0, %c0_i32, %c0_i32_0 : i32, i32, i32
  }
  func.func @transform_3(%arg0: i32) -> (i32, i32, i32) {
    %c0_i32 = arith.constant 0 : i32
    %c0_i32_0 = arith.constant 0 : i32
    %c0_i32_1 = arith.constant 0 : i32
    return %arg0, %c0_i32, %c0_i32_0 : i32, i32, i32
  }
  func.func @transform_4(%arg0: i32) -> (i32, i32) {
    %c0_i32 = arith.constant 0 : i32
    %c0_i32_0 = arith.constant 0 : i32
    %c0_i32_1 = arith.constant 0 : i32
    return %c0_i32, %c0_i32_0 : i32, i32
  }
  func.func @transform_5(%arg0: i32) -> (i32, i32) {
    %c0_i32 = arith.constant 0 : i32
    %c0_i32_0 = arith.constant 0 : i32
    %c0_i32_1 = arith.constant 0 : i32
    return %c0_i32, %c0_i32_0 : i32, i32
  }
  func.func @transform_6(%arg0: i32) -> (i32, i32) {
    %c0_i32 = arith.constant 0 : i32
    %c0_i32_0 = arith.constant 0 : i32
    %c0_i32_1 = arith.constant 0 : i32
    return %c0_i32, %c0_i32_0 : i32, i32
  }
  func.func @transform_7(%arg0: i32) -> (i32, i32) {
    %c0_i32 = arith.constant 0 : i32
    %c0_i32_0 = arith.constant 0 : i32
    %c0_i32_1 = arith.constant 0 : i32
    return %c0_i32, %c0_i32_0 : i32, i32
  }
  func.func @transform_8(%arg0: i32) -> (i32, i32) {
    %c0_i32 = arith.constant 0 : i32
    %c0_i32_0 = arith.constant 0 : i32
    %c0_i32_1 = arith.constant 0 : i32
    return %c0_i32, %c0_i32_0 : i32, i32
  }
  func.func @transform_9(%arg0: i32) -> (i32, i32) {
    %c0_i32 = arith.constant 0 : i32
    %c0_i32_0 = arith.constant 0 : i32
    %c0_i32_1 = arith.constant 0 : i32
    return %c0_i32, %c0_i32_0 : i32, i32
  }
  func.func @transform_10(%arg0: i32) -> (i32, i32, i32) {
    %c0_i32 = arith.constant 0 : i32
    %c0_i32_0 = arith.constant 0 : i32
    %c0_i32_1 = arith.constant 0 : i32
    return %arg0, %c0_i32, %c0_i32_0 : i32, i32, i32
  }
}

</mosaic_0001>

<llo_original>
// kernel: tpu_custom_call.1
$region0: #{tpu_custom_call.1}
  #allocation0 [shape = 'u32[]', space=smem, size = 0x4, offset = 0x4, fixed_abs, tag = 'smem constant byte address 0x4 - core index']
  #allocation1 [shape = 'u32[144,128]{1,0:T(1,128)}', space=vmem, size = 0x12000, scoped, tag = 'internal scratch']
  %s0 = inlined_call_operand.hbm [shape: f32[2,8,256], index: 0, kind: input, shape index: {}]
  %s1 = inlined_call_operand.hbm [shape: f32[2,8,256], index: 1, kind: input, shape index: {}]
  %s2 = inlined_call_operand.hbm [shape: f32[2,8,256], index: 2, kind: input, shape index: {}]
  %s3 = inlined_call_operand.vmem [shape: s8[2,8,8], index: 3, kind: input, shape index: {}]
  %s4 = inlined_call_operand.hbm [shape: bf16[512,256], index: 4, kind: input, shape index: {}]
  %s5 = inlined_call_operand.hbm [shape: bf16[512,256], index: 5, kind: input, shape index: {}]
  %s6 = inlined_call_operand.hbm [shape: bf16[512,256], index: 6, kind: input, shape index: {}]
  %s7 = inlined_call_operand.hbm [shape: bf16[256,512], index: 7, kind: input, shape index: {}]
  %s8 = inlined_call_operand.vmem [shape: f32[1,256], index: 8, kind: input, shape index: {}]
  %s9 = inlined_call_operand.vmem [shape: f32[1,256], index: 9, kind: input, shape index: {}]
  %s10 = inlined_call_operand.hbm [shape: f32[2,8,256], index: 10, kind: output, shape index: {}]
  %s11 = sld [smem:[#allocation0]]
  $region101: #{tpu_custom_call.1} parent=0
    _
  %s13 = ssub.s32 1, %s11
  %s14 = scalar_select 0, %s13, %s11
  $region1: #{tpu_custom_call.1} parent=0
    #allocation2 [shape = 'u8[16384]{0}', space=vmem, size = 0x4000, scoped, tag = 'input window, operand 0']
    #allocation3 [shape = 's32[2]{0}', space=sflag, size = 0x8, scoped, tag = 'scoped memory for tpu_custom_call.1']
    #allocation4 [shape = 's32[2]{0}', space=sflag, size = 0x8, scoped, tag = 'scoped memory for tpu_custom_call.1']
    #allocation5 [shape = 'u8[16384]{0}', space=vmem, size = 0x4000, scoped, tag = 'input window, operand 1']
    #allocation6 [shape = 's32[2]{0}', space=sflag, size = 0x8, scoped, tag = 'scoped memory for tpu_custom_call.1']
    #allocation7 [shape = 'u8[16384]{0}', space=vmem, size = 0x4000, scoped, tag = 'input window, operand 2']
    #allocation8 [shape = 'u8[262144]{0}', space=vmem, size = 0x40000, scoped, tag = 'input window, operand 4, single buffered']
    #allocation9 [shape = 's32[1]{0}', space=sflag, size = 0x4, scoped, tag = 'scoped memory for tpu_custom_call.1']
    #allocation10 [shape = 'u8[262144]{0}', space=vmem, size = 0x40000, scoped, tag = 'input window, operand 5, single buffered']
    #allocation11 [shape = 'u8[262144]{0}', space=vmem, size = 0x40000, scoped, tag = 'input window, operand 6, single buffered']
    #allocation12 [shape = 's32[1]{0}', space=sflag, size = 0x4, scoped, tag = 'scoped memory for tpu_custom_call.1']
    #allocation13 [shape = 'u8[262144]{0}', space=vmem, size = 0x40000, scoped, tag = 'input window, operand 7, single buffered']
    #allocation14 [shape = 'u8[16384]{0}', space=vmem, size = 0x4000, scoped, tag = 'output window, operand 0']
    %15 = vsyncpa [#allocation3], 0
    %s16 = scalar_lea.sflag [#allocation3], 1
    %17 = vsyncpa %s16, 0
    %18 = vsyncpa [#allocation6], 0
    %s19 = scalar_lea.sflag [#allocation6], 1
    %20 = vsyncpa %s19, 0
    %21 = vsyncpa [#allocation9], 0
    %22 = vsyncpa [#allocation12], 0
    %23 = vsyncpa [#allocation4], 0
    %s24 = scalar_lea.sflag [#allocation4], 1
    %25 = vsyncpa %s24, 0
    loop: start=0, step=1, limit=4
    $region2: #{tpu_custom_call.1} parent=1 // loop_pre_header
      _
    $region3: #{tpu_custom_call.1} parent=1 // loop_header
      %s27 = sphi 0, %s31
      %p28 = scmp.ge.s32.totalorder %s27, 4
      %s37 = sphi 0, %s39
      %s40 = sphi 0, %s37
      %s41 = sphi 0, %s40
      %s57 = sphi 0, %s41
      %s63 = sphi 0, %s65
      %s66 = sphi 0, %s63
      %s67 = sphi 0, %s66
      %s83 = sphi 0, %s67
      %s89 = sphi 0, %s91
      %s92 = sphi 0, %s89
      %s93 = sphi 0, %s92
      %s109 = sphi 0, %s93
      %s115 = sphi 0, %s117
      %s118 = sphi 0, %s115
      %s119 = sphi 0, %s118
      %s135 = sphi 0, %s119
      %s139 = sphi 0, %s139
      %s141 = sphi 0, %s139
      %s142 = sphi 0, %s141
      %s156 = sphi 0, %s142
      %s160 = sphi 0, %s160
      %s162 = sphi 0, %s160
      %s163 = sphi 0, %s162
      %s177 = sphi 0, %s163
      %s181 = sphi 0, %s181
      %s183 = sphi 0, %s181
      %s184 = sphi 0, %s183
      %s198 = sphi 0, %s184
      %s202 = sphi 0, %s202
      %s204 = sphi 0, %s202
      %s205 = sphi 0, %s204
      %s219 = sphi 0, %s205
      %s223 = sphi 0, %s223
      %s225 = sphi 0, %s223
      %s226 = sphi 0, %s225
      %s240 = sphi 0, %s226
      %s244 = sphi 0, %s244
      %s246 = sphi 0, %s244
      %s247 = sphi 0, %s246
      %s261 = sphi 0, %s247
      %s267 = sphi 0, %s269
      %s270 = sphi 0, %s267
      %s271 = sphi 0, %s270
      %s287 = sphi 0, %s271
    $region4: #{tpu_custom_call.1} parent=1 // loop_header_branch
      %30 = sbr.rel (%p28) target = $region8
    $region5: #{tpu_custom_call.1} parent=1 // loop_body
      %s32 = ssub.s32 %s27, 1
      %s33 = ssub.s32 %s27, 2
      %s34 = sadd.s32 %s27, 1
      %s35 = ssub.s32 %s27, %s34
      %p36 = scmp.eq.s32.totalorder %s35, 0
      %s38 = sadd.s32 %s37, 1
      %s39 = scalar_select %p36, %s37, %s38
      %p42 = pneg %p36
      %p43 = scmp.eq.s32.totalorder %s27, 1
      %p44 = por %p42, %p43
      %p45 = scmp.ne.s32.totalorder %s37, %s40
      %p46 = scmp.eq.s32.totalorder %s27, 0
      %p47 = por %p45, %p46
      %p48 = scmp.ne.s32.totalorder %s37, %s40
      %p49 = scmp.eq.s32.totalorder %s32, 1
      %p50 = por %p48, %p49
      %p51 = scmp.ne.s32.totalorder %s40, %s41
      %p52 = scmp.eq.s32.totalorder %s32, 0
      %p53 = por %p51, %p52
      %p54 = scmp.ne.s32.totalorder %s40, %s41
      %p55 = scmp.eq.s32.totalorder %s33, 1
      %p56 = por %p54, %p55
      %p58 = scmp.ne.s32.totalorder %s41, %s57
      %p59 = scmp.eq.s32.totalorder %s33, 0
      %p60 = por %p58, %p59
      %s61 = ssub.s32 %s27, %s34
      %p62 = scmp.eq.s32.totalorder %s61, 0
      %s64 = sadd.s32 %s63, 1
      %s65 = scalar_select %p62, %s63, %s64
      %p68 = pneg %p62
      %p69 = scmp.eq.s32.totalorder %s27, 1
      %p70 = por %p68, %p69
      %p71 = scmp.ne.s32.totalorder %s63, %s66
      %p72 = scmp.eq.s32.totalorder %s27, 0
      %p73 = por %p71, %p72
      %p74 = scmp.ne.s32.totalorder %s63, %s66
      %p75 = scmp.eq.s32.totalorder %s32, 1
      %p76 = por %p74, %p75
      %p77 = scmp.ne.s32.totalorder %s66, %s67
      %p78 = scmp.eq.s32.totalorder %s32, 0
      %p79 = por %p77, %p78
      %p80 = scmp.ne.s32.totalorder %s66, %s67
      %p81 = scmp.eq.s32.totalorder %s33, 1
      %p82 = por %p80, %p81
      %p84 = scmp.ne.s32.totalorder %s67, %s83
      %p85 = scmp.eq.s32.totalorder %s33, 0
      %p86 = por %p84, %p85
      %s87 = ssub.s32 %s27, %s34
      %p88 = scmp.eq.s32.totalorder %s87, 0
      %s90 = sadd.s32 %s89, 1
      %s91 = scalar_select %p88, %s89, %s90
      %p94 = pneg %p88
      %p95 = scmp.eq.s32.totalorder %s27, 1
      %p96 = por %p94, %p95
      %p97 = scmp.ne.s32.totalorder %s89, %s92
      %p98 = scmp.eq.s32.totalorder %s27, 0
      %p99 = por %p97, %p98
      %p100 = scmp.ne.s32.totalorder %s89, %s92
      %p101 = scmp.eq.s32.totalorder %s32, 1
      %p102 = por %p100, %p101
      %p103 = scmp.ne.s32.totalorder %s92, %s93
      %p104 = scmp.eq.s32.totalorder %s32, 0
      %p105 = por %p103, %p104
      %p106 = scmp.ne.s32.totalorder %s92, %s93
      %p107 = scmp.eq.s32.totalorder %s33, 1
      %p108 = por %p106, %p107
      %p110 = scmp.ne.s32.totalorder %s93, %s109
      %p111 = scmp.eq.s32.totalorder %s33, 0
      %p112 = por %p110, %p111
      %s113 = ssub.s32 %s27, %s34
      %p114 = scmp.eq.s32.totalorder %s113, 0
      %s116 = sadd.s32 %s115, 1
      %s117 = scalar_select %p114, %s115, %s116
      %p120 = pneg %p114
      %p121 = scmp.eq.s32.totalorder %s27, 1
      %p122 = por %p120, %p121
      %p123 = scmp.ne.s32.totalorder %s115, %s118
      %p124 = scmp.eq.s32.totalorder %s27, 0
      %p125 = por %p123, %p124
      %p126 = scmp.ne.s32.totalorder %s115, %s118
      %p127 = scmp.eq.s32.totalorder %s32, 1
      %p128 = por %p126, %p127
      %p129 = scmp.ne.s32.totalorder %s118, %s119
      %p130 = scmp.eq.s32.totalorder %s32, 0
      %p131 = por %p129, %p130
      %p132 = scmp.ne.s32.totalorder %s118, %s119
      %p133 = scmp.eq.s32.totalorder %s33, 1
      %p134 = por %p132, %p133
      %p136 = scmp.ne.s32.totalorder %s119, %s135
      %p137 = scmp.eq.s32.totalorder %s33, 0
      %p138 = por %p136, %p137
      %s140 = sadd.s32 %s139, 1
      %p143 = scmp.eq.s32.totalorder %s27, 1
      %p144 = scmp.ne.s32.totalorder %s139, %s141
      %p145 = scmp.eq.s32.totalorder %s27, 0
      %p146 = por %p144, %p145
      %p147 = scmp.ne.s32.totalorder %s139, %s141
      %p148 = scmp.eq.s32.totalorder %s32, 1
      %p149 = por %p147, %p148
      %p150 = scmp.ne.s32.totalorder %s141, %s142
      %p151 = scmp.eq.s32.totalorder %s32, 0
      %p152 = por %p150, %p151
      %p153 = scmp.ne.s32.totalorder %s141, %s142
      %p154 = scmp.eq.s32.totalorder %s33, 1
      %p155 = por %p153, %p154
      %p157 = scmp.ne.s32.totalorder %s142, %s156
      %p158 = scmp.eq.s32.totalorder %s33, 0
      %p159 = por %p157, %p158
      %s161 = sadd.s32 %s160, 1
      %p164 = scmp.eq.s32.totalorder %s27, 1
      %p165 = scmp.ne.s32.totalorder %s160, %s162
      %p166 = scmp.eq.s32.totalorder %s27, 0
      %p167 = por %p165, %p166
      %p168 = scmp.ne.s32.totalorder %s160, %s162
      %p169 = scmp.eq.s32.totalorder %s32, 1
      %p170 = por %p168, %p169
      %p171 = scmp.ne.s32.totalorder %s162, %s163
      %p172 = scmp.eq.s32.totalorder %s32, 0
      %p173 = por %p171, %p172
      %p174 = scmp.ne.s32.totalorder %s162, %s163
      %p175 = scmp.eq.s32.totalorder %s33, 1
      %p176 = por %p174, %p175
      %p178 = scmp.ne.s32.totalorder %s163, %s177
      %p179 = scmp.eq.s32.totalorder %s33, 0
      %p180 = por %p178, %p179
      %s182 = sadd.s32 %s181, 1
      %p185 = scmp.eq.s32.totalorder %s27, 1
      %p186 = scmp.ne.s32.totalorder %s181, %s183
      %p187 = scmp.eq.s32.totalorder %s27, 0
      %p188 = por %p186, %p187
      %p189 = scmp.ne.s32.totalorder %s181, %s183
      %p190 = scmp.eq.s32.totalorder %s32, 1
      %p191 = por %p189, %p190
      %p192 = scmp.ne.s32.totalorder %s183, %s184
      %p193 = scmp.eq.s32.totalorder %s32, 0
      %p194 = por %p192, %p193
      %p195 = scmp.ne.s32.totalorder %s183, %s184
      %p196 = scmp.eq.s32.totalorder %s33, 1
      %p197 = por %p195, %p196
      %p199 = scmp.ne.s32.totalorder %s184, %s198
      %p200 = scmp.eq.s32.totalorder %s33, 0
      %p201 = por %p199, %p200
      %s203 = sadd.s32 %s202, 1
      %p206 = scmp.eq.s32.totalorder %s27, 1
      %p207 = scmp.ne.s32.totalorder %s202, %s204
      %p208 = scmp.eq.s32.totalorder %s27, 0
      %p209 = por %p207, %p208
      %p210 = scmp.ne.s32.totalorder %s202, %s204
      %p211 = scmp.eq.s32.totalorder %s32, 1
      %p212 = por %p210, %p211
      %p213 = scmp.ne.s32.totalorder %s204, %s205
      %p214 = scmp.eq.s32.totalorder %s32, 0
      %p215 = por %p213, %p214
      %p216 = scmp.ne.s32.totalorder %s204, %s205
      %p217 = scmp.eq.s32.totalorder %s33, 1
      %p218 = por %p216, %p217
      %p220 = scmp.ne.s32.totalorder %s205, %s219
      %p221 = scmp.eq.s32.totalorder %s33, 0
      %p222 = por %p220, %p221
      %s224 = sadd.s32 %s223, 1
      %p227 = scmp.eq.s32.totalorder %s27, 1
      %p228 = scmp.ne.s32.totalorder %s223, %s225
      %p229 = scmp.eq.s32.totalorder %s27, 0
      %p230 = por %p228, %p229
      %p231 = scmp.ne.s32.totalorder %s223, %s225
      %p232 = scmp.eq.s32.totalorder %s32, 1
      %p233 = por %p231, %p232
      %p234 = scmp.ne.s32.totalorder %s225, %s226
      %p235 = scmp.eq.s32.totalorder %s32, 0
      %p236 = por %p234, %p235
      %p237 = scmp.ne.s32.totalorder %s225, %s226
      %p238 = scmp.eq.s32.totalorder %s33, 1
      %p239 = por %p237, %p238
      %p241 = scmp.ne.s32.totalorder %s226, %s240
      %p242 = scmp.eq.s32.totalorder %s33, 0
      %p243 = por %p241, %p242
      %s245 = sadd.s32 %s244, 1
      %p248 = scmp.eq.s32.totalorder %s27, 1
      %p249 = scmp.ne.s32.totalorder %s244, %s246
      %p250 = scmp.eq.s32.totalorder %s27, 0
      %p251 = por %p249, %p250
      %p252 = scmp.ne.s32.totalorder %s244, %s246
      %p253 = scmp.eq.s32.totalorder %s32, 1
      %p254 = por %p252, %p253
      %p255 = scmp.ne.s32.totalorder %s246, %s247
      %p256 = scmp.eq.s32.totalorder %s32, 0
      %p257 = por %p255, %p256
      %p258 = scmp.ne.s32.totalorder %s246, %s247
      %p259 = scmp.eq.s32.totalorder %s33, 1
      %p260 = por %p258, %p259
      %p262 = scmp.ne.s32.totalorder %s247, %s261
      %p263 = scmp.eq.s32.totalorder %s33, 0
      %p264 = por %p262, %p263
      %s265 = ssub.s32 %s27, %s34
      %p266 = scmp.eq.s32.totalorder %s265, 0
      %s268 = sadd.s32 %s267, 1
      %s269 = scalar_select %p266, %s267, %s268
      %p272 = pneg %p266
      %p273 = scmp.eq.s32.totalorder %s27, 1
      %p274 = por %p272, %p273
      %p275 = scmp.ne.s32.totalorder %s267, %s270
      %p276 = scmp.eq.s32.totalorder %s27, 0
      %p277 = por %p275, %p276
      %p278 = scmp.ne.s32.totalorder %s267, %s270
      %p279 = scmp.eq.s32.totalorder %s32, 1
      %p280 = por %p278, %p279
      %p281 = scmp.ne.s32.totalorder %s270, %s271
      %p282 = scmp.eq.s32.totalorder %s32, 0
      %p283 = por %p281, %p282
      %p284 = scmp.ne.s32.totalorder %s270, %s271
      %p285 = scmp.eq.s32.totalorder %s33, 1
      %p286 = por %p284, %p285
      %p288 = scmp.ne.s32.totalorder %s271, %s287
      %p289 = scmp.eq.s32.totalorder %s33, 0
      %p290 = por %p288, %p289
      %p291 = scmp.le.s32.totalorder 1, %s27
      %p292 = scmp.lt.s32.totalorder %s27, 3
      %p293 = pnand %p291, %p292
      %p294 = pneg %p293
      // Predicated region
      $region9: #{tpu_custom_call.1} parent=5 // pred_check
        _
      $region10: #{tpu_custom_call.1} parent=5 // pred_check_branch
        %296 = sbr.rel (%p293) target = $region12
      $region11: #{tpu_custom_call.1} parent=5 // pred_region
        %s297 = ssub.s32 %s27, 1
        // Predicated region
        $region13: #{tpu_custom_call.1} parent=11 // pred_check
          %p298 = pneg %p152
        $region14: #{tpu_custom_call.1} parent=11 // pred_check_branch
          %300 = sbr.rel (%p298) target = $region16
        $region15: #{tpu_custom_call.1} parent=11 // pred_region
          %s302 = ssub.s32 8192, 8192
          %303 = vsyncadd [#allocation9], %s302
          %s304 = sshll.u32 [#allocation8], 4
          %s305 = int_to_ptr.vmem [resolvable:$true] %s304
          %310 = dma.hbm_to_vmem [thread:$0]  %s4, 8192, %s305, [#allocation9], 128, 128, 8
        $region16: #{tpu_custom_call.1} parent=11 // pred_fallthru
          _
        // Predicated region
        $region17: #{tpu_custom_call.1} parent=11 // pred_check
          %p311 = pneg %p173
        $region18: #{tpu_custom_call.1} parent=11 // pred_check_branch
          %313 = sbr.rel (%p311) target = $region20
        $region19: #{tpu_custom_call.1} parent=11 // pred_region
          %s315 = ssub.s32 8192, 8192
          %316 = vsyncadd [#allocation9], %s315
          %s317 = sshll.u32 [#allocation10], 4
          %s318 = int_to_ptr.vmem [resolvable:$true] %s317
          %323 = dma.hbm_to_vmem [thread:$0]  %s5, 8192, %s318, [#allocation9], 128, 128, 8
        $region20: #{tpu_custom_call.1} parent=11 // pred_fallthru
          _
        // Predicated region
        $region21: #{tpu_custom_call.1} parent=11 // pred_check
          %p324 = pneg %p194
        $region22: #{tpu_custom_call.1} parent=11 // pred_check_branch
          %326 = sbr.rel (%p324) target = $region24
        $region23: #{tpu_custom_call.1} parent=11 // pred_region
          %s328 = ssub.s32 8192, 8192
          %329 = vsyncadd [#allocation12], %s328
          %s330 = sshll.u32 [#allocation11], 4
          %s331 = int_to_ptr.vmem [resolvable:$true] %s330
          %336 = dma.hbm_to_vmem [thread:$0]  %s6, 8192, %s331, [#allocation12], 128, 128, 8
        $region24: #{tpu_custom_call.1} parent=11 // pred_fallthru
          _
        // Predicated region
        $region25: #{tpu_custom_call.1} parent=11 // pred_check
          %p337 = pneg %p215
        $region26: #{tpu_custom_call.1} parent=11 // pred_check_branch
          %339 = sbr.rel (%p337) target = $region28
        $region27: #{tpu_custom_call.1} parent=11 // pred_region
          %s341 = ssub.s32 8192, 8192
          %342 = vsyncadd [#allocation12], %s341
          %s343 = sshll.u32 [#allocation13], 4
          %s344 = int_to_ptr.vmem [resolvable:$true] %s343
          %349 = dma.hbm_to_vmem [thread:$0]  %s7, 8192, %s344, [#allocation12], 256, 256, 16
        $region28: #{tpu_custom_call.1} parent=11 // pred_fallthru
          _
        // Predicated region
        $region29: #{tpu_custom_call.1} parent=11 // pred_check
          %p350 = pneg %p236
        $region30: #{tpu_custom_call.1} parent=11 // pred_check_branch
          %352 = sbr.rel (%p350) target = $region32
        $region31: #{tpu_custom_call.1} parent=11 // pred_region
          _
        $region32: #{tpu_custom_call.1} parent=11 // pred_fallthru
          _
        // Predicated region
        $region33: #{tpu_custom_call.1} parent=11 // pred_check
          %p353 = pneg %p257
        $region34: #{tpu_custom_call.1} parent=11 // pred_check_branch
          %355 = sbr.rel (%p353) target = $region36
        $region35: #{tpu_custom_call.1} parent=11 // pred_region
          _
        $region36: #{tpu_custom_call.1} parent=11 // pred_fallthru
          _
      $region12: #{tpu_custom_call.1} parent=5 // pred_fallthru
        _
      %p356 = scmp.lt.s32.totalorder %s27, 2
      // Predicated region
      $region37: #{tpu_custom_call.1} parent=5 // pred_check
        %p357 = pneg %p356
      $region38: #{tpu_custom_call.1} parent=5 // pred_check_branch
        %359 = sbr.rel (%p357) target = $region40
      $region39: #{tpu_custom_call.1} parent=5 // pred_region
        // Predicated region
        $region41: #{tpu_custom_call.1} parent=39 // pred_check
          %p360 = pneg %p47
        $region42: #{tpu_custom_call.1} parent=39 // pred_check_branch
          %362 = sbr.rel (%p360) target = $region44
        $region43: #{tpu_custom_call.1} parent=39 // pred_region
          %s363 = sand.u32 %s37, 1
          %s364 = scalar_lea.sflag [#allocation3], %s363
          %s365 = sand.u32 %s37, 1
          %s366 = smul.addr %s365, 16
          %s367 = scalar_lea.vmem [#allocation2], %s366
          %s369 = ssub.s32 256, 256
          %370 = vsyncadd %s364, %s369
          %s371 = smul.addr %s27, 2
          %s372 = smul.addr %s371, 128
          %s373 = scalar_lea.hbm %s0, %s372
          %s375 = sshll.u32 %s367, 4
          %s376 = int_to_ptr.vmem [resolvable:$true] %s375
          %378 = dma.hbm_to_vmem [thread:$0]  %s373, 256, %s376, %s364
        $region44: #{tpu_custom_call.1} parent=39 // pred_fallthru
          _
        // Predicated region
        $region45: #{tpu_custom_call.1} parent=39 // pred_check
          %p379 = pneg %p73
        $region46: #{tpu_custom_call.1} parent=39 // pred_check_branch
          %381 = sbr.rel (%p379) target = $region48
        $region47: #{tpu_custom_call.1} parent=39 // pred_region
          %s382 = sand.u32 %s27, 1
          %s383 = scalar_lea.sflag [#allocation6], %s382
          %s384 = sand.u32 %s63, 1
          %s385 = smul.addr %s384, 16
          %s386 = scalar_lea.vmem [#allocation5], %s385
          %s388 = ssub.s32 256, 256
          %389 = vsyncadd %s383, %s388
          %s390 = smul.addr %s27, 2
          %s391 = smul.addr %s390, 128
          %s392 = scalar_lea.hbm %s1, %s391
          %s394 = sshll.u32 %s386, 4
          %s395 = int_to_ptr.vmem [resolvable:$true] %s394
          %397 = dma.hbm_to_vmem [thread:$0]  %s392, 256, %s395, %s383
        $region48: #{tpu_custom_call.1} parent=39 // pred_fallthru
          _
        // Predicated region
        $region49: #{tpu_custom_call.1} parent=39 // pred_check
          %p398 = pneg %p99
        $region50: #{tpu_custom_call.1} parent=39 // pred_check_branch
          %400 = sbr.rel (%p398) target = $region52
        $region51: #{tpu_custom_call.1} parent=39 // pred_region
          %s401 = sand.u32 %s27, 1
          %s402 = scalar_lea.sflag [#allocation6], %s401
          %s403 = sand.u32 %s89, 1
          %s404 = smul.addr %s403, 16
          %s405 = scalar_lea.vmem [#allocation7], %s404
          %s407 = ssub.s32 256, 256
          %408 = vsyncadd %s402, %s407
          %s409 = smul.addr %s27, 2
          %s410 = smul.addr %s409, 128
          %s411 = scalar_lea.hbm %s2, %s410
          %s413 = sshll.u32 %s405, 4
          %s414 = int_to_ptr.vmem [resolvable:$true] %s413
          %416 = dma.hbm_to_vmem [thread:$0]  %s411, 256, %s414, %s402
        $region52: #{tpu_custom_call.1} parent=39 // pred_fallthru
          _
        // Predicated region
        $region53: #{tpu_custom_call.1} parent=39 // pred_check
          %p417 = pneg %p125
        $region54: #{tpu_custom_call.1} parent=39 // pred_check_branch
          %419 = sbr.rel (%p417) target = $region56
        $region55: #{tpu_custom_call.1} parent=39 // pred_region
          %p420 = scmp.lt.s32.totalorder %s27, 1
          %s421 = scalar_select %p420, %s27, 1
          %s422 = smul.addr %s421, 2
          %s423 = scalar_lea.vmem %s3, %s422
        $region56: #{tpu_custom_call.1} parent=39 // pred_fallthru
          _
      $region40: #{tpu_custom_call.1} parent=5 // pred_fallthru
        _
      %p424 = scmp.le.s32.totalorder 1, %s27
      %p425 = scmp.lt.s32.totalorder %s27, 3
      %p426 = pnand %p424, %p425
      %p427 = pneg %p426
      // Predicated region
      $region57: #{tpu_custom_call.1} parent=5 // pred_check
        _
      $region58: #{tpu_custom_call.1} parent=5 // pred_check_branch
        %429 = sbr.rel (%p426) target = $region60
      $region59: #{tpu_custom_call.1} parent=5 // pred_region
        %s430 = ssub.s32 %s27, 1
        %s431 = sand.u32 %s40, 1
        %s432 = scalar_lea.sflag [#allocation3], %s431
        %s433 = sand.u32 %s40, 1
        %s434 = smul.addr %s433, 16
        %s435 = scalar_lea.vmem [#allocation2], %s434
        // Predicated region
        $region61: #{tpu_custom_call.1} parent=59 // pred_check
          %p436 = pneg %p53
        $region62: #{tpu_custom_call.1} parent=59 // pred_check_branch
          %438 = sbr.rel (%p436) target = $region64
        $region63: #{tpu_custom_call.1} parent=59 // pred_region
          %439 = dma.done %s432, 256
        $region64: #{tpu_custom_call.1} parent=59 // pred_fallthru
          _
        %s440 = sand.u32 %s32, 1
        %s441 = scalar_lea.sflag [#allocation6], %s440
        %s442 = sand.u32 %s66, 1
        %s443 = smul.addr %s442, 16
        %s444 = scalar_lea.vmem [#allocation5], %s443
        // Predicated region
        $region65: #{tpu_custom_call.1} parent=59 // pred_check
          %p445 = pneg %p79
        $region66: #{tpu_custom_call.1} parent=59 // pred_check_branch
          %447 = sbr.rel (%p445) target = $region68
        $region67: #{tpu_custom_call.1} parent=59 // pred_region
          %448 = dma.done %s441, 256
        $region68: #{tpu_custom_call.1} parent=59 // pred_fallthru
          _
        %s449 = sand.u32 %s32, 1
        %s450 = scalar_lea.sflag [#allocation6], %s449
        %s451 = sand.u32 %s92, 1
        %s452 = smul.addr %s451, 16
        %s453 = scalar_lea.vmem [#allocation7], %s452
        // Predicated region
        $region69: #{tpu_custom_call.1} parent=59 // pred_check
          %p454 = pneg %p105
        $region70: #{tpu_custom_call.1} parent=59 // pred_check_branch
          %456 = sbr.rel (%p454) target = $region72
        $region71: #{tpu_custom_call.1} parent=59 // pred_region
          %457 = dma.done %s450, 256
        $region72: #{tpu_custom_call.1} parent=59 // pred_fallthru
          _
        // Predicated region
        $region73: #{tpu_custom_call.1} parent=59 // pred_check
          %p458 = pneg %p152
        $region74: #{tpu_custom_call.1} parent=59 // pred_check_branch
          %460 = sbr.rel (%p458) target = $region76
        $region75: #{tpu_custom_call.1} parent=59 // pred_region
          %461 = dma.done [#allocation9], 8192
        $region76: #{tpu_custom_call.1} parent=59 // pred_fallthru
          _
        // Predicated region
        $region77: #{tpu_custom_call.1} parent=59 // pred_check
          %p462 = pneg %p173
        $region78: #{tpu_custom_call.1} parent=59 // pred_check_branch
          %464 = sbr.rel (%p462) target = $region80
        $region79: #{tpu_custom_call.1} parent=59 // pred_region
          %465 = dma.done [#allocation9], 8192
        $region80: #{tpu_custom_call.1} parent=59 // pred_fallthru
          _
        // Predicated region
        $region81: #{tpu_custom_call.1} parent=59 // pred_check
          %p466 = pneg %p194
        $region82: #{tpu_custom_call.1} parent=59 // pred_check_branch
          %468 = sbr.rel (%p466) target = $region84
        $region83: #{tpu_custom_call.1} parent=59 // pred_region
          %469 = dma.done [#allocation12], 8192
        $region84: #{tpu_custom_call.1} parent=59 // pred_fallthru
          _
        // Predicated region
        $region85: #{tpu_custom_call.1} parent=59 // pred_check
          %p470 = pneg %p215
        $region86: #{tpu_custom_call.1} parent=59 // pred_check_branch
          %472 = sbr.rel (%p470) target = $region88
        $region87: #{tpu_custom_call.1} parent=59 // pred_region
          %473 = dma.done [#allocation12], 8192
        $region88: #{tpu_custom_call.1} parent=59 // pred_fallthru
          _
        %s474 = sand.u32 %s40, 1
        %s475 = scalar_lea.sflag [#allocation3], %s474
        %s476 = sand.u32 %s40, 1
        %s477 = smul.addr %s476, 16
        %s478 = scalar_lea.vmem [#allocation2], %s477
        %p479 = pneg %p53
        %p480 = pneg %p50
        %s481 = sand.u32 %s32, 1
        %s482 = scalar_lea.sflag [#allocation6], %s481
        %s483 = sand.u32 %s66, 1
        %s484 = smul.addr %s483, 16
        %s485 = scalar_lea.vmem [#allocation5], %s484
        %p486 = pneg %p79
        %p487 = pneg %p76
        %s488 = sand.u32 %s32, 1
        %s489 = scalar_lea.sflag [#allocation6], %s488
        %s490 = sand.u32 %s92, 1
        %s491 = smul.addr %s490, 16
        %s492 = scalar_lea.vmem [#allocation7], %s491
        %p493 = pneg %p105
        %p494 = pneg %p102
        %p495 = scmp.lt.s32.totalorder %s32, 1
        %s496 = scalar_select %p495, %s32, 1
        %s497 = smul.addr %s496, 2
        %s498 = scalar_lea.vmem %s3, %s497
        %p499 = pneg %p131
        %p500 = pneg %p128
        %p501 = pneg %p152
        %p502 = pneg %p149
        %p503 = pneg %p173
        %p504 = pneg %p170
        %p505 = pneg %p194
        %p506 = pneg %p191
        %p507 = pneg %p215
        %p508 = pneg %p212
        %p509 = pneg %p236
        %p510 = pneg %p233
        %p511 = pneg %p257
        %p512 = pneg %p254
        %p513 = pneg %p283
        %p514 = pneg %p280
        %s515 = sand.u32 %s270, 1
        %s516 = scalar_lea.sflag [#allocation4], %s515
        %s517 = sand.u32 %s270, 1
        %s518 = smul.addr %s517, 16
        %s519 = scalar_lea.vmem [#allocation14], %s518
        %p520 = scmp.lt.s32.totalorder %s32, 1
        %s521 = scalar_select %p520, %s32, 1
        %s522 = smul.addr %s521, 2
        %s523 = scalar_lea.vmem %s3, %s522
        %v526 = vld [vmem:[%s435] sm:$0xff]
        %v527 = vld [vmem:[%s435 + $0x8] sm:$0xff]
        %v528 = vld [vmem:[%s444] sm:$0xff]
        %v529 = vld [vmem:[%s444 + $0x8] sm:$0xff]
        %v530 = vld [vmem:[%s453] sm:$0xff]
        %v531 = vld [vmem:[%s453 + $0x8] sm:$0xff]
        %v532 = vld [vmem:[%s523] sm:$0x3]
        %vm533 = vnez %v532
        %v534 = vpack.c.bf16 %v526, %v526
        %v535 = vpack.c.bf16 %v527, %v527
        %v536 = vld [vmem:[#allocation8] sm:$0xff]
        %v537 = vld [vmem:[#allocation8 + $0x8] sm:$0xff]
        %v538 = vld [vmem:[#allocation8 + $0x10] sm:$0xff]
        %v539 = vld [vmem:[#allocation8 + $0x18] sm:$0xff]
        %v540 = vld [vmem:[#allocation8 + $0x20] sm:$0xff]
        %v541 = vld [vmem:[#allocation8 + $0x28] sm:$0xff]
        %v542 = vld [vmem:[#allocation8 + $0x30] sm:$0xff]
        %v543 = vld [vmem:[#allocation8 + $0x38] sm:$0xff]
        %v544 = vld [vmem:[#allocation8 + $0x40] sm:$0xff]
        %v545 = vld [vmem:[#allocation8 + $0x48] sm:$0xff]
        %v546 = vld [vmem:[#allocation8 + $0x50] sm:$0xff]
        %v547 = vld [vmem:[#allocation8 + $0x58] sm:$0xff]
        %v548 = vld [vmem:[#allocation8 + $0x60] sm:$0xff]
        %v549 = vld [vmem:[#allocation8 + $0x68] sm:$0xff]
        %v550 = vld [vmem:[#allocation8 + $0x70] sm:$0xff]
        %v551 = vld [vmem:[#allocation8 + $0x78] sm:$0xff]
        %v552 = vld [vmem:[#allocation8 + $0x80] sm:$0xff]
        %v553 = vld [vmem:[#allocation8 + $0x88] sm:$0xff]
        %v554 = vld [vmem:[#allocation8 + $0x90] sm:$0xff]
        %v555 = vld [vmem:[#allocation8 + $0x98] sm:$0xff]
        %v556 = vld [vmem:[#allocation8 + $0xa0] sm:$0xff]
        %v557 = vld [vmem:[#allocation8 + $0xa8] sm:$0xff]
        %v558 = vld [vmem:[#allocation8 + $0xb0] sm:$0xff]
        %v559 = vld [vmem:[#allocation8 + $0xb8] sm:$0xff]
        %v560 = vld [vmem:[#allocation8 + $0xc0] sm:$0xff]
        %v561 = vld [vmem:[#allocation8 + $0xc8] sm:$0xff]
        %v562 = vld [vmem:[#allocation8 + $0xd0] sm:$0xff]
        %v563 = vld [vmem:[#allocation8 + $0xd8] sm:$0xff]
        %v564 = vld [vmem:[#allocation8 + $0xe0] sm:$0xff]
        %v565 = vld [vmem:[#allocation8 + $0xe8] sm:$0xff]
        %v566 = vld [vmem:[#allocation8 + $0xf0] sm:$0xff]
        %v567 = vld [vmem:[#allocation8 + $0xf8] sm:$0xff]
        %v568 = vld [vmem:[#allocation8 + $0x100] sm:$0xff]
        %v569 = vld [vmem:[#allocation8 + $0x108] sm:$0xff]
        %v570 = vld [vmem:[#allocation8 + $0x110] sm:$0xff]
        %v571 = vld [vmem:[#allocation8 + $0x118] sm:$0xff]
        %v572 = vld [vmem:[#allocation8 + $0x120] sm:$0xff]
        %v573 = vld [vmem:[#allocation8 + $0x128] sm:$0xff]
        %v574 = vld [vmem:[#allocation8 + $0x130] sm:$0xff]
        %v575 = vld [vmem:[#allocation8 + $0x138] sm:$0xff]
        %v576 = vld [vmem:[#allocation8 + $0x140] sm:$0xff]
        %v577 = vld [vmem:[#allocation8 + $0x148] sm:$0xff]
        %v578 = vld [vmem:[#allocation8 + $0x150] sm:$0xff]
        %v579 = vld [vmem:[#allocation8 + $0x158] sm:$0xff]
        %v580 = vld [vmem:[#allocation8 + $0x160] sm:$0xff]
        %v581 = vld [vmem:[#allocation8 + $0x168] sm:$0xff]
        %v582 = vld [vmem:[#allocation8 + $0x170] sm:$0xff]
        %v583 = vld [vmem:[#allocation8 + $0x178] sm:$0xff]
        %v584 = vld [vmem:[#allocation8 + $0x180] sm:$0xff]
        %v585 = vld [vmem:[#allocation8 + $0x188] sm:$0xff]
        %v586 = vld [vmem:[#allocation8 + $0x190] sm:$0xff]
        %v587 = vld [vmem:[#allocation8 + $0x198] sm:$0xff]
        %v588 = vld [vmem:[#allocation8 + $0x1a0] sm:$0xff]
        %v589 = vld [vmem:[#allocation8 + $0x1a8] sm:$0xff]
        %v590 = vld [vmem:[#allocation8 + $0x1b0] sm:$0xff]
        %v591 = vld [vmem:[#allocation8 + $0x1b8] sm:$0xff]
        %v592 = vld [vmem:[#allocation8 + $0x1c0] sm:$0xff]
        %v593 = vld [vmem:[#allocation8 + $0x1c8] sm:$0xff]
        %v594 = vld [vmem:[#allocation8 + $0x1d0] sm:$0xff]
        %v595 = vld [vmem:[#allocation8 + $0x1d8] sm:$0xff]
        %v596 = vld [vmem:[#allocation8 + $0x1e0] sm:$0xff]
        %v597 = vld [vmem:[#allocation8 + $0x1e8] sm:$0xff]
        %v598 = vld [vmem:[#allocation8 + $0x1f0] sm:$0xff]
        %v599 = vld [vmem:[#allocation8 + $0x1f8] sm:$0xff]
        %v664 = vunpack.c.l.b16 %v536
        %v665 = vunpack.c.h.b16 %v536
        %v666 = vunpack.c.l.b16 %v537
        %v667 = vunpack.c.h.b16 %v537
        %v668 = vunpack.c.l.b16 %v538
        %v669 = vunpack.c.h.b16 %v538
        %v670 = vunpack.c.l.b16 %v539
        %v671 = vunpack.c.h.b16 %v539
        %v672 = vunpack.c.l.b16 %v540
        %v673 = vunpack.c.h.b16 %v540
        %v674 = vunpack.c.l.b16 %v541
        %v675 = vunpack.c.h.b16 %v541
        %v676 = vunpack.c.l.b16 %v542
        %v677 = vunpack.c.h.b16 %v542
        %v678 = vunpack.c.l.b16 %v543
        %v679 = vunpack.c.h.b16 %v543
        %v680 = vunpack.c.l.b16 %v544
        %v681 = vunpack.c.h.b16 %v544
        %v682 = vunpack.c.l.b16 %v545
        %v683 = vunpack.c.h.b16 %v545
        %v684 = vunpack.c.l.b16 %v546
        %v685 = vunpack.c.h.b16 %v546
        %v686 = vunpack.c.l.b16 %v547
        %v687 = vunpack.c.h.b16 %v547
        %v688 = vunpack.c.l.b16 %v548
        %v689 = vunpack.c.h.b16 %v548
        %v690 = vunpack.c.l.b16 %v549
        %v691 = vunpack.c.h.b16 %v549
        %v692 = vunpack.c.l.b16 %v550
        %v693 = vunpack.c.h.b16 %v550
        %v694 = vunpack.c.l.b16 %v551
        %v695 = vunpack.c.h.b16 %v551
        %v696 = vunpack.c.l.b16 %v552
        %v697 = vunpack.c.h.b16 %v552
        %v698 = vunpack.c.l.b16 %v553
        %v699 = vunpack.c.h.b16 %v553
        %v700 = vunpack.c.l.b16 %v554
        %v701 = vunpack.c.h.b16 %v554
        %v702 = vunpack.c.l.b16 %v555
        %v703 = vunpack.c.h.b16 %v555
        %v704 = vunpack.c.l.b16 %v556
        %v705 = vunpack.c.h.b16 %v556
        %v706 = vunpack.c.l.b16 %v557
        %v707 = vunpack.c.h.b16 %v557
        %v708 = vunpack.c.l.b16 %v558
        %v709 = vunpack.c.h.b16 %v558
        %v710 = vunpack.c.l.b16 %v559
        %v711 = vunpack.c.h.b16 %v559
        %v712 = vunpack.c.l.b16 %v560
        %v713 = vunpack.c.h.b16 %v560
        %v714 = vunpack.c.l.b16 %v561
        %v715 = vunpack.c.h.b16 %v561
        %v716 = vunpack.c.l.b16 %v562
        %v717 = vunpack.c.h.b16 %v562
        %v718 = vunpack.c.l.b16 %v563
        %v719 = vunpack.c.h.b16 %v563
        %v720 = vunpack.c.l.b16 %v564
        %v721 = vunpack.c.h.b16 %v564
        %v722 = vunpack.c.l.b16 %v565
        %v723 = vunpack.c.h.b16 %v565
        %v724 = vunpack.c.l.b16 %v566
        %v725 = vunpack.c.h.b16 %v566
        %v726 = vunpack.c.l.b16 %v567
        %v727 = vunpack.c.h.b16 %v567
        %v728 = vunpack.c.l.b16 %v568
        %v729 = vunpack.c.h.b16 %v568
        %v730 = vunpack.c.l.b16 %v569
        %v731 = vunpack.c.h.b16 %v569
        %v732 = vunpack.c.l.b16 %v570
        %v733 = vunpack.c.h.b16 %v570
        %v734 = vunpack.c.l.b16 %v571
        %v735 = vunpack.c.h.b16 %v571
        %v736 = vunpack.c.l.b16 %v572
        %v737 = vunpack.c.h.b16 %v572
        %v738 = vunpack.c.l.b16 %v573
        %v739 = vunpack.c.h.b16 %v573
        %v740 = vunpack.c.l.b16 %v574
        %v741 = vunpack.c.h.b16 %v574
        %v742 = vunpack.c.l.b16 %v575
        %v743 = vunpack.c.h.b16 %v575
        %v744 = vunpack.c.l.b16 %v576
        %v745 = vunpack.c.h.b16 %v576
        %v746 = vunpack.c.l.b16 %v577
        %v747 = vunpack.c.h.b16 %v577
        %v748 = vunpack.c.l.b16 %v578
        %v749 = vunpack.c.h.b16 %v578
        %v750 = vunpack.c.l.b16 %v579
        %v751 = vunpack.c.h.b16 %v579
        %v752 = vunpack.c.l.b16 %v580
        %v753 = vunpack.c.h.b16 %v580
        %v754 = vunpack.c.l.b16 %v581
        %v755 = vunpack.c.h.b16 %v581
        %v756 = vunpack.c.l.b16 %v582
        %v757 = vunpack.c.h.b16 %v582
        %v758 = vunpack.c.l.b16 %v583
        %v759 = vunpack.c.h.b16 %v583
        %v760 = vunpack.c.l.b16 %v584
        %v761 = vunpack.c.h.b16 %v584
        %v762 = vunpack.c.l.b16 %v585
        %v763 = vunpack.c.h.b16 %v585
        %v764 = vunpack.c.l.b16 %v586
        %v765 = vunpack.c.h.b16 %v586
        %v766 = vunpack.c.l.b16 %v587
        %v767 = vunpack.c.h.b16 %v587
        %v768 = vunpack.c.l.b16 %v588
        %v769 = vunpack.c.h.b16 %v588
        %v770 = vunpack.c.l.b16 %v589
        %v771 = vunpack.c.h.b16 %v589
        %v772 = vunpack.c.l.b16 %v590
        %v773 = vunpack.c.h.b16 %v590
        %v774 = vunpack.c.l.b16 %v591
        %v775 = vunpack.c.h.b16 %v591
        %v776 = vunpack.c.l.b16 %v592
        %v777 = vunpack.c.h.b16 %v592
        %v778 = vunpack.c.l.b16 %v593
        %v779 = vunpack.c.h.b16 %v593
        %v780 = vunpack.c.l.b16 %v594
        %v781 = vunpack.c.h.b16 %v594
        %v782 = vunpack.c.l.b16 %v595
        %v783 = vunpack.c.h.b16 %v595
        %v784 = vunpack.c.l.b16 %v596
        %v785 = vunpack.c.h.b16 %v596
        %v786 = vunpack.c.l.b16 %v597
        %v787 = vunpack.c.h.b16 %v597
        %v788 = vunpack.c.l.b16 %v598
        %v789 = vunpack.c.h.b16 %v598
        %v790 = vunpack.c.l.b16 %v599
        %v791 = vunpack.c.h.b16 %v599
        %v792 = vpack.c.b16 %v666, %v664
        %v793 = vpack.c.b16 %v667, %v665
        %v794 = vpack.c.b16 %v670, %v668
        %v795 = vpack.c.b16 %v671, %v669
        %v796 = vpack.c.b16 %v674, %v672
        %v797 = vpack.c.b16 %v675, %v673
        %v798 = vpack.c.b16 %v678, %v676
        %v799 = vpack.c.b16 %v679, %v677
        %v800 = vpack.c.b16 %v682, %v680
        %v801 = vpack.c.b16 %v683, %v681
        %v802 = vpack.c.b16 %v686, %v684
        %v803 = vpack.c.b16 %v687, %v685
        %v804 = vpack.c.b16 %v690, %v688
        %v805 = vpack.c.b16 %v691, %v689
        %v806 = vpack.c.b16 %v694, %v692
        %v807 = vpack.c.b16 %v695, %v693
        %v808 = vpack.c.b16 %v698, %v696
        %v809 = vpack.c.b16 %v699, %v697
        %v810 = vpack.c.b16 %v702, %v700
        %v811 = vpack.c.b16 %v703, %v701
        %v812 = vpack.c.b16 %v706, %v704
        %v813 = vpack.c.b16 %v707, %v705
        %v814 = vpack.c.b16 %v710, %v708
        %v815 = vpack.c.b16 %v711, %v709
        %v816 = vpack.c.b16 %v714, %v712
        %v817 = vpack.c.b16 %v715, %v713
        %v818 = vpack.c.b16 %v718, %v716
        %v819 = vpack.c.b16 %v719, %v717
        %v820 = vpack.c.b16 %v722, %v720
        %v821 = vpack.c.b16 %v723, %v721
        %v822 = vpack.c.b16 %v726, %v724
        %v823 = vpack.c.b16 %v727, %v725
        %v824 = vpack.c.b16 %v730, %v728
        %v825 = vpack.c.b16 %v731, %v729
        %v826 = vpack.c.b16 %v734, %v732
        %v827 = vpack.c.b16 %v735, %v733
        %v828 = vpack.c.b16 %v738, %v736
        %v829 = vpack.c.b16 %v739, %v737
        %v830 = vpack.c.b16 %v742, %v740
        %v831 = vpack.c.b16 %v743, %v741
        %v832 = vpack.c.b16 %v746, %v744
        %v833 = vpack.c.b16 %v747, %v745
        %v834 = vpack.c.b16 %v750, %v748
        %v835 = vpack.c.b16 %v751, %v749
        %v836 = vpack.c.b16 %v754, %v752
        %v837 = vpack.c.b16 %v755, %v753
        %v838 = vpack.c.b16 %v758, %v756
        %v839 = vpack.c.b16 %v759, %v757
        %v840 = vpack.c.b16 %v762, %v760
        %v841 = vpack.c.b16 %v763, %v761
        %v842 = vpack.c.b16 %v766, %v764
        %v843 = vpack.c.b16 %v767, %v765
        %v844 = vpack.c.b16 %v770, %v768
        %v845 = vpack.c.b16 %v771, %v769
        %v846 = vpack.c.b16 %v774, %v772
        %v847 = vpack.c.b16 %v775, %v773
        %v848 = vpack.c.b16 %v778, %v776
        %v849 = vpack.c.b16 %v779, %v777
        %v850 = vpack.c.b16 %v782, %v780
        %v851 = vpack.c.b16 %v783, %v781
        %v852 = vpack.c.b16 %v786, %v784
        %v853 = vpack.c.b16 %v787, %v785
        %v854 = vpack.c.b16 %v790, %v788
        %v855 = vpack.c.b16 %v791, %v789
        %920 = vmatprep.subr.bf16.mxu0 %v807
        %921 = vmatpush1.bf16.xpose.msra.mxu0 %v806
        %922 = vmatprep.subr.bf16.mxu0 %v805
        %923 = vmatpush1.bf16.xpose.msra.mxu0 %v804
        %924 = vmatprep.subr.bf16.mxu0 %v803
        %925 = vmatpush1.bf16.xpose.msra.mxu0 %v802
        %926 = vmatprep.subr.bf16.mxu0 %v801
        %927 = vmatpush1.bf16.xpose.msra.mxu0 %v800
        %928 = vmatprep.subr.bf16.mxu0 %v799
        %929 = vmatpush1.bf16.xpose.msra.mxu0 %v798
        %930 = vmatprep.subr.bf16.mxu0 %v797
        %931 = vmatpush1.bf16.xpose.msra.mxu0 %v796
        %932 = vmatprep.subr.bf16.mxu0 %v795
        %933 = vmatpush1.bf16.xpose.msra.mxu0 %v794
        %934 = vmatprep.subr.bf16.mxu0 %v793
        %935 = vmatpush1.bf16.xpose.msra.mxu0 %v792
        %936 = vmatprep.subr.bf16.mxu0 %v823
        %937 = vmatpush2.bf16.xpose.msra.mxu0 %v822
        %938 = vmatprep.subr.bf16.mxu0 %v821
        %939 = vmatpush2.bf16.xpose.msra.mxu0 %v820
        %940 = vmatprep.subr.bf16.mxu0 %v819
        %941 = vmatpush2.bf16.xpose.msra.mxu0 %v818
        %942 = vmatprep.subr.bf16.mxu0 %v817
        %943 = vmatpush2.bf16.xpose.msra.mxu0 %v816
        %944 = vmatprep.subr.bf16.mxu0 %v815
        %945 = vmatpush2.bf16.xpose.msra.mxu0 %v814
        %946 = vmatprep.subr.bf16.mxu0 %v813
        %947 = vmatpush2.bf16.xpose.msra.mxu0 %v812
        %948 = vmatprep.subr.bf16.mxu0 %v811
        %949 = vmatpush2.bf16.xpose.msra.mxu0 %v810
        %950 = vmatprep.subr.bf16.mxu0 %v809
        %951 = vmatpush2.bf16.xpose.msra.mxu0 %v808
        %952 = vmatprep.mubr.bf16.mxu0 %v535
        %953 = vmatmul.mubr.bf16.gmra.mxu0 %v534
        %v954 = vpop.f32.mrf.mxu0
        %v955 = vadd.f32 0.0, %v954
        %v956 = vpop.f32.mrf.mxu0
        %v957 = vadd.f32 0.0, %v956
        %v958 = vpop.f32.mrf.mxu0
        %v959 = vpop.f32.mrf.mxu0
        %960 = vdwg.mxu0
        %961 = vmatprep.subr.bf16.mxu0 %v839
        %962 = vmatpush1.bf16.xpose.msra.mxu0 %v838
        %963 = vmatprep.subr.bf16.mxu0 %v837
        %964 = vmatpush1.bf16.xpose.msra.mxu0 %v836
        %965 = vmatprep.subr.bf16.mxu0 %v835
        %966 = vmatpush1.bf16.xpose.msra.mxu0 %v834
        %967 = vmatprep.subr.bf16.mxu0 %v833
        %968 = vmatpush1.bf16.xpose.msra.mxu0 %v832
        %969 = vmatprep.subr.bf16.mxu0 %v831
        %970 = vmatpush1.bf16.xpose.msra.mxu0 %v830
        %971 = vmatprep.subr.bf16.mxu0 %v829
        %972 = vmatpush1.bf16.xpose.msra.mxu0 %v828
        %973 = vmatprep.subr.bf16.mxu0 %v827
        %974 = vmatpush1.bf16.xpose.msra.mxu0 %v826
        %975 = vmatprep.subr.bf16.mxu0 %v825
        %976 = vmatpush1.bf16.xpose.msra.mxu0 %v824
        %977 = vmatprep.subr.bf16.mxu0 %v855
        %978 = vmatpush2.bf16.xpose.msra.mxu0 %v854
        %979 = vmatprep.subr.bf16.mxu0 %v853
        %980 = vmatpush2.bf16.xpose.msra.mxu0 %v852
        %981 = vmatprep.subr.bf16.mxu0 %v851
        %982 = vmatpush2.bf16.xpose.msra.mxu0 %v850
        %983 = vmatprep.subr.bf16.mxu0 %v849
        %984 = vmatpush2.bf16.xpose.msra.mxu0 %v848
        %985 = vmatprep.subr.bf16.mxu0 %v847
        %986 = vmatpush2.bf16.xpose.msra.mxu0 %v846
        %987 = vmatprep.subr.bf16.mxu0 %v845
        %988 = vmatpush2.bf16.xpose.msra.mxu0 %v844
        %989 = vmatprep.subr.bf16.mxu0 %v843
        %990 = vmatpush2.bf16.xpose.msra.mxu0 %v842
        %991 = vmatprep.subr.bf16.mxu0 %v841
        %992 = vmatpush2.bf16.xpose.msra.mxu0 %v840
        %993 = vmatprep.mubr.bf16.mxu0 %v535
        %994 = vmatmul.mubr.bf16.gmra.mxu0 %v534
        %v995 = vpop.f32.mrf.mxu0
        %v996 = vadd.f32 0.0, %v995
        %v997 = vpop.f32.mrf.mxu0
        %v998 = vadd.f32 0.0, %v997
        %v999 = vpop.f32.mrf.mxu0
        %v1000 = vpop.f32.mrf.mxu0
        %1001 = vdwg.mxu0
        %v1002 = vmul.f32 %v955, 0.125
        %v1003 = vmul.f32 %v957, 0.125
        %v1004 = vmul.f32 %v996, 0.125
        %v1005 = vmul.f32 %v998, 0.125
        %v1006 = vpack.c.bf16 %v528, %v528
        %v1007 = vpack.c.bf16 %v529, %v529
        %v1008 = vld [vmem:[#allocation10] sm:$0xff]
        %v1009 = vld [vmem:[#allocation10 + $0x8] sm:$0xff]
        %v1010 = vld [vmem:[#allocation10 + $0x10] sm:$0xff]
        %v1011 = vld [vmem:[#allocation10 + $0x18] sm:$0xff]
        %v1012 = vld [vmem:[#allocation10 + $0x20] sm:$0xff]
        %v1013 = vld [vmem:[#allocation10 + $0x28] sm:$0xff]
        %v1014 = vld [vmem:[#allocation10 + $0x30] sm:$0xff]
        %v1015 = vld [vmem:[#allocation10 + $0x38] sm:$0xff]
        %v1016 = vld [vmem:[#allocation10 + $0x40] sm:$0xff]
        %v1017 = vld [vmem:[#allocation10 + $0x48] sm:$0xff]
        %v1018 = vld [vmem:[#allocation10 + $0x50] sm:$0xff]
        %v1019 = vld [vmem:[#allocation10 + $0x58] sm:$0xff]
        %v1020 = vld [vmem:[#allocation10 + $0x60] sm:$0xff]
        %v1021 = vld [vmem:[#allocation10 + $0x68] sm:$0xff]
        %v1022 = vld [vmem:[#allocation10 + $0x70] sm:$0xff]
        %v1023 = vld [vmem:[#allocation10 + $0x78] sm:$0xff]
        %v1024 = vld [vmem:[#allocation10 + $0x80] sm:$0xff]
        %v1025 = vld [vmem:[#allocation10 + $0x88] sm:$0xff]
        %v1026 = vld [vmem:[#allocation10 + $0x90] sm:$0xff]
        %v1027 = vld [vmem:[#allocation10 + $0x98] sm:$0xff]
        %v1028 = vld [vmem:[#allocation10 + $0xa0] sm:$0xff]
        %v1029 = vld [vmem:[#allocation10 + $0xa8] sm:$0xff]
        %v1030 = vld [vmem:[#allocation10 + $0xb0] sm:$0xff]
        %v1031 = vld [vmem:[#allocation10 + $0xb8] sm:$0xff]
        %v1032 = vld [vmem:[#allocation10 + $0xc0] sm:$0xff]
        %v1033 = vld [vmem:[#allocation10 + $0xc8] sm:$0xff]
        %v1034 = vld [vmem:[#allocation10 + $0xd0] sm:$0xff]
        %v1035 = vld [vmem:[#allocation10 + $0xd8] sm:$0xff]
        %v1036 = vld [vmem:[#allocation10 + $0xe0] sm:$0xff]
        %v1037 = vld [vmem:[#allocation10 + $0xe8] sm:$0xff]
        %v1038 = vld [vmem:[#allocation10 + $0xf0] sm:$0xff]
        %v1039 = vld [vmem:[#allocation10 + $0xf8] sm:$0xff]
        %v1040 = vld [vmem:[#allocation10 + $0x100] sm:$0xff]
        %v1041 = vld [vmem:[#allocation10 + $0x108] sm:$0xff]
        %v1042 = vld [vmem:[#allocation10 + $0x110] sm:$0xff]
        %v1043 = vld [vmem:[#allocation10 + $0x118] sm:$0xff]
        %v1044 = vld [vmem:[#allocation10 + $0x120] sm:$0xff]
        %v1045 = vld [vmem:[#allocation10 + $0x128] sm:$0xff]
        %v1046 = vld [vmem:[#allocation10 + $0x130] sm:$0xff]
        %v1047 = vld [vmem:[#allocation10 + $0x138] sm:$0xff]
        %v1048 = vld [vmem:[#allocation10 + $0x140] sm:$0xff]
        %v1049 = vld [vmem:[#allocation10 + $0x148] sm:$0xff]
        %v1050 = vld [vmem:[#allocation10 + $0x150] sm:$0xff]
        %v1051 = vld [vmem:[#allocation10 + $0x158] sm:$0xff]
        %v1052 = vld [vmem:[#allocation10 + $0x160] sm:$0xff]
        %v1053 = vld [vmem:[#allocation10 + $0x168] sm:$0xff]
        %v1054 = vld [vmem:[#allocation10 + $0x170] sm:$0xff]
        %v1055 = vld [vmem:[#allocation10 + $0x178] sm:$0xff]
        %v1056 = vld [vmem:[#allocation10 + $0x180] sm:$0xff]
        %v1057 = vld [vmem:[#allocation10 + $0x188] sm:$0xff]
        %v1058 = vld [vmem:[#allocation10 + $0x190] sm:$0xff]
        %v1059 = vld [vmem:[#allocation10 + $0x198] sm:$0xff]
        %v1060 = vld [vmem:[#allocation10 + $0x1a0] sm:$0xff]
        %v1061 = vld [vmem:[#allocation10 + $0x1a8] sm:$0xff]
        %v1062 = vld [vmem:[#allocation10 + $0x1b0] sm:$0xff]
        %v1063 = vld [vmem:[#allocation10 + $0x1b8] sm:$0xff]
        %v1064 = vld [vmem:[#allocation10 + $0x1c0] sm:$0xff]
        %v1065 = vld [vmem:[#allocation10 + $0x1c8] sm:$0xff]
        %v1066 = vld [vmem:[#allocation10 + $0x1d0] sm:$0xff]
        %v1067 = vld [vmem:[#allocation10 + $0x1d8] sm:$0xff]
        %v1068 = vld [vmem:[#allocation10 + $0x1e0] sm:$0xff]
        %v1069 = vld [vmem:[#allocation10 + $0x1e8] sm:$0xff]
        %v1070 = vld [vmem:[#allocation10 + $0x1f0] sm:$0xff]
        %v1071 = vld [vmem:[#allocation10 + $0x1f8] sm:$0xff]
        %v1136 = vunpack.c.l.b16 %v1008
        %v1137 = vunpack.c.h.b16 %v1008
        %v1138 = vunpack.c.l.b16 %v1009
        %v1139 = vunpack.c.h.b16 %v1009
        %v1140 = vunpack.c.l.b16 %v1010
        %v1141 = vunpack.c.h.b16 %v1010
        %v1142 = vunpack.c.l.b16 %v1011
        %v1143 = vunpack.c.h.b16 %v1011
        %v1144 = vunpack.c.l.b16 %v1012
        %v1145 = vunpack.c.h.b16 %v1012
        %v1146 = vunpack.c.l.b16 %v1013
        %v1147 = vunpack.c.h.b16 %v1013
        %v1148 = vunpack.c.l.b16 %v1014
        %v1149 = vunpack.c.h.b16 %v1014
        %v1150 = vunpack.c.l.b16 %v1015
        %v1151 = vunpack.c.h.b16 %v1015
        %v1152 = vunpack.c.l.b16 %v1016
        %v1153 = vunpack.c.h.b16 %v1016
        %v1154 = vunpack.c.l.b16 %v1017
        %v1155 = vunpack.c.h.b16 %v1017
        %v1156 = vunpack.c.l.b16 %v1018
        %v1157 = vunpack.c.h.b16 %v1018
        %v1158 = vunpack.c.l.b16 %v1019
        %v1159 = vunpack.c.h.b16 %v1019
        %v1160 = vunpack.c.l.b16 %v1020
        %v1161 = vunpack.c.h.b16 %v1020
        %v1162 = vunpack.c.l.b16 %v1021
        %v1163 = vunpack.c.h.b16 %v1021
        %v1164 = vunpack.c.l.b16 %v1022
        %v1165 = vunpack.c.h.b16 %v1022
        %v1166 = vunpack.c.l.b16 %v1023
        %v1167 = vunpack.c.h.b16 %v1023
        %v1168 = vunpack.c.l.b16 %v1024
        %v1169 = vunpack.c.h.b16 %v1024
        %v1170 = vunpack.c.l.b16 %v1025
        %v1171 = vunpack.c.h.b16 %v1025
        %v1172 = vunpack.c.l.b16 %v1026
        %v1173 = vunpack.c.h.b16 %v1026
        %v1174 = vunpack.c.l.b16 %v1027
        %v1175 = vunpack.c.h.b16 %v1027
        %v1176 = vunpack.c.l.b16 %v1028
        %v1177 = vunpack.c.h.b16 %v1028
        %v1178 = vunpack.c.l.b16 %v1029
        %v1179 = vunpack.c.h.b16 %v1029
        %v1180 = vunpack.c.l.b16 %v1030
        %v1181 = vunpack.c.h.b16 %v1030
        %v1182 = vunpack.c.l.b16 %v1031
        %v1183 = vunpack.c.h.b16 %v1031
        %v1184 = vunpack.c.l.b16 %v1032
        %v1185 = vunpack.c.h.b16 %v1032
        %v1186 = vunpack.c.l.b16 %v1033
        %v1187 = vunpack.c.h.b16 %v1033
        %v1188 = vunpack.c.l.b16 %v1034
        %v1189 = vunpack.c.h.b16 %v1034
        %v1190 = vunpack.c.l.b16 %v1035
        %v1191 = vunpack.c.h.b16 %v1035
        %v1192 = vunpack.c.l.b16 %v1036
        %v1193 = vunpack.c.h.b16 %v1036
        %v1194 = vunpack.c.l.b16 %v1037
        %v1195 = vunpack.c.h.b16 %v1037
        %v1196 = vunpack.c.l.b16 %v1038
        %v1197 = vunpack.c.h.b16 %v1038
        %v1198 = vunpack.c.l.b16 %v1039
        %v1199 = vunpack.c.h.b16 %v1039
        %v1200 = vunpack.c.l.b16 %v1040
        %v1201 = vunpack.c.h.b16 %v1040
        %v1202 = vunpack.c.l.b16 %v1041
        %v1203 = vunpack.c.h.b16 %v1041
        %v1204 = vunpack.c.l.b16 %v1042
        %v1205 = vunpack.c.h.b16 %v1042
        %v1206 = vunpack.c.l.b16 %v1043
        %v1207 = vunpack.c.h.b16 %v1043
        %v1208 = vunpack.c.l.b16 %v1044
        %v1209 = vunpack.c.h.b16 %v1044
        %v1210 = vunpack.c.l.b16 %v1045
        %v1211 = vunpack.c.h.b16 %v1045
        %v1212 = vunpack.c.l.b16 %v1046
        %v1213 = vunpack.c.h.b16 %v1046
        %v1214 = vunpack.c.l.b16 %v1047
        %v1215 = vunpack.c.h.b16 %v1047
        %v1216 = vunpack.c.l.b16 %v1048
        %v1217 = vunpack.c.h.b16 %v1048
        %v1218 = vunpack.c.l.b16 %v1049
        %v1219 = vunpack.c.h.b16 %v1049
        %v1220 = vunpack.c.l.b16 %v1050
        %v1221 = vunpack.c.h.b16 %v1050
        %v1222 = vunpack.c.l.b16 %v1051
        %v1223 = vunpack.c.h.b16 %v1051
        %v1224 = vunpack.c.l.b16 %v1052
        %v1225 = vunpack.c.h.b16 %v1052
        %v1226 = vunpack.c.l.b16 %v1053
        %v1227 = vunpack.c.h.b16 %v1053
        %v1228 = vunpack.c.l.b16 %v1054
        %v1229 = vunpack.c.h.b16 %v1054
        %v1230 = vunpack.c.l.b16 %v1055
        %v1231 = vunpack.c.h.b16 %v1055
        %v1232 = vunpack.c.l.b16 %v1056
        %v1233 = vunpack.c.h.b16 %v1056
        %v1234 = vunpack.c.l.b16 %v1057
        %v1235 = vunpack.c.h.b16 %v1057
        %v1236 = vunpack.c.l.b16 %v1058
        %v1237 = vunpack.c.h.b16 %v1058
        %v1238 = vunpack.c.l.b16 %v1059
        %v1239 = vunpack.c.h.b16 %v1059
        %v1240 = vunpack.c.l.b16 %v1060
        %v1241 = vunpack.c.h.b16 %v1060
        %v1242 = vunpack.c.l.b16 %v1061
        %v1243 = vunpack.c.h.b16 %v1061
        %v1244 = vunpack.c.l.b16 %v1062
        %v1245 = vunpack.c.h.b16 %v1062
        %v1246 = vunpack.c.l.b16 %v1063
        %v1247 = vunpack.c.h.b16 %v1063
        %v1248 = vunpack.c.l.b16 %v1064
        %v1249 = vunpack.c.h.b16 %v1064
        %v1250 = vunpack.c.l.b16 %v1065
        %v1251 = vunpack.c.h.b16 %v1065
        %v1252 = vunpack.c.l.b16 %v1066
        %v1253 = vunpack.c.h.b16 %v1066
        %v1254 = vunpack.c.l.b16 %v1067
        %v1255 = vunpack.c.h.b16 %v1067
        %v1256 = vunpack.c.l.b16 %v1068
        %v1257 = vunpack.c.h.b16 %v1068
        %v1258 = vunpack.c.l.b16 %v1069
        %v1259 = vunpack.c.h.b16 %v1069
        %v1260 = vunpack.c.l.b16 %v1070
        %v1261 = vunpack.c.h.b16 %v1070
        %v1262 = vunpack.c.l.b16 %v1071
        %v1263 = vunpack.c.h.b16 %v1071
        %v1264 = vpack.c.b16 %v1138, %v1136
        %v1265 = vpack.c.b16 %v1139, %v1137
        %v1266 = vpack.c.b16 %v1142, %v1140
        %v1267 = vpack.c.b16 %v1143, %v1141
        %v1268 = vpack.c.b16 %v1146, %v1144
        %v1269 = vpack.c.b16 %v1147, %v1145
        %v1270 = vpack.c.b16 %v1150, %v1148
        %v1271 = vpack.c.b16 %v1151, %v1149
        %v1272 = vpack.c.b16 %v1154, %v1152
        %v1273 = vpack.c.b16 %v1155, %v1153
        %v1274 = vpack.c.b16 %v1158, %v1156
        %v1275 = vpack.c.b16 %v1159, %v1157
        %v1276 = vpack.c.b16 %v1162, %v1160
        %v1277 = vpack.c.b16 %v1163, %v1161
        %v1278 = vpack.c.b16 %v1166, %v1164
        %v1279 = vpack.c.b16 %v1167, %v1165
        %v1280 = vpack.c.b16 %v1170, %v1168
        %v1281 = vpack.c.b16 %v1171, %v1169
        %v1282 = vpack.c.b16 %v1174, %v1172
        %v1283 = vpack.c.b16 %v1175, %v1173
        %v1284 = vpack.c.b16 %v1178, %v1176
        %v1285 = vpack.c.b16 %v1179, %v1177
        %v1286 = vpack.c.b16 %v1182, %v1180
        %v1287 = vpack.c.b16 %v1183, %v1181
        %v1288 = vpack.c.b16 %v1186, %v1184
        %v1289 = vpack.c.b16 %v1187, %v1185
        %v1290 = vpack.c.b16 %v1190, %v1188
        %v1291 = vpack.c.b16 %v1191, %v1189
        %v1292 = vpack.c.b16 %v1194, %v1192
        %v1293 = vpack.c.b16 %v1195, %v1193
        %v1294 = vpack.c.b16 %v1198, %v1196
        %v1295 = vpack.c.b16 %v1199, %v1197
        %v1296 = vpack.c.b16 %v1202, %v1200
        %v1297 = vpack.c.b16 %v1203, %v1201
        %v1298 = vpack.c.b16 %v1206, %v1204
        %v1299 = vpack.c.b16 %v1207, %v1205
        %v1300 = vpack.c.b16 %v1210, %v1208
        %v1301 = vpack.c.b16 %v1211, %v1209
        %v1302 = vpack.c.b16 %v1214, %v1212
        %v1303 = vpack.c.b16 %v1215, %v1213
        %v1304 = vpack.c.b16 %v1218, %v1216
        %v1305 = vpack.c.b16 %v1219, %v1217
        %v1306 = vpack.c.b16 %v1222, %v1220
        %v1307 = vpack.c.b16 %v1223, %v1221
        %v1308 = vpack.c.b16 %v1226, %v1224
        %v1309 = vpack.c.b16 %v1227, %v1225
        %v1310 = vpack.c.b16 %v1230, %v1228
        %v1311 = vpack.c.b16 %v1231, %v1229
        %v1312 = vpack.c.b16 %v1234, %v1232
        %v1313 = vpack.c.b16 %v1235, %v1233
        %v1314 = vpack.c.b16 %v1238, %v1236
        %v1315 = vpack.c.b16 %v1239, %v1237
        %v1316 = vpack.c.b16 %v1242, %v1240
        %v1317 = vpack.c.b16 %v1243, %v1241
        %v1318 = vpack.c.b16 %v1246, %v1244
        %v1319 = vpack.c.b16 %v1247, %v1245
        %v1320 = vpack.c.b16 %v1250, %v1248
        %v1321 = vpack.c.b16 %v1251, %v1249
        %v1322 = vpack.c.b16 %v1254, %v1252
        %v1323 = vpack.c.b16 %v1255, %v1253
        %v1324 = vpack.c.b16 %v1258, %v1256
        %v1325 = vpack.c.b16 %v1259, %v1257
        %v1326 = vpack.c.b16 %v1262, %v1260
        %v1327 = vpack.c.b16 %v1263, %v1261
        %1392 = vmatprep.subr.bf16.mxu0 %v1279
        %1393 = vmatpush1.bf16.xpose.msra.mxu0 %v1278
        %1394 = vmatprep.subr.bf16.mxu0 %v1277
        %1395 = vmatpush1.bf16.xpose.msra.mxu0 %v1276
        %1396 = vmatprep.subr.bf16.mxu0 %v1275
        %1397 = vmatpush1.bf16.xpose.msra.mxu0 %v1274
        %1398 = vmatprep.subr.bf16.mxu0 %v1273
        %1399 = vmatpush1.bf16.xpose.msra.mxu0 %v1272
        %1400 = vmatprep.subr.bf16.mxu0 %v1271
        %1401 = vmatpush1.bf16.xpose.msra.mxu0 %v1270
        %1402 = vmatprep.subr.bf16.mxu0 %v1269
        %1403 = vmatpush1.bf16.xpose.msra.mxu0 %v1268
        %1404 = vmatprep.subr.bf16.mxu0 %v1267
        %1405 = vmatpush1.bf16.xpose.msra.mxu0 %v1266
        %1406 = vmatprep.subr.bf16.mxu0 %v1265
        %1407 = vmatpush1.bf16.xpose.msra.mxu0 %v1264
        %1408 = vmatprep.subr.bf16.mxu0 %v1295
        %1409 = vmatpush2.bf16.xpose.msra.mxu0 %v1294
        %1410 = vmatprep.subr.bf16.mxu0 %v1293
        %1411 = vmatpush2.bf16.xpose.msra.mxu0 %v1292
        %1412 = vmatprep.subr.bf16.mxu0 %v1291
        %1413 = vmatpush2.bf16.xpose.msra.mxu0 %v1290
        %1414 = vmatprep.subr.bf16.mxu0 %v1289
        %1415 = vmatpush2.bf16.xpose.msra.mxu0 %v1288
        %1416 = vmatprep.subr.bf16.mxu0 %v1287
        %1417 = vmatpush2.bf16.xpose.msra.mxu0 %v1286
        %1418 = vmatprep.subr.bf16.mxu0 %v1285
        %1419 = vmatpush2.bf16.xpose.msra.mxu0 %v1284
        %1420 = vmatprep.subr.bf16.mxu0 %v1283
        %1421 = vmatpush2.bf16.xpose.msra.mxu0 %v1282
        %1422 = vmatprep.subr.bf16.mxu0 %v1281
        %1423 = vmatpush2.bf16.xpose.msra.mxu0 %v1280
        %1424 = vmatprep.mubr.bf16.mxu0 %v1007
        %1425 = vmatmul.mubr.bf16.gmra.mxu0 %v1006
        %v1426 = vpop.f32.mrf.mxu0
        %v1427 = vadd.f32 0.0, %v1426
        %v1428 = vpop.f32.mrf.mxu0
        %v1429 = vadd.f32 0.0, %v1428
        %v1430 = vpop.f32.mrf.mxu0
        %v1431 = vpop.f32.mrf.mxu0
        %1432 = vdwg.mxu0
        %1433 = vmatprep.subr.bf16.mxu0 %v1311
        %1434 = vmatpush1.bf16.xpose.msra.mxu0 %v1310
        %1435 = vmatprep.subr.bf16.mxu0 %v1309
        %1436 = vmatpush1.bf16.xpose.msra.mxu0 %v1308
        %1437 = vmatprep.subr.bf16.mxu0 %v1307
        %1438 = vmatpush1.bf16.xpose.msra.mxu0 %v1306
        %1439 = vmatprep.subr.bf16.mxu0 %v1305
        %1440 = vmatpush1.bf16.xpose.msra.mxu0 %v1304
        %1441 = vmatprep.subr.bf16.mxu0 %v1303
        %1442 = vmatpush1.bf16.xpose.msra.mxu0 %v1302
        %1443 = vmatprep.subr.bf16.mxu0 %v1301
        %1444 = vmatpush1.bf16.xpose.msra.mxu0 %v1300
        %1445 = vmatprep.subr.bf16.mxu0 %v1299
        %1446 = vmatpush1.bf16.xpose.msra.mxu0 %v1298
        %1447 = vmatprep.subr.bf16.mxu0 %v1297
        %1448 = vmatpush1.bf16.xpose.msra.mxu0 %v1296
        %1449 = vmatprep.subr.bf16.mxu0 %v1327
        %1450 = vmatpush2.bf16.xpose.msra.mxu0 %v1326
        %1451 = vmatprep.subr.bf16.mxu0 %v1325
        %1452 = vmatpush2.bf16.xpose.msra.mxu0 %v1324
        %1453 = vmatprep.subr.bf16.mxu0 %v1323
        %1454 = vmatpush2.bf16.xpose.msra.mxu0 %v1322
        %1455 = vmatprep.subr.bf16.mxu0 %v1321
        %1456 = vmatpush2.bf16.xpose.msra.mxu0 %v1320
        %1457 = vmatprep.subr.bf16.mxu0 %v1319
        %1458 = vmatpush2.bf16.xpose.msra.mxu0 %v1318
        %1459 = vmatprep.subr.bf16.mxu0 %v1317
        %1460 = vmatpush2.bf16.xpose.msra.mxu0 %v1316
        %1461 = vmatprep.subr.bf16.mxu0 %v1315
        %1462 = vmatpush2.bf16.xpose.msra.mxu0 %v1314
        %1463 = vmatprep.subr.bf16.mxu0 %v1313
        %1464 = vmatpush2.bf16.xpose.msra.mxu0 %v1312
        %1465 = vmatprep.mubr.bf16.mxu0 %v1007
        %1466 = vmatmul.mubr.bf16.gmra.mxu0 %v1006
        %v1467 = vpop.f32.mrf.mxu0
        %v1468 = vadd.f32 0.0, %v1467
        %v1469 = vpop.f32.mrf.mxu0
        %v1470 = vadd.f32 0.0, %v1469
        %v1471 = vpop.f32.mrf.mxu0
        %v1472 = vpop.f32.mrf.mxu0
        %1473 = vdwg.mxu0
        %v1474 = vpack.c.bf16 %v530, %v530
        %v1475 = vpack.c.bf16 %v531, %v531
        %v1476 = vld [vmem:[#allocation11] sm:$0xff]
        %v1477 = vld [vmem:[#allocation11 + $0x8] sm:$0xff]
        %v1478 = vld [vmem:[#allocation11 + $0x10] sm:$0xff]
        %v1479 = vld [vmem:[#allocation11 + $0x18] sm:$0xff]
        %v1480 = vld [vmem:[#allocation11 + $0x20] sm:$0xff]
        %v1481 = vld [vmem:[#allocation11 + $0x28] sm:$0xff]
        %v1482 = vld [vmem:[#allocation11 + $0x30] sm:$0xff]
        %v1483 = vld [vmem:[#allocation11 + $0x38] sm:$0xff]
        %v1484 = vld [vmem:[#allocation11 + $0x40] sm:$0xff]
        %v1485 = vld [vmem:[#allocation11 + $0x48] sm:$0xff]
        %v1486 = vld [vmem:[#allocation11 + $0x50] sm:$0xff]
        %v1487 = vld [vmem:[#allocation11 + $0x58] sm:$0xff]
        %v1488 = vld [vmem:[#allocation11 + $0x60] sm:$0xff]
        %v1489 = vld [vmem:[#allocation11 + $0x68] sm:$0xff]
        %v1490 = vld [vmem:[#allocation11 + $0x70] sm:$0xff]
        %v1491 = vld [vmem:[#allocation11 + $0x78] sm:$0xff]
        %v1492 = vld [vmem:[#allocation11 + $0x80] sm:$0xff]
        %v1493 = vld [vmem:[#allocation11 + $0x88] sm:$0xff]
        %v1494 = vld [vmem:[#allocation11 + $0x90] sm:$0xff]
        %v1495 = vld [vmem:[#allocation11 + $0x98] sm:$0xff]
        %v1496 = vld [vmem:[#allocation11 + $0xa0] sm:$0xff]
        %v1497 = vld [vmem:[#allocation11 + $0xa8] sm:$0xff]
        %v1498 = vld [vmem:[#allocation11 + $0xb0] sm:$0xff]
        %v1499 = vld [vmem:[#allocation11 + $0xb8] sm:$0xff]
        %v1500 = vld [vmem:[#allocation11 + $0xc0] sm:$0xff]
        %v1501 = vld [vmem:[#allocation11 + $0xc8] sm:$0xff]
        %v1502 = vld [vmem:[#allocation11 + $0xd0] sm:$0xff]
        %v1503 = vld [vmem:[#allocation11 + $0xd8] sm:$0xff]
        %v1504 = vld [vmem:[#allocation11 + $0xe0] sm:$0xff]
        %v1505 = vld [vmem:[#allocation11 + $0xe8] sm:$0xff]
        %v1506 = vld [vmem:[#allocation11 + $0xf0] sm:$0xff]
        %v1507 = vld [vmem:[#allocation11 + $0xf8] sm:$0xff]
        %v1508 = vld [vmem:[#allocation11 + $0x100] sm:$0xff]
        %v1509 = vld [vmem:[#allocation11 + $0x108] sm:$0xff]
        %v1510 = vld [vmem:[#allocation11 + $0x110] sm:$0xff]
        %v1511 = vld [vmem:[#allocation11 + $0x118] sm:$0xff]
        %v1512 = vld [vmem:[#allocation11 + $0x120] sm:$0xff]
        %v1513 = vld [vmem:[#allocation11 + $0x128] sm:$0xff]
        %v1514 = vld [vmem:[#allocation11 + $0x130] sm:$0xff]
        %v1515 = vld [vmem:[#allocation11 + $0x138] sm:$0xff]
        %v1516 = vld [vmem:[#allocation11 + $0x140] sm:$0xff]
        %v1517 = vld [vmem:[#allocation11 + $0x148] sm:$0xff]
        %v1518 = vld [vmem:[#allocation11 + $0x150] sm:$0xff]
        %v1519 = vld [vmem:[#allocation11 + $0x158] sm:$0xff]
        %v1520 = vld [vmem:[#allocation11 + $0x160] sm:$0xff]
        %v1521 = vld [vmem:[#allocation11 + $0x168] sm:$0xff]
        %v1522 = vld [vmem:[#allocation11 + $0x170] sm:$0xff]
        %v1523 = vld [vmem:[#allocation11 + $0x178] sm:$0xff]
        %v1524 = vld [vmem:[#allocation11 + $0x180] sm:$0xff]
        %v1525 = vld [vmem:[#allocation11 + $0x188] sm:$0xff]
        %v1526 = vld [vmem:[#allocation11 + $0x190] sm:$0xff]
        %v1527 = vld [vmem:[#allocation11 + $0x198] sm:$0xff]
        %v1528 = vld [vmem:[#allocation11 + $0x1a0] sm:$0xff]
        %v1529 = vld [vmem:[#allocation11 + $0x1a8] sm:$0xff]
        %v1530 = vld [vmem:[#allocation11 + $0x1b0] sm:$0xff]
        %v1531 = vld [vmem:[#allocation11 + $0x1b8] sm:$0xff]
        %v1532 = vld [vmem:[#allocation11 + $0x1c0] sm:$0xff]
        %v1533 = vld [vmem:[#allocation11 + $0x1c8] sm:$0xff]
        %v1534 = vld [vmem:[#allocation11 + $0x1d0] sm:$0xff]
        %v1535 = vld [vmem:[#allocation11 + $0x1d8] sm:$0xff]
        %v1536 = vld [vmem:[#allocation11 + $0x1e0] sm:$0xff]
        %v1537 = vld [vmem:[#allocation11 + $0x1e8] sm:$0xff]
        %v1538 = vld [vmem:[#allocation11 + $0x1f0] sm:$0xff]
        %v1539 = vld [vmem:[#allocation11 + $0x1f8] sm:$0xff]
        %v1604 = vunpack.c.l.b16 %v1476
        %v1605 = vunpack.c.h.b16 %v1476
        %v1606 = vunpack.c.l.b16 %v1477
        %v1607 = vunpack.c.h.b16 %v1477
        %v1608 = vunpack.c.l.b16 %v1478
        %v1609 = vunpack.c.h.b16 %v1478
        %v1610 = vunpack.c.l.b16 %v1479
        %v1611 = vunpack.c.h.b16 %v1479
        %v1612 = vunpack.c.l.b16 %v1480
        %v1613 = vunpack.c.h.b16 %v1480
        %v1614 = vunpack.c.l.b16 %v1481
        %v1615 = vunpack.c.h.b16 %v1481
        %v1616 = vunpack.c.l.b16 %v1482
        %v1617 = vunpack.c.h.b16 %v1482
        %v1618 = vunpack.c.l.b16 %v1483
        %v1619 = vunpack.c.h.b16 %v1483
        %v1620 = vunpack.c.l.b16 %v1484
        %v1621 = vunpack.c.h.b16 %v1484
        %v1622 = vunpack.c.l.b16 %v1485
        %v1623 = vunpack.c.h.b16 %v1485
        %v1624 = vunpack.c.l.b16 %v1486
        %v1625 = vunpack.c.h.b16 %v1486
        %v1626 = vunpack.c.l.b16 %v1487
        %v1627 = vunpack.c.h.b16 %v1487
        %v1628 = vunpack.c.l.b16 %v1488
        %v1629 = vunpack.c.h.b16 %v1488
        %v1630 = vunpack.c.l.b16 %v1489
        %v1631 = vunpack.c.h.b16 %v1489
        %v1632 = vunpack.c.l.b16 %v1490
        %v1633 = vunpack.c.h.b16 %v1490
        %v1634 = vunpack.c.l.b16 %v1491
        %v1635 = vunpack.c.h.b16 %v1491
        %v1636 = vunpack.c.l.b16 %v1492
        %v1637 = vunpack.c.h.b16 %v1492
        %v1638 = vunpack.c.l.b16 %v1493
        %v1639 = vunpack.c.h.b16 %v1493
        %v1640 = vunpack.c.l.b16 %v1494
        %v1641 = vunpack.c.h.b16 %v1494
        %v1642 = vunpack.c.l.b16 %v1495
        %v1643 = vunpack.c.h.b16 %v1495
        %v1644 = vunpack.c.l.b16 %v1496
        %v1645 = vunpack.c.h.b16 %v1496
        %v1646 = vunpack.c.l.b16 %v1497
        %v1647 = vunpack.c.h.b16 %v1497
        %v1648 = vunpack.c.l.b16 %v1498
        %v1649 = vunpack.c.h.b16 %v1498
        %v1650 = vunpack.c.l.b16 %v1499
        %v1651 = vunpack.c.h.b16 %v1499
        %v1652 = vunpack.c.l.b16 %v1500
        %v1653 = vunpack.c.h.b16 %v1500
        %v1654 = vunpack.c.l.b16 %v1501
        %v1655 = vunpack.c.h.b16 %v1501
        %v1656 = vunpack.c.l.b16 %v1502
        %v1657 = vunpack.c.h.b16 %v1502
        %v1658 = vunpack.c.l.b16 %v1503
        %v1659 = vunpack.c.h.b16 %v1503
        %v1660 = vunpack.c.l.b16 %v1504
        %v1661 = vunpack.c.h.b16 %v1504
        %v1662 = vunpack.c.l.b16 %v1505
        %v1663 = vunpack.c.h.b16 %v1505
        %v1664 = vunpack.c.l.b16 %v1506
        %v1665 = vunpack.c.h.b16 %v1506
        %v1666 = vunpack.c.l.b16 %v1507
        %v1667 = vunpack.c.h.b16 %v1507
        %v1668 = vunpack.c.l.b16 %v1508
        %v1669 = vunpack.c.h.b16 %v1508
        %v1670 = vunpack.c.l.b16 %v1509
        %v1671 = vunpack.c.h.b16 %v1509
        %v1672 = vunpack.c.l.b16 %v1510
        %v1673 = vunpack.c.h.b16 %v1510
        %v1674 = vunpack.c.l.b16 %v1511
        %v1675 = vunpack.c.h.b16 %v1511
        %v1676 = vunpack.c.l.b16 %v1512
        %v1677 = vunpack.c.h.b16 %v1512
        %v1678 = vunpack.c.l.b16 %v1513
        %v1679 = vunpack.c.h.b16 %v1513
        %v1680 = vunpack.c.l.b16 %v1514
        %v1681 = vunpack.c.h.b16 %v1514
        %v1682 = vunpack.c.l.b16 %v1515
        %v1683 = vunpack.c.h.b16 %v1515
        %v1684 = vunpack.c.l.b16 %v1516
        %v1685 = vunpack.c.h.b16 %v1516
        %v1686 = vunpack.c.l.b16 %v1517
        %v1687 = vunpack.c.h.b16 %v1517
        %v1688 = vunpack.c.l.b16 %v1518
        %v1689 = vunpack.c.h.b16 %v1518
        %v1690 = vunpack.c.l.b16 %v1519
        %v1691 = vunpack.c.h.b16 %v1519
        %v1692 = vunpack.c.l.b16 %v1520
        %v1693 = vunpack.c.h.b16 %v1520
        %v1694 = vunpack.c.l.b16 %v1521
        %v1695 = vunpack.c.h.b16 %v1521
        %v1696 = vunpack.c.l.b16 %v1522
        %v1697 = vunpack.c.h.b16 %v1522
        %v1698 = vunpack.c.l.b16 %v1523
        %v1699 = vunpack.c.h.b16 %v1523
        %v1700 = vunpack.c.l.b16 %v1524
        %v1701 = vunpack.c.h.b16 %v1524
        %v1702 = vunpack.c.l.b16 %v1525
        %v1703 = vunpack.c.h.b16 %v1525
        %v1704 = vunpack.c.l.b16 %v1526
        %v1705 = vunpack.c.h.b16 %v1526
        %v1706 = vunpack.c.l.b16 %v1527
        %v1707 = vunpack.c.h.b16 %v1527
        %v1708 = vunpack.c.l.b16 %v1528
        %v1709 = vunpack.c.h.b16 %v1528
        %v1710 = vunpack.c.l.b16 %v1529
        %v1711 = vunpack.c.h.b16 %v1529
        %v1712 = vunpack.c.l.b16 %v1530
        %v1713 = vunpack.c.h.b16 %v1530
        %v1714 = vunpack.c.l.b16 %v1531
        %v1715 = vunpack.c.h.b16 %v1531
        %v1716 = vunpack.c.l.b16 %v1532
        %v1717 = vunpack.c.h.b16 %v1532
        %v1718 = vunpack.c.l.b16 %v1533
        %v1719 = vunpack.c.h.b16 %v1533
        %v1720 = vunpack.c.l.b16 %v1534
        %v1721 = vunpack.c.h.b16 %v1534
        %v1722 = vunpack.c.l.b16 %v1535
        %v1723 = vunpack.c.h.b16 %v1535
        %v1724 = vunpack.c.l.b16 %v1536
        %v1725 = vunpack.c.h.b16 %v1536
        %v1726 = vunpack.c.l.b16 %v1537
        %v1727 = vunpack.c.h.b16 %v1537
        %v1728 = vunpack.c.l.b16 %v1538
        %v1729 = vunpack.c.h.b16 %v1538
        %v1730 = vunpack.c.l.b16 %v1539
        %v1731 = vunpack.c.h.b16 %v1539
        %v1732 = vpack.c.b16 %v1606, %v1604
        %v1733 = vpack.c.b16 %v1607, %v1605
        %v1734 = vpack.c.b16 %v1610, %v1608
        %v1735 = vpack.c.b16 %v1611, %v1609
        %v1736 = vpack.c.b16 %v1614, %v1612
        %v1737 = vpack.c.b16 %v1615, %v1613
        %v1738 = vpack.c.b16 %v1618, %v1616
        %v1739 = vpack.c.b16 %v1619, %v1617
        %v1740 = vpack.c.b16 %v1622, %v1620
        %v1741 = vpack.c.b16 %v1623, %v1621
        %v1742 = vpack.c.b16 %v1626, %v1624
        %v1743 = vpack.c.b16 %v1627, %v1625
        %v1744 = vpack.c.b16 %v1630, %v1628
        %v1745 = vpack.c.b16 %v1631, %v1629
        %v1746 = vpack.c.b16 %v1634, %v1632
        %v1747 = vpack.c.b16 %v1635, %v1633
        %v1748 = vpack.c.b16 %v1638, %v1636
        %v1749 = vpack.c.b16 %v1639, %v1637
        %v1750 = vpack.c.b16 %v1642, %v1640
        %v1751 = vpack.c.b16 %v1643, %v1641
        %v1752 = vpack.c.b16 %v1646, %v1644
        %v1753 = vpack.c.b16 %v1647, %v1645
        %v1754 = vpack.c.b16 %v1650, %v1648
        %v1755 = vpack.c.b16 %v1651, %v1649
        %v1756 = vpack.c.b16 %v1654, %v1652
        %v1757 = vpack.c.b16 %v1655, %v1653
        %v1758 = vpack.c.b16 %v1658, %v1656
        %v1759 = vpack.c.b16 %v1659, %v1657
        %v1760 = vpack.c.b16 %v1662, %v1660
        %v1761 = vpack.c.b16 %v1663, %v1661
        %v1762 = vpack.c.b16 %v1666, %v1664
        %v1763 = vpack.c.b16 %v1667, %v1665
        %v1764 = vpack.c.b16 %v1670, %v1668
        %v1765 = vpack.c.b16 %v1671, %v1669
        %v1766 = vpack.c.b16 %v1674, %v1672
        %v1767 = vpack.c.b16 %v1675, %v1673
        %v1768 = vpack.c.b16 %v1678, %v1676
        %v1769 = vpack.c.b16 %v1679, %v1677
        %v1770 = vpack.c.b16 %v1682, %v1680
        %v1771 = vpack.c.b16 %v1683, %v1681
        %v1772 = vpack.c.b16 %v1686, %v1684
        %v1773 = vpack.c.b16 %v1687, %v1685
        %v1774 = vpack.c.b16 %v1690, %v1688
        %v1775 = vpack.c.b16 %v1691, %v1689
        %v1776 = vpack.c.b16 %v1694, %v1692
        %v1777 = vpack.c.b16 %v1695, %v1693
        %v1778 = vpack.c.b16 %v1698, %v1696
        %v1779 = vpack.c.b16 %v1699, %v1697
        %v1780 = vpack.c.b16 %v1702, %v1700
        %v1781 = vpack.c.b16 %v1703, %v1701
        %v1782 = vpack.c.b16 %v1706, %v1704
        %v1783 = vpack.c.b16 %v1707, %v1705
        %v1784 = vpack.c.b16 %v1710, %v1708
        %v1785 = vpack.c.b16 %v1711, %v1709
        %v1786 = vpack.c.b16 %v1714, %v1712
        %v1787 = vpack.c.b16 %v1715, %v1713
        %v1788 = vpack.c.b16 %v1718, %v1716
        %v1789 = vpack.c.b16 %v1719, %v1717
        %v1790 = vpack.c.b16 %v1722, %v1720
        %v1791 = vpack.c.b16 %v1723, %v1721
        %v1792 = vpack.c.b16 %v1726, %v1724
        %v1793 = vpack.c.b16 %v1727, %v1725
        %v1794 = vpack.c.b16 %v1730, %v1728
        %v1795 = vpack.c.b16 %v1731, %v1729
        %1860 = vmatprep.subr.bf16.mxu0 %v1747
        %1861 = vmatpush1.bf16.xpose.msra.mxu0 %v1746
        %1862 = vmatprep.subr.bf16.mxu0 %v1745
        %1863 = vmatpush1.bf16.xpose.msra.mxu0 %v1744
        %1864 = vmatprep.subr.bf16.mxu0 %v1743
        %1865 = vmatpush1.bf16.xpose.msra.mxu0 %v1742
        %1866 = vmatprep.subr.bf16.mxu0 %v1741
        %1867 = vmatpush1.bf16.xpose.msra.mxu0 %v1740
        %1868 = vmatprep.subr.bf16.mxu0 %v1739
        %1869 = vmatpush1.bf16.xpose.msra.mxu0 %v1738
        %1870 = vmatprep.subr.bf16.mxu0 %v1737
        %1871 = vmatpush1.bf16.xpose.msra.mxu0 %v1736
        %1872 = vmatprep.subr.bf16.mxu0 %v1735
        %1873 = vmatpush1.bf16.xpose.msra.mxu0 %v1734
        %1874 = vmatprep.subr.bf16.mxu0 %v1733
        %1875 = vmatpush1.bf16.xpose.msra.mxu0 %v1732
        %1876 = vmatprep.subr.bf16.mxu0 %v1763
        %1877 = vmatpush2.bf16.xpose.msra.mxu0 %v1762
        %1878 = vmatprep.subr.bf16.mxu0 %v1761
        %1879 = vmatpush2.bf16.xpose.msra.mxu0 %v1760
        %1880 = vmatprep.subr.bf16.mxu0 %v1759
        %1881 = vmatpush2.bf16.xpose.msra.mxu0 %v1758
        %1882 = vmatprep.subr.bf16.mxu0 %v1757
        %1883 = vmatpush2.bf16.xpose.msra.mxu0 %v1756
        %1884 = vmatprep.subr.bf16.mxu0 %v1755
        %1885 = vmatpush2.bf16.xpose.msra.mxu0 %v1754
        %1886 = vmatprep.subr.bf16.mxu0 %v1753
        %1887 = vmatpush2.bf16.xpose.msra.mxu0 %v1752
        %1888 = vmatprep.subr.bf16.mxu0 %v1751
        %1889 = vmatpush2.bf16.xpose.msra.mxu0 %v1750
        %1890 = vmatprep.subr.bf16.mxu0 %v1749
        %1891 = vmatpush2.bf16.xpose.msra.mxu0 %v1748
        %1892 = vmatprep.mubr.bf16.mxu0 %v1475
        %1893 = vmatmul.mubr.bf16.gmra.mxu0 %v1474
        %v1894 = vpop.f32.mrf.mxu0
        %v1895 = vadd.f32 0.0, %v1894
        %v1896 = vpop.f32.mrf.mxu0
        %v1897 = vadd.f32 0.0, %v1896
        %v1898 = vpop.f32.mrf.mxu0
        %v1899 = vpop.f32.mrf.mxu0
        %1900 = vdwg.mxu0
        %1901 = vmatprep.subr.bf16.mxu0 %v1779
        %1902 = vmatpush1.bf16.xpose.msra.mxu0 %v1778
        %1903 = vmatprep.subr.bf16.mxu0 %v1777
        %1904 = vmatpush1.bf16.xpose.msra.mxu0 %v1776
        %1905 = vmatprep.subr.bf16.mxu0 %v1775
        %1906 = vmatpush1.bf16.xpose.msra.mxu0 %v1774
        %1907 = vmatprep.subr.bf16.mxu0 %v1773
        %1908 = vmatpush1.bf16.xpose.msra.mxu0 %v1772
        %1909 = vmatprep.subr.bf16.mxu0 %v1771
        %1910 = vmatpush1.bf16.xpose.msra.mxu0 %v1770
        %1911 = vmatprep.subr.bf16.mxu0 %v1769
        %1912 = vmatpush1.bf16.xpose.msra.mxu0 %v1768
        %1913 = vmatprep.subr.bf16.mxu0 %v1767
        %1914 = vmatpush1.bf16.xpose.msra.mxu0 %v1766
        %1915 = vmatprep.subr.bf16.mxu0 %v1765
        %1916 = vmatpush1.bf16.xpose.msra.mxu0 %v1764
        %1917 = vmatprep.subr.bf16.mxu0 %v1795
        %1918 = vmatpush2.bf16.xpose.msra.mxu0 %v1794
        %1919 = vmatprep.subr.bf16.mxu0 %v1793
        %1920 = vmatpush2.bf16.xpose.msra.mxu0 %v1792
        %1921 = vmatprep.subr.bf16.mxu0 %v1791
        %1922 = vmatpush2.bf16.xpose.msra.mxu0 %v1790
        %1923 = vmatprep.subr.bf16.mxu0 %v1789
        %1924 = vmatpush2.bf16.xpose.msra.mxu0 %v1788
        %1925 = vmatprep.subr.bf16.mxu0 %v1787
        %1926 = vmatpush2.bf16.xpose.msra.mxu0 %v1786
        %1927 = vmatprep.subr.bf16.mxu0 %v1785
        %1928 = vmatpush2.bf16.xpose.msra.mxu0 %v1784
        %1929 = vmatprep.subr.bf16.mxu0 %v1783
        %1930 = vmatpush2.bf16.xpose.msra.mxu0 %v1782
        %1931 = vmatprep.subr.bf16.mxu0 %v1781
        %1932 = vmatpush2.bf16.xpose.msra.mxu0 %v1780
        %1933 = vmatprep.mubr.bf16.mxu0 %v1475
        %1934 = vmatmul.mubr.bf16.gmra.mxu0 %v1474
        %v1935 = vpop.f32.mrf.mxu0
        %v1936 = vadd.f32 0.0, %v1935
        %v1937 = vpop.f32.mrf.mxu0
        %v1938 = vadd.f32 0.0, %v1937
        %v1939 = vpop.f32.mrf.mxu0
        %v1940 = vpop.f32.mrf.mxu0
        %1941 = vdwg.mxu0
        %vm1942 = vcmask 523264
        %v1944 = vsel %vm1942, %v1002, 0
        %v1947 = vsel %vm1942, %v1427, 0
        %1949 = vmatprep.subr.mxu0 0.0
        %1950 = vmatpush1.xpose.msra.mxu0 0.0
        %1951 = vmatprep.subr.mxu0 0.0
        %1952 = vmatpush1.xpose.msra.mxu0 0.0
        %1953 = vmatprep.subr.mxu0 0.0
        %1954 = vmatpush1.xpose.msra.mxu0 0.0
        %1955 = vmatprep.subr.mxu0 0.0
        %1956 = vmatpush1.xpose.msra.mxu0 0.0
        %1957 = vmatprep.subr.mxu0 0.0
        %1958 = vmatpush1.xpose.msra.mxu0 0.0
        %1959 = vmatprep.subr.mxu0 0.0
        %1960 = vmatpush1.xpose.msra.mxu0 0.0
        %1961 = vmatprep.subr.mxu0 0.0
        %1962 = vmatpush1.xpose.msra.mxu0 0.0
        %1963 = vmatprep.subr.mxu0 0.0
        %1964 = vmatpush1.xpose.msra.mxu0 0.0
        %1965 = vmatprep.subr.mxu0 0.0
        %1966 = vmatpush1.xpose.msra.mxu0 0.0
        %1967 = vmatprep.subr.mxu0 0.0
        %1968 = vmatpush1.xpose.msra.mxu0 0.0
        %1969 = vmatprep.subr.mxu0 0.0
        %1970 = vmatpush1.xpose.msra.mxu0 0.0
        %1971 = vmatprep.subr.mxu0 0.0
        %1972 = vmatpush1.xpose.msra.mxu0 0.0
        %1973 = vmatprep.subr.mxu0 0.0
        %1974 = vmatpush1.xpose.msra.mxu0 0.0
        %1975 = vmatprep.subr.mxu0 0.0
        %1976 = vmatpush1.xpose.msra.mxu0 0.0
        %1977 = vmatprep.subr.mxu0 0.0
        %1978 = vmatpush1.xpose.msra.mxu0 0.0
        %1979 = vmatprep.subr.mxu0 0.0
        %1980 = vmatpush1.xpose.msra.mxu0 %v1947
        %1981 = vmatprep.subr.mxu0 0.0
        %1982 = vmatpush2.xpose.msra.mxu0 0.0
        %1983 = vmatprep.subr.mxu0 0.0
        %1984 = vmatpush2.xpose.msra.mxu0 0.0
        %1985 = vmatprep.subr.mxu0 0.0
        %1986 = vmatpush2.xpose.msra.mxu0 0.0
        %1987 = vmatprep.subr.mxu0 0.0
        %1988 = vmatpush2.xpose.msra.mxu0 0.0
        %1989 = vmatprep.subr.mxu0 0.0
        %1990 = vmatpush2.xpose.msra.mxu0 0.0
        %1991 = vmatprep.subr.mxu0 0.0
        %1992 = vmatpush2.xpose.msra.mxu0 0.0
        %1993 = vmatprep.subr.mxu0 0.0
        %1994 = vmatpush2.xpose.msra.mxu0 0.0
        %1995 = vmatprep.subr.mxu0 0.0
        %1996 = vmatpush2.xpose.msra.mxu0 0.0
        %1997 = vmatprep.subr.mxu0 0.0
        %1998 = vmatpush2.xpose.msra.mxu0 0.0
        %1999 = vmatprep.subr.mxu0 0.0
        %2000 = vmatpush2.xpose.msra.mxu0 0.0
        %2001 = vmatprep.subr.mxu0 0.0
        %2002 = vmatpush2.xpose.msra.mxu0 0.0
        %2003 = vmatprep.subr.mxu0 0.0
        %2004 = vmatpush2.xpose.msra.mxu0 0.0
        %2005 = vmatprep.subr.mxu0 0.0
        %2006 = vmatpush2.xpose.msra.mxu0 0.0
        %2007 = vmatprep.subr.mxu0 0.0
        %2008 = vmatpush2.xpose.msra.mxu0 0.0
        %2009 = vmatprep.subr.mxu0 0.0
        %2010 = vmatpush2.xpose.msra.mxu0 0.0
        %2011 = vmatprep.subr.mxu0 0.0
        %2012 = vmatpush2.xpose.msra.mxu0 0.0
        %2013 = vmatprep.mubr.f32.mxu0 0.0
        %2014 = vmatmul.mubr.f32.gmra.mxu0 %v1944
        %v2015 = vpop.f32.mrf.mxu0
        %v2016 = vadd.f32 0.0, %v2015
        %v2017 = vpop.f32.mrf.mxu0
        %2018 = vdwg.mxu0
        %v2019 = vsel %vm533, 16843009, 0
        %v2020 = vunpack.c.0.s8 %v2019
        %vm2021 = vcmp.ne.s32.totalorder %v2020, 0
        %v2022 = vsel %vm2021, -1e+09, %v2016
        %vm2023 = vcmask 64512
        %v2024 = vsel %vm2023, %v2022, -inf
        %2025 = vmax.xlane.f32.xlu0 %v2024
        %v2026 = vpop.xlane.xlu0 %2025
        %v2027 = vsub.f32 %v2022, %v2026
        %v2028 = vmul.f32 %v2027, 1.442695
        %v2029 = vpow.pop %v2028
        %v2030 = vsel %vm2023, %v2029, 0.0
        %2031 = vadd.xlane.f32.xlu0 %v2030
        %v2032 = vpop.xlane.xlu0 %2031
        %v2033 = vrcp.pop %v2032
        %v2034 = vmul.f32 %v2029, %v2033
        %v2035 = vsel %vm2021, 0.0, %v2034
        %v2037 = vsel %vm2023, %v2035, 0
        %2039 = vmatprep.subr.mxu0 0.0
        %2040 = vmatpush1.msra.mxu0 0.0
        %2041 = vmatprep.subr.mxu0 0.0
        %2042 = vmatpush1.msra.mxu0 0.0
        %2043 = vmatprep.subr.mxu0 0.0
        %2044 = vmatpush1.msra.mxu0 0.0
        %2045 = vmatprep.subr.mxu0 0.0
        %2046 = vmatpush1.msra.mxu0 0.0
        %2047 = vmatprep.subr.mxu0 0.0
        %2048 = vmatpush1.msra.mxu0 0.0
        %2049 = vmatprep.subr.mxu0 0.0
        %2050 = vmatpush1.msra.mxu0 0.0
        %2051 = vmatprep.subr.mxu0 0.0
        %2052 = vmatpush1.msra.mxu0 0.0
        %2053 = vmatprep.subr.mxu0 0.0
        %2054 = vmatpush1.msra.mxu0 0.0
        %2055 = vmatprep.subr.mxu0 0.0
        %2056 = vmatpush1.msra.mxu0 0.0
        %2057 = vmatprep.subr.mxu0 0.0
        %2058 = vmatpush1.msra.mxu0 0.0
        %2059 = vmatprep.subr.mxu0 0.0
        %2060 = vmatpush1.msra.mxu0 0.0
        %2061 = vmatprep.subr.mxu0 0.0
        %2062 = vmatpush1.msra.mxu0 0.0
        %2063 = vmatprep.subr.mxu0 0.0
        %2064 = vmatpush1.msra.mxu0 0.0
        %2065 = vmatprep.subr.mxu0 0.0
        %2066 = vmatpush1.msra.mxu0 0.0
        %2067 = vmatprep.subr.mxu0 0.0
        %2068 = vmatpush1.msra.mxu0 0.0
        %2069 = vmatprep.subr.mxu0 0.0
        %2070 = vmatpush1.msra.mxu0 %v1895
        %2071 = vmatprep.subr.mxu0 0.0
        %2072 = vmatpush2.msra.mxu0 0.0
        %2073 = vmatprep.subr.mxu0 0.0
        %2074 = vmatpush2.msra.mxu0 0.0
        %2075 = vmatprep.subr.mxu0 0.0
        %2076 = vmatpush2.msra.mxu0 0.0
        %2077 = vmatprep.subr.mxu0 0.0
        %2078 = vmatpush2.msra.mxu0 0.0
        %2079 = vmatprep.subr.mxu0 0.0
        %2080 = vmatpush2.msra.mxu0 0.0
        %2081 = vmatprep.subr.mxu0 0.0
        %2082 = vmatpush2.msra.mxu0 0.0
        %2083 = vmatprep.subr.mxu0 0.0
        %2084 = vmatpush2.msra.mxu0 0.0
        %2085 = vmatprep.subr.mxu0 0.0
        %2086 = vmatpush2.msra.mxu0 0.0
        %2087 = vmatprep.subr.mxu0 0.0
        %2088 = vmatpush2.msra.mxu0 0.0
        %2089 = vmatprep.subr.mxu0 0.0
        %2090 = vmatpush2.msra.mxu0 0.0
        %2091 = vmatprep.subr.mxu0 0.0
        %2092 = vmatpush2.msra.mxu0 0.0
        %2093 = vmatprep.subr.mxu0 0.0
        %2094 = vmatpush2.msra.mxu0 0.0
        %2095 = vmatprep.subr.mxu0 0.0
        %2096 = vmatpush2.msra.mxu0 0.0
        %2097 = vmatprep.subr.mxu0 0.0
        %2098 = vmatpush2.msra.mxu0 0.0
        %2099 = vmatprep.subr.mxu0 0.0
        %2100 = vmatpush2.msra.mxu0 0.0
        %2101 = vmatprep.subr.mxu0 0.0
        %2102 = vmatpush2.msra.mxu0 0.0
        %2103 = vmatprep.mubr.f32.mxu0 0.0
        %2104 = vmatmul.mubr.f32.gmra.mxu0 %v2037
        %v2105 = vpop.f32.mrf.mxu0
        %v2106 = vadd.f32 0.0, %v2105
        %v2107 = vpop.f32.mrf.mxu0
        %2108 = vdwg.mxu0
        %2109 = vrot.lane.b32.xlu0 %v1002, 64
        %v2110 = vpop.permute.xlu0 %2109
        %2111 = vrot.lane.b32.xlu0 %v1427, 64
        %v2112 = vpop.permute.xlu0 %2111
        %v2113 = vsel %vm1942, %v2110, 0
        %v2115 = vsel %vm1942, %v2112, 0
        %2117 = vmatprep.subr.mxu0 0.0
        %2118 = vmatpush1.xpose.msra.mxu0 0.0
        %2119 = vmatprep.subr.mxu0 0.0
        %2120 = vmatpush1.xpose.msra.mxu0 0.0
        %2121 = vmatprep.subr.mxu0 0.0
        %2122 = vmatpush1.xpose.msra.mxu0 0.0
        %2123 = vmatprep.subr.mxu0 0.0
        %2124 = vmatpush1.xpose.msra.mxu0 0.0
        %2125 = vmatprep.subr.mxu0 0.0
        %2126 = vmatpush1.xpose.msra.mxu0 0.0
        %2127 = vmatprep.subr.mxu0 0.0
        %2128 = vmatpush1.xpose.msra.mxu0 0.0
        %2129 = vmatprep.subr.mxu0 0.0
        %2130 = vmatpush1.xpose.msra.mxu0 0.0
        %2131 = vmatprep.subr.mxu0 0.0
        %2132 = vmatpush1.xpose.msra.mxu0 0.0
        %2133 = vmatprep.subr.mxu0 0.0
        %2134 = vmatpush1.xpose.msra.mxu0 0.0
        %2135 = vmatprep.subr.mxu0 0.0
        %2136 = vmatpush1.xpose.msra.mxu0 0.0
        %2137 = vmatprep.subr.mxu0 0.0
        %2138 = vmatpush1.xpose.msra.mxu0 0.0
        %2139 = vmatprep.subr.mxu0 0.0
        %2140 = vmatpush1.xpose.msra.mxu0 0.0
        %2141 = vmatprep.subr.mxu0 0.0
        %2142 = vmatpush1.xpose.msra.mxu0 0.0
        %2143 = vmatprep.subr.mxu0 0.0
        %2144 = vmatpush1.xpose.msra.mxu0 0.0
        %2145 = vmatprep.subr.mxu0 0.0
        %2146 = vmatpush1.xpose.msra.mxu0 0.0
        %2147 = vmatprep.subr.mxu0 0.0
        %2148 = vmatpush1.xpose.msra.mxu0 %v2115
        %2149 = vmatprep.subr.mxu0 0.0
        %2150 = vmatpush2.xpose.msra.mxu0 0.0
        %2151 = vmatprep.subr.mxu0 0.0
        %2152 = vmatpush2.xpose.msra.mxu0 0.0
        %2153 = vmatprep.subr.mxu0 0.0
        %2154 = vmatpush2.xpose.msra.mxu0 0.0
        %2155 = vmatprep.subr.mxu0 0.0
        %2156 = vmatpush2.xpose.msra.mxu0 0.0
        %2157 = vmatprep.subr.mxu0 0.0
        %2158 = vmatpush2.xpose.msra.mxu0 0.0
        %2159 = vmatprep.subr.mxu0 0.0
        %2160 = vmatpush2.xpose.msra.mxu0 0.0
        %2161 = vmatprep.subr.mxu0 0.0
        %2162 = vmatpush2.xpose.msra.mxu0 0.0
        %2163 = vmatprep.subr.mxu0 0.0
        %2164 = vmatpush2.xpose.msra.mxu0 0.0
        %2165 = vmatprep.subr.mxu0 0.0
        %2166 = vmatpush2.xpose.msra.mxu0 0.0
        %2167 = vmatprep.subr.mxu0 0.0
        %2168 = vmatpush2.xpose.msra.mxu0 0.0
        %2169 = vmatprep.subr.mxu0 0.0
        %2170 = vmatpush2.xpose.msra.mxu0 0.0
        %2171 = vmatprep.subr.mxu0 0.0
        %2172 = vmatpush2.xpose.msra.mxu0 0.0
        %2173 = vmatprep.subr.mxu0 0.0
        %2174 = vmatpush2.xpose.msra.mxu0 0.0
        %2175 = vmatprep.subr.mxu0 0.0
        %2176 = vmatpush2.xpose.msra.mxu0 0.0
        %2177 = vmatprep.subr.mxu0 0.0
        %2178 = vmatpush2.xpose.msra.mxu0 0.0
        %2179 = vmatprep.subr.mxu0 0.0
        %2180 = vmatpush2.xpose.msra.mxu0 0.0
        %2181 = vmatprep.mubr.f32.mxu0 0.0
        %2182 = vmatmul.mubr.f32.gmra.mxu0 %v2113
        %v2183 = vpop.f32.mrf.mxu0
        %v2184 = vadd.f32 0.0, %v2183
        %v2185 = vpop.f32.mrf.mxu0
        %2186 = vdwg.mxu0
        %v2187 = vsel %vm2021, -1e+09, %v2184
        %v2188 = vsel %vm2023, %v2187, -inf
        %2189 = vmax.xlane.f32.xlu0 %v2188
        %v2190 = vpop.xlane.xlu0 %2189
        %v2191 = vsub.f32 %v2187, %v2190
        %v2192 = vmul.f32 %v2191, 1.442695
        %v2193 = vpow.pop %v2192
        %v2194 = vsel %vm2023, %v2193, 0.0
        %2195 = vadd.xlane.f32.xlu0 %v2194
        %v2196 = vpop.xlane.xlu0 %2195
        %v2197 = vrcp.pop %v2196
        %v2198 = vmul.f32 %v2193, %v2197
        %v2199 = vsel %vm2021, 0.0, %v2198
        %2201 = vrot.lane.b32.xlu0 %v1895, 64
        %v2202 = vpop.permute.xlu0 %2201
        %v2205 = vsel %vm2023, %v2199, 0
        %2207 = vmatprep.subr.mxu0 0.0
        %2208 = vmatpush1.msra.mxu0 0.0
        %2209 = vmatprep.subr.mxu0 0.0
        %2210 = vmatpush1.msra.mxu0 0.0
        %2211 = vmatprep.subr.mxu0 0.0
        %2212 = vmatpush1.msra.mxu0 0.0
        %2213 = vmatprep.subr.mxu0 0.0
        %2214 = vmatpush1.msra.mxu0 0.0
        %2215 = vmatprep.subr.mxu0 0.0
        %2216 = vmatpush1.msra.mxu0 0.0
        %2217 = vmatprep.subr.mxu0 0.0
        %2218 = vmatpush1.msra.mxu0 0.0
        %2219 = vmatprep.subr.mxu0 0.0
        %2220 = vmatpush1.msra.mxu0 0.0
        %2221 = vmatprep.subr.mxu0 0.0
        %2222 = vmatpush1.msra.mxu0 0.0
        %2223 = vmatprep.subr.mxu0 0.0
        %2224 = vmatpush1.msra.mxu0 0.0
        %2225 = vmatprep.subr.mxu0 0.0
        %2226 = vmatpush1.msra.mxu0 0.0
        %2227 = vmatprep.subr.mxu0 0.0
        %2228 = vmatpush1.msra.mxu0 0.0
        %2229 = vmatprep.subr.mxu0 0.0
        %2230 = vmatpush1.msra.mxu0 0.0
        %2231 = vmatprep.subr.mxu0 0.0
        %2232 = vmatpush1.msra.mxu0 0.0
        %2233 = vmatprep.subr.mxu0 0.0
        %2234 = vmatpush1.msra.mxu0 0.0
        %2235 = vmatprep.subr.mxu0 0.0
        %2236 = vmatpush1.msra.mxu0 0.0
        %2237 = vmatprep.subr.mxu0 0.0
        %2238 = vmatpush1.msra.mxu0 %v2202
        %2239 = vmatprep.subr.mxu0 0.0
        %2240 = vmatpush2.msra.mxu0 0.0
        %2241 = vmatprep.subr.mxu0 0.0
        %2242 = vmatpush2.msra.mxu0 0.0
        %2243 = vmatprep.subr.mxu0 0.0
        %2244 = vmatpush2.msra.mxu0 0.0
        %2245 = vmatprep.subr.mxu0 0.0
        %2246 = vmatpush2.msra.mxu0 0.0
        %2247 = vmatprep.subr.mxu0 0.0
        %2248 = vmatpush2.msra.mxu0 0.0
        %2249 = vmatprep.subr.mxu0 0.0
        %2250 = vmatpush2.msra.mxu0 0.0
        %2251 = vmatprep.subr.mxu0 0.0
        %2252 = vmatpush2.msra.mxu0 0.0
        %2253 = vmatprep.subr.mxu0 0.0
        %2254 = vmatpush2.msra.mxu0 0.0
        %2255 = vmatprep.subr.mxu0 0.0
        %2256 = vmatpush2.msra.mxu0 0.0
        %2257 = vmatprep.subr.mxu0 0.0
        %2258 = vmatpush2.msra.mxu0 0.0
        %2259 = vmatprep.subr.mxu0 0.0
        %2260 = vmatpush2.msra.mxu0 0.0
        %2261 = vmatprep.subr.mxu0 0.0
        %2262 = vmatpush2.msra.mxu0 0.0
        %2263 = vmatprep.subr.mxu0 0.0
        %2264 = vmatpush2.msra.mxu0 0.0
        %2265 = vmatprep.subr.mxu0 0.0
        %2266 = vmatpush2.msra.mxu0 0.0
        %2267 = vmatprep.subr.mxu0 0.0
        %2268 = vmatpush2.msra.mxu0 0.0
        %2269 = vmatprep.subr.mxu0 0.0
        %2270 = vmatpush2.msra.mxu0 0.0
        %2271 = vmatprep.mubr.f32.mxu0 0.0
        %2272 = vmatmul.mubr.f32.gmra.mxu0 %v2205
        %v2273 = vpop.f32.mrf.mxu0
        %v2274 = vadd.f32 0.0, %v2273
        %v2275 = vpop.f32.mrf.mxu0
        %2276 = vdwg.mxu0
        %v2278 = vsel %vm1942, %v1003, 0
        %v2281 = vsel %vm1942, %v1429, 0
        %2283 = vmatprep.subr.mxu0 0.0
        %2284 = vmatpush1.xpose.msra.mxu0 0.0
        %2285 = vmatprep.subr.mxu0 0.0
        %2286 = vmatpush1.xpose.msra.mxu0 0.0
        %2287 = vmatprep.subr.mxu0 0.0
        %2288 = vmatpush1.xpose.msra.mxu0 0.0
        %2289 = vmatprep.subr.mxu0 0.0
        %2290 = vmatpush1.xpose.msra.mxu0 0.0
        %2291 = vmatprep.subr.mxu0 0.0
        %2292 = vmatpush1.xpose.msra.mxu0 0.0
        %2293 = vmatprep.subr.mxu0 0.0
        %2294 = vmatpush1.xpose.msra.mxu0 0.0
        %2295 = vmatprep.subr.mxu0 0.0
        %2296 = vmatpush1.xpose.msra.mxu0 0.0
        %2297 = vmatprep.subr.mxu0 0.0
        %2298 = vmatpush1.xpose.msra.mxu0 0.0
        %2299 = vmatprep.subr.mxu0 0.0
        %2300 = vmatpush1.xpose.msra.mxu0 0.0
        %2301 = vmatprep.subr.mxu0 0.0
        %2302 = vmatpush1.xpose.msra.mxu0 0.0
        %2303 = vmatprep.subr.mxu0 0.0
        %2304 = vmatpush1.xpose.msra.mxu0 0.0
        %2305 = vmatprep.subr.mxu0 0.0
        %2306 = vmatpush1.xpose.msra.mxu0 0.0
        %2307 = vmatprep.subr.mxu0 0.0
        %2308 = vmatpush1.xpose.msra.mxu0 0.0
        %2309 = vmatprep.subr.mxu0 0.0
        %2310 = vmatpush1.xpose.msra.mxu0 0.0
        %2311 = vmatprep.subr.mxu0 0.0
        %2312 = vmatpush1.xpose.msra.mxu0 0.0
        %2313 = vmatprep.subr.mxu0 0.0
        %2314 = vmatpush1.xpose.msra.mxu0 %v2281
        %2315 = vmatprep.subr.mxu0 0.0
        %2316 = vmatpush2.xpose.msra.mxu0 0.0
        %2317 = vmatprep.subr.mxu0 0.0
        %2318 = vmatpush2.xpose.msra.mxu0 0.0
        %2319 = vmatprep.subr.mxu0 0.0
        %2320 = vmatpush2.xpose.msra.mxu0 0.0
        %2321 = vmatprep.subr.mxu0 0.0
        %2322 = vmatpush2.xpose.msra.mxu0 0.0
        %2323 = vmatprep.subr.mxu0 0.0
        %2324 = vmatpush2.xpose.msra.mxu0 0.0
        %2325 = vmatprep.subr.mxu0 0.0
        %2326 = vmatpush2.xpose.msra.mxu0 0.0
        %2327 = vmatprep.subr.mxu0 0.0
        %2328 = vmatpush2.xpose.msra.mxu0 0.0
        %2329 = vmatprep.subr.mxu0 0.0
        %2330 = vmatpush2.xpose.msra.mxu0 0.0
        %2331 = vmatprep.subr.mxu0 0.0
        %2332 = vmatpush2.xpose.msra.mxu0 0.0
        %2333 = vmatprep.subr.mxu0 0.0
        %2334 = vmatpush2.xpose.msra.mxu0 0.0
        %2335 = vmatprep.subr.mxu0 0.0
        %2336 = vmatpush2.xpose.msra.mxu0 0.0
        %2337 = vmatprep.subr.mxu0 0.0
        %2338 = vmatpush2.xpose.msra.mxu0 0.0
        %2339 = vmatprep.subr.mxu0 0.0
        %2340 = vmatpush2.xpose.msra.mxu0 0.0
        %2341 = vmatprep.subr.mxu0 0.0
        %2342 = vmatpush2.xpose.msra.mxu0 0.0
        %2343 = vmatprep.subr.mxu0 0.0
        %2344 = vmatpush2.xpose.msra.mxu0 0.0
        %2345 = vmatprep.subr.mxu0 0.0
        %2346 = vmatpush2.xpose.msra.mxu0 0.0
        %2347 = vmatprep.mubr.f32.mxu0 0.0
        %2348 = vmatmul.mubr.f32.gmra.mxu0 %v2278
        %v2349 = vpop.f32.mrf.mxu0
        %v2350 = vadd.f32 0.0, %v2349
        %v2351 = vpop.f32.mrf.mxu0
        %2352 = vdwg.mxu0
        %v2353 = vsel %vm2021, -1e+09, %v2350
        %v2354 = vsel %vm2023, %v2353, -inf
        %2355 = vmax.xlane.f32.xlu0 %v2354
        %v2356 = vpop.xlane.xlu0 %2355
        %v2357 = vsub.f32 %v2353, %v2356
        %v2358 = vmul.f32 %v2357, 1.442695
        %v2359 = vpow.pop %v2358
        %v2360 = vsel %vm2023, %v2359, 0.0
        %2361 = vadd.xlane.f32.xlu0 %v2360
        %v2362 = vpop.xlane.xlu0 %2361
        %v2363 = vrcp.pop %v2362
        %v2364 = vmul.f32 %v2359, %v2363
        %v2365 = vsel %vm2021, 0.0, %v2364
        %v2367 = vsel %vm2023, %v2365, 0
        %2369 = vmatprep.subr.mxu0 0.0
        %2370 = vmatpush1.msra.mxu0 0.0
        %2371 = vmatprep.subr.mxu0 0.0
        %2372 = vmatpush1.msra.mxu0 0.0
        %2373 = vmatprep.subr.mxu0 0.0
        %2374 = vmatpush1.msra.mxu0 0.0
        %2375 = vmatprep.subr.mxu0 0.0
        %2376 = vmatpush1.msra.mxu0 0.0
        %2377 = vmatprep.subr.mxu0 0.0
        %2378 = vmatpush1.msra.mxu0 0.0
        %2379 = vmatprep.subr.mxu0 0.0
        %2380 = vmatpush1.msra.mxu0 0.0
        %2381 = vmatprep.subr.mxu0 0.0
        %2382 = vmatpush1.msra.mxu0 0.0
        %2383 = vmatprep.subr.mxu0 0.0
        %2384 = vmatpush1.msra.mxu0 0.0
        %2385 = vmatprep.subr.mxu0 0.0
        %2386 = vmatpush1.msra.mxu0 0.0
        %2387 = vmatprep.subr.mxu0 0.0
        %2388 = vmatpush1.msra.mxu0 0.0
        %2389 = vmatprep.subr.mxu0 0.0
        %2390 = vmatpush1.msra.mxu0 0.0
        %2391 = vmatprep.subr.mxu0 0.0
        %2392 = vmatpush1.msra.mxu0 0.0
        %2393 = vmatprep.subr.mxu0 0.0
        %2394 = vmatpush1.msra.mxu0 0.0
        %2395 = vmatprep.subr.mxu0 0.0
        %2396 = vmatpush1.msra.mxu0 0.0
        %2397 = vmatprep.subr.mxu0 0.0
        %2398 = vmatpush1.msra.mxu0 0.0
        %2399 = vmatprep.subr.mxu0 0.0
        %2400 = vmatpush1.msra.mxu0 %v1897
        %2401 = vmatprep.subr.mxu0 0.0
        %2402 = vmatpush2.msra.mxu0 0.0
        %2403 = vmatprep.subr.mxu0 0.0
        %2404 = vmatpush2.msra.mxu0 0.0
        %2405 = vmatprep.subr.mxu0 0.0
        %2406 = vmatpush2.msra.mxu0 0.0
        %2407 = vmatprep.subr.mxu0 0.0
        %2408 = vmatpush2.msra.mxu0 0.0
        %2409 = vmatprep.subr.mxu0 0.0
        %2410 = vmatpush2.msra.mxu0 0.0
        %2411 = vmatprep.subr.mxu0 0.0
        %2412 = vmatpush2.msra.mxu0 0.0
        %2413 = vmatprep.subr.mxu0 0.0
        %2414 = vmatpush2.msra.mxu0 0.0
        %2415 = vmatprep.subr.mxu0 0.0
        %2416 = vmatpush2.msra.mxu0 0.0
        %2417 = vmatprep.subr.mxu0 0.0
        %2418 = vmatpush2.msra.mxu0 0.0
        %2419 = vmatprep.subr.mxu0 0.0
        %2420 = vmatpush2.msra.mxu0 0.0
        %2421 = vmatprep.subr.mxu0 0.0
        %2422 = vmatpush2.msra.mxu0 0.0
        %2423 = vmatprep.subr.mxu0 0.0
        %2424 = vmatpush2.msra.mxu0 0.0
        %2425 = vmatprep.subr.mxu0 0.0
        %2426 = vmatpush2.msra.mxu0 0.0
        %2427 = vmatprep.subr.mxu0 0.0
        %2428 = vmatpush2.msra.mxu0 0.0
        %2429 = vmatprep.subr.mxu0 0.0
        %2430 = vmatpush2.msra.mxu0 0.0
        %2431 = vmatprep.subr.mxu0 0.0
        %2432 = vmatpush2.msra.mxu0 0.0
        %2433 = vmatprep.mubr.f32.mxu0 0.0
        %2434 = vmatmul.mubr.f32.gmra.mxu0 %v2367
        %v2435 = vpop.f32.mrf.mxu0
        %v2436 = vadd.f32 0.0, %v2435
        %v2437 = vpop.f32.mrf.mxu0
        %2438 = vdwg.mxu0
        %2439 = vrot.lane.b32.xlu0 %v1003, 64
        %v2440 = vpop.permute.xlu0 %2439
        %2441 = vrot.lane.b32.xlu0 %v1429, 64
        %v2442 = vpop.permute.xlu0 %2441
        %v2443 = vsel %vm1942, %v2440, 0
        %v2445 = vsel %vm1942, %v2442, 0
        %2447 = vmatprep.subr.mxu0 0.0
        %2448 = vmatpush1.xpose.msra.mxu0 0.0
        %2449 = vmatprep.subr.mxu0 0.0
        %2450 = vmatpush1.xpose.msra.mxu0 0.0
        %2451 = vmatprep.subr.mxu0 0.0
        %2452 = vmatpush1.xpose.msra.mxu0 0.0
        %2453 = vmatprep.subr.mxu0 0.0
        %2454 = vmatpush1.xpose.msra.mxu0 0.0
        %2455 = vmatprep.subr.mxu0 0.0
        %2456 = vmatpush1.xpose.msra.mxu0 0.0
        %2457 = vmatprep.subr.mxu0 0.0
        %2458 = vmatpush1.xpose.msra.mxu0 0.0
        %2459 = vmatprep.subr.mxu0 0.0
        %2460 = vmatpush1.xpose.msra.mxu0 0.0
        %2461 = vmatprep.subr.mxu0 0.0
        %2462 = vmatpush1.xpose.msra.mxu0 0.0
        %2463 = vmatprep.subr.mxu0 0.0
        %2464 = vmatpush1.xpose.msra.mxu0 0.0
        %2465 = vmatprep.subr.mxu0 0.0
        %2466 = vmatpush1.xpose.msra.mxu0 0.0
        %2467 = vmatprep.subr.mxu0 0.0
        %2468 = vmatpush1.xpose.msra.mxu0 0.0
        %2469 = vmatprep.subr.mxu0 0.0
        %2470 = vmatpush1.xpose.msra.mxu0 0.0
        %2471 = vmatprep.subr.mxu0 0.0
        %2472 = vmatpush1.xpose.msra.mxu0 0.0
        %2473 = vmatprep.subr.mxu0 0.0
        %2474 = vmatpush1.xpose.msra.mxu0 0.0
        %2475 = vmatprep.subr.mxu0 0.0
        %2476 = vmatpush1.xpose.msra.mxu0 0.0
        %2477 = vmatprep.subr.mxu0 0.0
        %2478 = vmatpush1.xpose.msra.mxu0 %v2445
        %2479 = vmatprep.subr.mxu0 0.0
        %2480 = vmatpush2.xpose.msra.mxu0 0.0
        %2481 = vmatprep.subr.mxu0 0.0
        %2482 = vmatpush2.xpose.msra.mxu0 0.0
        %2483 = vmatprep.subr.mxu0 0.0
        %2484 = vmatpush2.xpose.msra.mxu0 0.0
        %2485 = vmatprep.subr.mxu0 0.0
        %2486 = vmatpush2.xpose.msra.mxu0 0.0
        %2487 = vmatprep.subr.mxu0 0.0
        %2488 = vmatpush2.xpose.msra.mxu0 0.0
        %2489 = vmatprep.subr.mxu0 0.0
        %2490 = vmatpush2.xpose.msra.mxu0 0.0
        %2491 = vmatprep.subr.mxu0 0.0
        %2492 = vmatpush2.xpose.msra.mxu0 0.0
        %2493 = vmatprep.subr.mxu0 0.0
        %2494 = vmatpush2.xpose.msra.mxu0 0.0
        %2495 = vmatprep.subr.mxu0 0.0
        %2496 = vmatpush2.xpose.msra.mxu0 0.0
        %2497 = vmatprep.subr.mxu0 0.0
        %2498 = vmatpush2.xpose.msra.mxu0 0.0
        %2499 = vmatprep.subr.mxu0 0.0
        %2500 = vmatpush2.xpose.msra.mxu0 0.0
        %2501 = vmatprep.subr.mxu0 0.0
        %2502 = vmatpush2.xpose.msra.mxu0 0.0
        %2503 = vmatprep.subr.mxu0 0.0
        %2504 = vmatpush2.xpose.msra.mxu0 0.0
        %2505 = vmatprep.subr.mxu0 0.0
        %2506 = vmatpush2.xpose.msra.mxu0 0.0
        %2507 = vmatprep.subr.mxu0 0.0
        %2508 = vmatpush2.xpose.msra.mxu0 0.0
        %2509 = vmatprep.subr.mxu0 0.0
        %2510 = vmatpush2.xpose.msra.mxu0 0.0
        %2511 = vmatprep.mubr.f32.mxu0 0.0
        %2512 = vmatmul.mubr.f32.gmra.mxu0 %v2443
        %v2513 = vpop.f32.mrf.mxu0
        %v2514 = vadd.f32 0.0, %v2513
        %v2515 = vpop.f32.mrf.mxu0
        %2516 = vdwg.mxu0
        %v2517 = vsel %vm2021, -1e+09, %v2514
        %v2518 = vsel %vm2023, %v2517, -inf
        %2519 = vmax.xlane.f32.xlu0 %v2518
        %v2520 = vpop.xlane.xlu0 %2519
        %v2521 = vsub.f32 %v2517, %v2520
        %v2522 = vmul.f32 %v2521, 1.442695
        %v2523 = vpow.pop %v2522
        %v2524 = vsel %vm2023, %v2523, 0.0
        %2525 = vadd.xlane.f32.xlu0 %v2524
        %v2526 = vpop.xlane.xlu0 %2525
        %v2527 = vrcp.pop %v2526
        %v2528 = vmul.f32 %v2523, %v2527
        %v2529 = vsel %vm2021, 0.0, %v2528
        %2531 = vrot.lane.b32.xlu0 %v1897, 64
        %v2532 = vpop.permute.xlu0 %2531
        %v2535 = vsel %vm2023, %v2529, 0
        %2537 = vmatprep.subr.mxu0 0.0
        %2538 = vmatpush1.msra.mxu0 0.0
        %2539 = vmatprep.subr.mxu0 0.0
        %2540 = vmatpush1.msra.mxu0 0.0
        %2541 = vmatprep.subr.mxu0 0.0
        %2542 = vmatpush1.msra.mxu0 0.0
        %2543 = vmatprep.subr.mxu0 0.0
        %2544 = vmatpush1.msra.mxu0 0.0
        %2545 = vmatprep.subr.mxu0 0.0
        %2546 = vmatpush1.msra.mxu0 0.0
        %2547 = vmatprep.subr.mxu0 0.0
        %2548 = vmatpush1.msra.mxu0 0.0
        %2549 = vmatprep.subr.mxu0 0.0
        %2550 = vmatpush1.msra.mxu0 0.0
        %2551 = vmatprep.subr.mxu0 0.0
        %2552 = vmatpush1.msra.mxu0 0.0
        %2553 = vmatprep.subr.mxu0 0.0
        %2554 = vmatpush1.msra.mxu0 0.0
        %2555 = vmatprep.subr.mxu0 0.0
        %2556 = vmatpush1.msra.mxu0 0.0
        %2557 = vmatprep.subr.mxu0 0.0
        %2558 = vmatpush1.msra.mxu0 0.0
        %2559 = vmatprep.subr.mxu0 0.0
        %2560 = vmatpush1.msra.mxu0 0.0
        %2561 = vmatprep.subr.mxu0 0.0
        %2562 = vmatpush1.msra.mxu0 0.0
        %2563 = vmatprep.subr.mxu0 0.0
        %2564 = vmatpush1.msra.mxu0 0.0
        %2565 = vmatprep.subr.mxu0 0.0
        %2566 = vmatpush1.msra.mxu0 0.0
        %2567 = vmatprep.subr.mxu0 0.0
        %2568 = vmatpush1.msra.mxu0 %v2532
        %2569 = vmatprep.subr.mxu0 0.0
        %2570 = vmatpush2.msra.mxu0 0.0
        %2571 = vmatprep.subr.mxu0 0.0
        %2572 = vmatpush2.msra.mxu0 0.0
        %2573 = vmatprep.subr.mxu0 0.0
        %2574 = vmatpush2.msra.mxu0 0.0
        %2575 = vmatprep.subr.mxu0 0.0
        %2576 = vmatpush2.msra.mxu0 0.0
        %2577 = vmatprep.subr.mxu0 0.0
        %2578 = vmatpush2.msra.mxu0 0.0
        %2579 = vmatprep.subr.mxu0 0.0
        %2580 = vmatpush2.msra.mxu0 0.0
        %2581 = vmatprep.subr.mxu0 0.0
        %2582 = vmatpush2.msra.mxu0 0.0
        %2583 = vmatprep.subr.mxu0 0.0
        %2584 = vmatpush2.msra.mxu0 0.0
        %2585 = vmatprep.subr.mxu0 0.0
        %2586 = vmatpush2.msra.mxu0 0.0
        %2587 = vmatprep.subr.mxu0 0.0
        %2588 = vmatpush2.msra.mxu0 0.0
        %2589 = vmatprep.subr.mxu0 0.0
        %2590 = vmatpush2.msra.mxu0 0.0
        %2591 = vmatprep.subr.mxu0 0.0
        %2592 = vmatpush2.msra.mxu0 0.0
        %2593 = vmatprep.subr.mxu0 0.0
        %2594 = vmatpush2.msra.mxu0 0.0
        %2595 = vmatprep.subr.mxu0 0.0
        %2596 = vmatpush2.msra.mxu0 0.0
        %2597 = vmatprep.subr.mxu0 0.0
        %2598 = vmatpush2.msra.mxu0 0.0
        %2599 = vmatprep.subr.mxu0 0.0
        %2600 = vmatpush2.msra.mxu0 0.0
        %2601 = vmatprep.mubr.f32.mxu0 0.0
        %2602 = vmatmul.mubr.f32.gmra.mxu0 %v2535
        %v2603 = vpop.f32.mrf.mxu0
        %v2604 = vadd.f32 0.0, %v2603
        %v2605 = vpop.f32.mrf.mxu0
        %2606 = vdwg.mxu0
        %v2608 = vsel %vm1942, %v1004, 0
        %v2611 = vsel %vm1942, %v1468, 0
        %2613 = vmatprep.subr.mxu0 0.0
        %2614 = vmatpush1.xpose.msra.mxu0 0.0
        %2615 = vmatprep.subr.mxu0 0.0
        %2616 = vmatpush1.xpose.msra.mxu0 0.0
        %2617 = vmatprep.subr.mxu0 0.0
        %2618 = vmatpush1.xpose.msra.mxu0 0.0
        %2619 = vmatprep.subr.mxu0 0.0
        %2620 = vmatpush1.xpose.msra.mxu0 0.0
        %2621 = vmatprep.subr.mxu0 0.0
        %2622 = vmatpush1.xpose.msra.mxu0 0.0
        %2623 = vmatprep.subr.mxu0 0.0
        %2624 = vmatpush1.xpose.msra.mxu0 0.0
        %2625 = vmatprep.subr.mxu0 0.0
        %2626 = vmatpush1.xpose.msra.mxu0 0.0
        %2627 = vmatprep.subr.mxu0 0.0
        %2628 = vmatpush1.xpose.msra.mxu0 0.0
        %2629 = vmatprep.subr.mxu0 0.0
        %2630 = vmatpush1.xpose.msra.mxu0 0.0
        %2631 = vmatprep.subr.mxu0 0.0
        %2632 = vmatpush1.xpose.msra.mxu0 0.0
        %2633 = vmatprep.subr.mxu0 0.0
        %2634 = vmatpush1.xpose.msra.mxu0 0.0
        %2635 = vmatprep.subr.mxu0 0.0
        %2636 = vmatpush1.xpose.msra.mxu0 0.0
        %2637 = vmatprep.subr.mxu0 0.0
        %2638 = vmatpush1.xpose.msra.mxu0 0.0
        %2639 = vmatprep.subr.mxu0 0.0
        %2640 = vmatpush1.xpose.msra.mxu0 0.0
        %2641 = vmatprep.subr.mxu0 0.0
        %2642 = vmatpush1.xpose.msra.mxu0 0.0
        %2643 = vmatprep.subr.mxu0 0.0
        %2644 = vmatpush1.xpose.msra.mxu0 %v2611
        %2645 = vmatprep.subr.mxu0 0.0
        %2646 = vmatpush2.xpose.msra.mxu0 0.0
        %2647 = vmatprep.subr.mxu0 0.0
        %2648 = vmatpush2.xpose.msra.mxu0 0.0
        %2649 = vmatprep.subr.mxu0 0.0
        %2650 = vmatpush2.xpose.msra.mxu0 0.0
        %2651 = vmatprep.subr.mxu0 0.0
        %2652 = vmatpush2.xpose.msra.mxu0 0.0
        %2653 = vmatprep.subr.mxu0 0.0
        %2654 = vmatpush2.xpose.msra.mxu0 0.0
        %2655 = vmatprep.subr.mxu0 0.0
        %2656 = vmatpush2.xpose.msra.mxu0 0.0
        %2657 = vmatprep.subr.mxu0 0.0
        %2658 = vmatpush2.xpose.msra.mxu0 0.0
        %2659 = vmatprep.subr.mxu0 0.0
        %2660 = vmatpush2.xpose.msra.mxu0 0.0
        %2661 = vmatprep.subr.mxu0 0.0
        %2662 = vmatpush2.xpose.msra.mxu0 0.0
        %2663 = vmatprep.subr.mxu0 0.0
        %2664 = vmatpush2.xpose.msra.mxu0 0.0
        %2665 = vmatprep.subr.mxu0 0.0
        %2666 = vmatpush2.xpose.msra.mxu0 0.0
        %2667 = vmatprep.subr.mxu0 0.0
        %2668 = vmatpush2.xpose.msra.mxu0 0.0
        %2669 = vmatprep.subr.mxu0 0.0
        %2670 = vmatpush2.xpose.msra.mxu0 0.0
        %2671 = vmatprep.subr.mxu0 0.0
        %2672 = vmatpush2.xpose.msra.mxu0 0.0
        %2673 = vmatprep.subr.mxu0 0.0
        %2674 = vmatpush2.xpose.msra.mxu0 0.0
        %2675 = vmatprep.subr.mxu0 0.0
        %2676 = vmatpush2.xpose.msra.mxu0 0.0
        %2677 = vmatprep.mubr.f32.mxu0 0.0
        %2678 = vmatmul.mubr.f32.gmra.mxu0 %v2608
        %v2679 = vpop.f32.mrf.mxu0
        %v2680 = vadd.f32 0.0, %v2679
        %v2681 = vpop.f32.mrf.mxu0
        %2682 = vdwg.mxu0
        %v2683 = vsel %vm2021, -1e+09, %v2680
        %v2684 = vsel %vm2023, %v2683, -inf
        %2685 = vmax.xlane.f32.xlu0 %v2684
        %v2686 = vpop.xlane.xlu0 %2685
        %v2687 = vsub.f32 %v2683, %v2686
        %v2688 = vmul.f32 %v2687, 1.442695
        %v2689 = vpow.pop %v2688
        %v2690 = vsel %vm2023, %v2689, 0.0
        %2691 = vadd.xlane.f32.xlu0 %v2690
        %v2692 = vpop.xlane.xlu0 %2691
        %v2693 = vrcp.pop %v2692
        %v2694 = vmul.f32 %v2689, %v2693
        %v2695 = vsel %vm2021, 0.0, %v2694
        %v2697 = vsel %vm2023, %v2695, 0
        %2699 = vmatprep.subr.mxu0 0.0
        %2700 = vmatpush1.msra.mxu0 0.0
        %2701 = vmatprep.subr.mxu0 0.0
        %2702 = vmatpush1.msra.mxu0 0.0
        %2703 = vmatprep.subr.mxu0 0.0
        %2704 = vmatpush1.msra.mxu0 0.0
        %2705 = vmatprep.subr.mxu0 0.0
        %2706 = vmatpush1.msra.mxu0 0.0
        %2707 = vmatprep.subr.mxu0 0.0
        %2708 = vmatpush1.msra.mxu0 0.0
        %2709 = vmatprep.subr.mxu0 0.0
        %2710 = vmatpush1.msra.mxu0 0.0
        %2711 = vmatprep.subr.mxu0 0.0
        %2712 = vmatpush1.msra.mxu0 0.0
        %2713 = vmatprep.subr.mxu0 0.0
        %2714 = vmatpush1.msra.mxu0 0.0
        %2715 = vmatprep.subr.mxu0 0.0
        %2716 = vmatpush1.msra.mxu0 0.0
        %2717 = vmatprep.subr.mxu0 0.0
        %2718 = vmatpush1.msra.mxu0 0.0
        %2719 = vmatprep.subr.mxu0 0.0
        %2720 = vmatpush1.msra.mxu0 0.0
        %2721 = vmatprep.subr.mxu0 0.0
        %2722 = vmatpush1.msra.mxu0 0.0
        %2723 = vmatprep.subr.mxu0 0.0
        %2724 = vmatpush1.msra.mxu0 0.0
        %2725 = vmatprep.subr.mxu0 0.0
        %2726 = vmatpush1.msra.mxu0 0.0
        %2727 = vmatprep.subr.mxu0 0.0
        %2728 = vmatpush1.msra.mxu0 0.0
        %2729 = vmatprep.subr.mxu0 0.0
        %2730 = vmatpush1.msra.mxu0 %v1936
        %2731 = vmatprep.subr.mxu0 0.0
        %2732 = vmatpush2.msra.mxu0 0.0
        %2733 = vmatprep.subr.mxu0 0.0
        %2734 = vmatpush2.msra.mxu0 0.0
        %2735 = vmatprep.subr.mxu0 0.0
        %2736 = vmatpush2.msra.mxu0 0.0
        %2737 = vmatprep.subr.mxu0 0.0
        %2738 = vmatpush2.msra.mxu0 0.0
        %2739 = vmatprep.subr.mxu0 0.0
        %2740 = vmatpush2.msra.mxu0 0.0
        %2741 = vmatprep.subr.mxu0 0.0
        %2742 = vmatpush2.msra.mxu0 0.0
        %2743 = vmatprep.subr.mxu0 0.0
        %2744 = vmatpush2.msra.mxu0 0.0
        %2745 = vmatprep.subr.mxu0 0.0
        %2746 = vmatpush2.msra.mxu0 0.0
        %2747 = vmatprep.subr.mxu0 0.0
        %2748 = vmatpush2.msra.mxu0 0.0
        %2749 = vmatprep.subr.mxu0 0.0
        %2750 = vmatpush2.msra.mxu0 0.0
        %2751 = vmatprep.subr.mxu0 0.0
        %2752 = vmatpush2.msra.mxu0 0.0
        %2753 = vmatprep.subr.mxu0 0.0
        %2754 = vmatpush2.msra.mxu0 0.0
        %2755 = vmatprep.subr.mxu0 0.0
        %2756 = vmatpush2.msra.mxu0 0.0
        %2757 = vmatprep.subr.mxu0 0.0
        %2758 = vmatpush2.msra.mxu0 0.0
        %2759 = vmatprep.subr.mxu0 0.0
        %2760 = vmatpush2.msra.mxu0 0.0
        %2761 = vmatprep.subr.mxu0 0.0
        %2762 = vmatpush2.msra.mxu0 0.0
        %2763 = vmatprep.mubr.f32.mxu0 0.0
        %2764 = vmatmul.mubr.f32.gmra.mxu0 %v2697
        %v2765 = vpop.f32.mrf.mxu0
        %v2766 = vadd.f32 0.0, %v2765
        %v2767 = vpop.f32.mrf.mxu0
        %2768 = vdwg.mxu0
        %2769 = vrot.lane.b32.xlu0 %v1004, 64
        %v2770 = vpop.permute.xlu0 %2769
        %2771 = vrot.lane.b32.xlu0 %v1468, 64
        %v2772 = vpop.permute.xlu0 %2771
        %v2773 = vsel %vm1942, %v2770, 0
        %v2775 = vsel %vm1942, %v2772, 0
        %2777 = vmatprep.subr.mxu0 0.0
        %2778 = vmatpush1.xpose.msra.mxu0 0.0
        %2779 = vmatprep.subr.mxu0 0.0
        %2780 = vmatpush1.xpose.msra.mxu0 0.0
        %2781 = vmatprep.subr.mxu0 0.0
        %2782 = vmatpush1.xpose.msra.mxu0 0.0
        %2783 = vmatprep.subr.mxu0 0.0
        %2784 = vmatpush1.xpose.msra.mxu0 0.0
        %2785 = vmatprep.subr.mxu0 0.0
        %2786 = vmatpush1.xpose.msra.mxu0 0.0
        %2787 = vmatprep.subr.mxu0 0.0
        %2788 = vmatpush1.xpose.msra.mxu0 0.0
        %2789 = vmatprep.subr.mxu0 0.0
        %2790 = vmatpush1.xpose.msra.mxu0 0.0
        %2791 = vmatprep.subr.mxu0 0.0
        %2792 = vmatpush1.xpose.msra.mxu0 0.0
        %2793 = vmatprep.subr.mxu0 0.0
        %2794 = vmatpush1.xpose.msra.mxu0 0.0
        %2795 = vmatprep.subr.mxu0 0.0
        %2796 = vmatpush1.xpose.msra.mxu0 0.0
        %2797 = vmatprep.subr.mxu0 0.0
        %2798 = vmatpush1.xpose.msra.mxu0 0.0
        %2799 = vmatprep.subr.mxu0 0.0
        %2800 = vmatpush1.xpose.msra.mxu0 0.0
        %2801 = vmatprep.subr.mxu0 0.0
        %2802 = vmatpush1.xpose.msra.mxu0 0.0
        %2803 = vmatprep.subr.mxu0 0.0
        %2804 = vmatpush1.xpose.msra.mxu0 0.0
        %2805 = vmatprep.subr.mxu0 0.0
        %2806 = vmatpush1.xpose.msra.mxu0 0.0
        %2807 = vmatprep.subr.mxu0 0.0
        %2808 = vmatpush1.xpose.msra.mxu0 %v2775
        %2809 = vmatprep.subr.mxu0 0.0
        %2810 = vmatpush2.xpose.msra.mxu0 0.0
        %2811 = vmatprep.subr.mxu0 0.0
        %2812 = vmatpush2.xpose.msra.mxu0 0.0
        %2813 = vmatprep.subr.mxu0 0.0
        %2814 = vmatpush2.xpose.msra.mxu0 0.0
        %2815 = vmatprep.subr.mxu0 0.0
        %2816 = vmatpush2.xpose.msra.mxu0 0.0
        %2817 = vmatprep.subr.mxu0 0.0
        %2818 = vmatpush2.xpose.msra.mxu0 0.0
        %2819 = vmatprep.subr.mxu0 0.0
        %2820 = vmatpush2.xpose.msra.mxu0 0.0
        %2821 = vmatprep.subr.mxu0 0.0
        %2822 = vmatpush2.xpose.msra.mxu0 0.0
        %2823 = vmatprep.subr.mxu0 0.0
        %2824 = vmatpush2.xpose.msra.mxu0 0.0
        %2825 = vmatprep.subr.mxu0 0.0
        %2826 = vmatpush2.xpose.msra.mxu0 0.0
        %2827 = vmatprep.subr.mxu0 0.0
        %2828 = vmatpush2.xpose.msra.mxu0 0.0
        %2829 = vmatprep.subr.mxu0 0.0
        %2830 = vmatpush2.xpose.msra.mxu0 0.0
        %2831 = vmatprep.subr.mxu0 0.0
        %2832 = vmatpush2.xpose.msra.mxu0 0.0
        %2833 = vmatprep.subr.mxu0 0.0
        %2834 = vmatpush2.xpose.msra.mxu0 0.0
        %2835 = vmatprep.subr.mxu0 0.0
        %2836 = vmatpush2.xpose.msra.mxu0 0.0
        %2837 = vmatprep.subr.mxu0 0.0
        %2838 = vmatpush2.xpose.msra.mxu0 0.0
        %2839 = vmatprep.subr.mxu0 0.0
        %2840 = vmatpush2.xpose.msra.mxu0 0.0
        %2841 = vmatprep.mubr.f32.mxu0 0.0
        %2842 = vmatmul.mubr.f32.gmra.mxu0 %v2773
        %v2843 = vpop.f32.mrf.mxu0
        %v2844 = vadd.f32 0.0, %v2843
        %v2845 = vpop.f32.mrf.mxu0
        %2846 = vdwg.mxu0
        %v2847 = vsel %vm2021, -1e+09, %v2844
        %v2848 = vsel %vm2023, %v2847, -inf
        %2849 = vmax.xlane.f32.xlu0 %v2848
        %v2850 = vpop.xlane.xlu0 %2849
        %v2851 = vsub.f32 %v2847, %v2850
        %v2852 = vmul.f32 %v2851, 1.442695
        %v2853 = vpow.pop %v2852
        %v2854 = vsel %vm2023, %v2853, 0.0
        %2855 = vadd.xlane.f32.xlu0 %v2854
        %v2856 = vpop.xlane.xlu0 %2855
        %v2857 = vrcp.pop %v2856
        %v2858 = vmul.f32 %v2853, %v2857
        %v2859 = vsel %vm2021, 0.0, %v2858
        %2861 = vrot.lane.b32.xlu0 %v1936, 64
        %v2862 = vpop.permute.xlu0 %2861
        %v2865 = vsel %vm2023, %v2859, 0
        %2867 = vmatprep.subr.mxu0 0.0
        %2868 = vmatpush1.msra.mxu0 0.0
        %2869 = vmatprep.subr.mxu0 0.0
        %2870 = vmatpush1.msra.mxu0 0.0
        %2871 = vmatprep.subr.mxu0 0.0
        %2872 = vmatpush1.msra.mxu0 0.0
        %2873 = vmatprep.subr.mxu0 0.0
        %2874 = vmatpush1.msra.mxu0 0.0
        %2875 = vmatprep.subr.mxu0 0.0
        %2876 = vmatpush1.msra.mxu0 0.0
        %2877 = vmatprep.subr.mxu0 0.0
        %2878 = vmatpush1.msra.mxu0 0.0
        %2879 = vmatprep.subr.mxu0 0.0
        %2880 = vmatpush1.msra.mxu0 0.0
        %2881 = vmatprep.subr.mxu0 0.0
        %2882 = vmatpush1.msra.mxu0 0.0
        %2883 = vmatprep.subr.mxu0 0.0
        %2884 = vmatpush1.msra.mxu0 0.0
        %2885 = vmatprep.subr.mxu0 0.0
        %2886 = vmatpush1.msra.mxu0 0.0
        %2887 = vmatprep.subr.mxu0 0.0
        %2888 = vmatpush1.msra.mxu0 0.0
        %2889 = vmatprep.subr.mxu0 0.0
        %2890 = vmatpush1.msra.mxu0 0.0
        %2891 = vmatprep.subr.mxu0 0.0
        %2892 = vmatpush1.msra.mxu0 0.0
        %2893 = vmatprep.subr.mxu0 0.0
        %2894 = vmatpush1.msra.mxu0 0.0
        %2895 = vmatprep.subr.mxu0 0.0
        %2896 = vmatpush1.msra.mxu0 0.0
        %2897 = vmatprep.subr.mxu0 0.0
        %2898 = vmatpush1.msra.mxu0 %v2862
        %2899 = vmatprep.subr.mxu0 0.0
        %2900 = vmatpush2.msra.mxu0 0.0
        %2901 = vmatprep.subr.mxu0 0.0
        %2902 = vmatpush2.msra.mxu0 0.0
        %2903 = vmatprep.subr.mxu0 0.0
        %2904 = vmatpush2.msra.mxu0 0.0
        %2905 = vmatprep.subr.mxu0 0.0
        %2906 = vmatpush2.msra.mxu0 0.0
        %2907 = vmatprep.subr.mxu0 0.0
        %2908 = vmatpush2.msra.mxu0 0.0
        %2909 = vmatprep.subr.mxu0 0.0
        %2910 = vmatpush2.msra.mxu0 0.0
        %2911 = vmatprep.subr.mxu0 0.0
        %2912 = vmatpush2.msra.mxu0 0.0
        %2913 = vmatprep.subr.mxu0 0.0
        %2914 = vmatpush2.msra.mxu0 0.0
        %2915 = vmatprep.subr.mxu0 0.0
        %2916 = vmatpush2.msra.mxu0 0.0
        %2917 = vmatprep.subr.mxu0 0.0
        %2918 = vmatpush2.msra.mxu0 0.0
        %2919 = vmatprep.subr.mxu0 0.0
        %2920 = vmatpush2.msra.mxu0 0.0
        %2921 = vmatprep.subr.mxu0 0.0
        %2922 = vmatpush2.msra.mxu0 0.0
        %2923 = vmatprep.subr.mxu0 0.0
        %2924 = vmatpush2.msra.mxu0 0.0
        %2925 = vmatprep.subr.mxu0 0.0
        %2926 = vmatpush2.msra.mxu0 0.0
        %2927 = vmatprep.subr.mxu0 0.0
        %2928 = vmatpush2.msra.mxu0 0.0
        %2929 = vmatprep.subr.mxu0 0.0
        %2930 = vmatpush2.msra.mxu0 0.0
        %2931 = vmatprep.mubr.f32.mxu0 0.0
        %2932 = vmatmul.mubr.f32.gmra.mxu0 %v2865
        %v2933 = vpop.f32.mrf.mxu0
        %v2934 = vadd.f32 0.0, %v2933
        %v2935 = vpop.f32.mrf.mxu0
        %2936 = vdwg.mxu0
        %v2938 = vsel %vm1942, %v1005, 0
        %v2941 = vsel %vm1942, %v1470, 0
        %2943 = vmatprep.subr.mxu0 0.0
        %2944 = vmatpush1.xpose.msra.mxu0 0.0
        %2945 = vmatprep.subr.mxu0 0.0
        %2946 = vmatpush1.xpose.msra.mxu0 0.0
        %2947 = vmatprep.subr.mxu0 0.0
        %2948 = vmatpush1.xpose.msra.mxu0 0.0
        %2949 = vmatprep.subr.mxu0 0.0
        %2950 = vmatpush1.xpose.msra.mxu0 0.0
        %2951 = vmatprep.subr.mxu0 0.0
        %2952 = vmatpush1.xpose.msra.mxu0 0.0
        %2953 = vmatprep.subr.mxu0 0.0
        %2954 = vmatpush1.xpose.msra.mxu0 0.0
        %2955 = vmatprep.subr.mxu0 0.0
        %2956 = vmatpush1.xpose.msra.mxu0 0.0
        %2957 = vmatprep.subr.mxu0 0.0
        %2958 = vmatpush1.xpose.msra.mxu0 0.0
        %2959 = vmatprep.subr.mxu0 0.0
        %2960 = vmatpush1.xpose.msra.mxu0 0.0
        %2961 = vmatprep.subr.mxu0 0.0
        %2962 = vmatpush1.xpose.msra.mxu0 0.0
        %2963 = vmatprep.subr.mxu0 0.0
        %2964 = vmatpush1.xpose.msra.mxu0 0.0
        %2965 = vmatprep.subr.mxu0 0.0
        %2966 = vmatpush1.xpose.msra.mxu0 0.0
        %2967 = vmatprep.subr.mxu0 0.0
        %2968 = vmatpush1.xpose.msra.mxu0 0.0
        %2969 = vmatprep.subr.mxu0 0.0
        %2970 = vmatpush1.xpose.msra.mxu0 0.0
        %2971 = vmatprep.subr.mxu0 0.0
        %2972 = vmatpush1.xpose.msra.mxu0 0.0
        %2973 = vmatprep.subr.mxu0 0.0
        %2974 = vmatpush1.xpose.msra.mxu0 %v2941
        %2975 = vmatprep.subr.mxu0 0.0
        %2976 = vmatpush2.xpose.msra.mxu0 0.0
        %2977 = vmatprep.subr.mxu0 0.0
        %2978 = vmatpush2.xpose.msra.mxu0 0.0
        %2979 = vmatprep.subr.mxu0 0.0
        %2980 = vmatpush2.xpose.msra.mxu0 0.0
        %2981 = vmatprep.subr.mxu0 0.0
        %2982 = vmatpush2.xpose.msra.mxu0 0.0
        %2983 = vmatprep.subr.mxu0 0.0
        %2984 = vmatpush2.xpose.msra.mxu0 0.0
        %2985 = vmatprep.subr.mxu0 0.0
        %2986 = vmatpush2.xpose.msra.mxu0 0.0
        %2987 = vmatprep.subr.mxu0 0.0
        %2988 = vmatpush2.xpose.msra.mxu0 0.0
        %2989 = vmatprep.subr.mxu0 0.0
        %2990 = vmatpush2.xpose.msra.mxu0 0.0
        %2991 = vmatprep.subr.mxu0 0.0
        %2992 = vmatpush2.xpose.msra.mxu0 0.0
        %2993 = vmatprep.subr.mxu0 0.0
        %2994 = vmatpush2.xpose.msra.mxu0 0.0
        %2995 = vmatprep.subr.mxu0 0.0
        %2996 = vmatpush2.xpose.msra.mxu0 0.0
        %2997 = vmatprep.subr.mxu0 0.0
        %2998 = vmatpush2.xpose.msra.mxu0 0.0
        %2999 = vmatprep.subr.mxu0 0.0
        %3000 = vmatpush2.xpose.msra.mxu0 0.0
        %3001 = vmatprep.subr.mxu0 0.0
        %3002 = vmatpush2.xpose.msra.mxu0 0.0
        %3003 = vmatprep.subr.mxu0 0.0
        %3004 = vmatpush2.xpose.msra.mxu0 0.0
        %3005 = vmatprep.subr.mxu0 0.0
        %3006 = vmatpush2.xpose.msra.mxu0 0.0
        %3007 = vmatprep.mubr.f32.mxu0 0.0
        %3008 = vmatmul.mubr.f32.gmra.mxu0 %v2938
        %v3009 = vpop.f32.mrf.mxu0
        %v3010 = vadd.f32 0.0, %v3009
        %v3011 = vpop.f32.mrf.mxu0
        %3012 = vdwg.mxu0
        %v3013 = vsel %vm2021, -1e+09, %v3010
        %v3014 = vsel %vm2023, %v3013, -inf
        %3015 = vmax.xlane.f32.xlu0 %v3014
        %v3016 = vpop.xlane.xlu0 %3015
        %v3017 = vsub.f32 %v3013, %v3016
        %v3018 = vmul.f32 %v3017, 1.442695
        %v3019 = vpow.pop %v3018
        %v3020 = vsel %vm2023, %v3019, 0.0
        %3021 = vadd.xlane.f32.xlu0 %v3020
        %v3022 = vpop.xlane.xlu0 %3021
        %v3023 = vrcp.pop %v3022
        %v3024 = vmul.f32 %v3019, %v3023
        %v3025 = vsel %vm2021, 0.0, %v3024
        %v3027 = vsel %vm2023, %v3025, 0
        %3029 = vmatprep.subr.mxu0 0.0
        %3030 = vmatpush1.msra.mxu0 0.0
        %3031 = vmatprep.subr.mxu0 0.0
        %3032 = vmatpush1.msra.mxu0 0.0
        %3033 = vmatprep.subr.mxu0 0.0
        %3034 = vmatpush1.msra.mxu0 0.0
        %3035 = vmatprep.subr.mxu0 0.0
        %3036 = vmatpush1.msra.mxu0 0.0
        %3037 = vmatprep.subr.mxu0 0.0
        %3038 = vmatpush1.msra.mxu0 0.0
        %3039 = vmatprep.subr.mxu0 0.0
        %3040 = vmatpush1.msra.mxu0 0.0
        %3041 = vmatprep.subr.mxu0 0.0
        %3042 = vmatpush1.msra.mxu0 0.0
        %3043 = vmatprep.subr.mxu0 0.0
        %3044 = vmatpush1.msra.mxu0 0.0
        %3045 = vmatprep.subr.mxu0 0.0
        %3046 = vmatpush1.msra.mxu0 0.0
        %3047 = vmatprep.subr.mxu0 0.0
        %3048 = vmatpush1.msra.mxu0 0.0
        %3049 = vmatprep.subr.mxu0 0.0
        %3050 = vmatpush1.msra.mxu0 0.0
        %3051 = vmatprep.subr.mxu0 0.0
        %3052 = vmatpush1.msra.mxu0 0.0
        %3053 = vmatprep.subr.mxu0 0.0
        %3054 = vmatpush1.msra.mxu0 0.0
        %3055 = vmatprep.subr.mxu0 0.0
        %3056 = vmatpush1.msra.mxu0 0.0
        %3057 = vmatprep.subr.mxu0 0.0
        %3058 = vmatpush1.msra.mxu0 0.0
        %3059 = vmatprep.subr.mxu0 0.0
        %3060 = vmatpush1.msra.mxu0 %v1938
        %3061 = vmatprep.subr.mxu0 0.0
        %3062 = vmatpush2.msra.mxu0 0.0
        %3063 = vmatprep.subr.mxu0 0.0
        %3064 = vmatpush2.msra.mxu0 0.0
        %3065 = vmatprep.subr.mxu0 0.0
        %3066 = vmatpush2.msra.mxu0 0.0
        %3067 = vmatprep.subr.mxu0 0.0
        %3068 = vmatpush2.msra.mxu0 0.0
        %3069 = vmatprep.subr.mxu0 0.0
        %3070 = vmatpush2.msra.mxu0 0.0
        %3071 = vmatprep.subr.mxu0 0.0
        %3072 = vmatpush2.msra.mxu0 0.0
        %3073 = vmatprep.subr.mxu0 0.0
        %3074 = vmatpush2.msra.mxu0 0.0
        %3075 = vmatprep.subr.mxu0 0.0
        %3076 = vmatpush2.msra.mxu0 0.0
        %3077 = vmatprep.subr.mxu0 0.0
        %3078 = vmatpush2.msra.mxu0 0.0
        %3079 = vmatprep.subr.mxu0 0.0
        %3080 = vmatpush2.msra.mxu0 0.0
        %3081 = vmatprep.subr.mxu0 0.0
        %3082 = vmatpush2.msra.mxu0 0.0
        %3083 = vmatprep.subr.mxu0 0.0
        %3084 = vmatpush2.msra.mxu0 0.0
        %3085 = vmatprep.subr.mxu0 0.0
        %3086 = vmatpush2.msra.mxu0 0.0
        %3087 = vmatprep.subr.mxu0 0.0
        %3088 = vmatpush2.msra.mxu0 0.0
        %3089 = vmatprep.subr.mxu0 0.0
        %3090 = vmatpush2.msra.mxu0 0.0
        %3091 = vmatprep.subr.mxu0 0.0
        %3092 = vmatpush2.msra.mxu0 0.0
        %3093 = vmatprep.mubr.f32.mxu0 0.0
        %3094 = vmatmul.mubr.f32.gmra.mxu0 %v3027
        %v3095 = vpop.f32.mrf.mxu0
        %v3096 = vadd.f32 0.0, %v3095
        %v3097 = vpop.f32.mrf.mxu0
        %3098 = vdwg.mxu0
        %3099 = vrot.lane.b32.xlu0 %v1005, 64
        %v3100 = vpop.permute.xlu0 %3099
        %3101 = vrot.lane.b32.xlu0 %v1470, 64
        %v3102 = vpop.permute.xlu0 %3101
        %v3103 = vsel %vm1942, %v3100, 0
        %v3105 = vsel %vm1942, %v3102, 0
        %3107 = vmatprep.subr.mxu0 0.0
        %3108 = vmatpush1.xpose.msra.mxu0 0.0
        %3109 = vmatprep.subr.mxu0 0.0
        %3110 = vmatpush1.xpose.msra.mxu0 0.0
        %3111 = vmatprep.subr.mxu0 0.0
        %3112 = vmatpush1.xpose.msra.mxu0 0.0
        %3113 = vmatprep.subr.mxu0 0.0
        %3114 = vmatpush1.xpose.msra.mxu0 0.0
        %3115 = vmatprep.subr.mxu0 0.0
        %3116 = vmatpush1.xpose.msra.mxu0 0.0
        %3117 = vmatprep.subr.mxu0 0.0
        %3118 = vmatpush1.xpose.msra.mxu0 0.0
        %3119 = vmatprep.subr.mxu0 0.0
        %3120 = vmatpush1.xpose.msra.mxu0 0.0
        %3121 = vmatprep.subr.mxu0 0.0
        %3122 = vmatpush1.xpose.msra.mxu0 0.0
        %3123 = vmatprep.subr.mxu0 0.0
        %3124 = vmatpush1.xpose.msra.mxu0 0.0
        %3125 = vmatprep.subr.mxu0 0.0
        %3126 = vmatpush1.xpose.msra.mxu0 0.0
        %3127 = vmatprep.subr.mxu0 0.0
        %3128 = vmatpush1.xpose.msra.mxu0 0.0
        %3129 = vmatprep.subr.mxu0 0.0
        %3130 = vmatpush1.xpose.msra.mxu0 0.0
        %3131 = vmatprep.subr.mxu0 0.0
        %3132 = vmatpush1.xpose.msra.mxu0 0.0
        %3133 = vmatprep.subr.mxu0 0.0
        %3134 = vmatpush1.xpose.msra.mxu0 0.0
        %3135 = vmatprep.subr.mxu0 0.0
        %3136 = vmatpush1.xpose.msra.mxu0 0.0
        %3137 = vmatprep.subr.mxu0 0.0
        %3138 = vmatpush1.xpose.msra.mxu0 %v3105
        %3139 = vmatprep.subr.mxu0 0.0
        %3140 = vmatpush2.xpose.msra.mxu0 0.0
        %3141 = vmatprep.subr.mxu0 0.0
        %3142 = vmatpush2.xpose.msra.mxu0 0.0
        %3143 = vmatprep.subr.mxu0 0.0
        %3144 = vmatpush2.xpose.msra.mxu0 0.0
        %3145 = vmatprep.subr.mxu0 0.0
        %3146 = vmatpush2.xpose.msra.mxu0 0.0
        %3147 = vmatprep.subr.mxu0 0.0
        %3148 = vmatpush2.xpose.msra.mxu0 0.0
        %3149 = vmatprep.subr.mxu0 0.0
        %3150 = vmatpush2.xpose.msra.mxu0 0.0
        %3151 = vmatprep.subr.mxu0 0.0
        %3152 = vmatpush2.xpose.msra.mxu0 0.0
        %3153 = vmatprep.subr.mxu0 0.0
        %3154 = vmatpush2.xpose.msra.mxu0 0.0
        %3155 = vmatprep.subr.mxu0 0.0
        %3156 = vmatpush2.xpose.msra.mxu0 0.0
        %3157 = vmatprep.subr.mxu0 0.0
        %3158 = vmatpush2.xpose.msra.mxu0 0.0
        %3159 = vmatprep.subr.mxu0 0.0
        %3160 = vmatpush2.xpose.msra.mxu0 0.0
        %3161 = vmatprep.subr.mxu0 0.0
        %3162 = vmatpush2.xpose.msra.mxu0 0.0
        %3163 = vmatprep.subr.mxu0 0.0
        %3164 = vmatpush2.xpose.msra.mxu0 0.0
        %3165 = vmatprep.subr.mxu0 0.0
        %3166 = vmatpush2.xpose.msra.mxu0 0.0
        %3167 = vmatprep.subr.mxu0 0.0
        %3168 = vmatpush2.xpose.msra.mxu0 0.0
        %3169 = vmatprep.subr.mxu0 0.0
        %3170 = vmatpush2.xpose.msra.mxu0 0.0
        %3171 = vmatprep.mubr.f32.mxu0 0.0
        %3172 = vmatmul.mubr.f32.gmra.mxu0 %v3103
        %v3173 = vpop.f32.mrf.mxu0
        %v3174 = vadd.f32 0.0, %v3173
        %v3175 = vpop.f32.mrf.mxu0
        %3176 = vdwg.mxu0
        %v3177 = vsel %vm2021, -1e+09, %v3174
        %v3178 = vsel %vm2023, %v3177, -inf
        %3179 = vmax.xlane.f32.xlu0 %v3178
        %v3180 = vpop.xlane.xlu0 %3179
        %v3181 = vsub.f32 %v3177, %v3180
        %v3182 = vmul.f32 %v3181, 1.442695
        %v3183 = vpow.pop %v3182
        %v3184 = vsel %vm2023, %v3183, 0.0
        %3185 = vadd.xlane.f32.xlu0 %v3184
        %v3186 = vpop.xlane.xlu0 %3185
        %v3187 = vrcp.pop %v3186
        %v3188 = vmul.f32 %v3183, %v3187
        %v3189 = vsel %vm2021, 0.0, %v3188
        %3191 = vrot.lane.b32.xlu0 %v1938, 64
        %v3192 = vpop.permute.xlu0 %3191
        %v3195 = vsel %vm2023, %v3189, 0
        %3197 = vmatprep.subr.mxu0 0.0
        %3198 = vmatpush1.msra.mxu0 0.0
        %3199 = vmatprep.subr.mxu0 0.0
        %3200 = vmatpush1.msra.mxu0 0.0
        %3201 = vmatprep.subr.mxu0 0.0
        %3202 = vmatpush1.msra.mxu0 0.0
        %3203 = vmatprep.subr.mxu0 0.0
        %3204 = vmatpush1.msra.mxu0 0.0
        %3205 = vmatprep.subr.mxu0 0.0
        %3206 = vmatpush1.msra.mxu0 0.0
        %3207 = vmatprep.subr.mxu0 0.0
        %3208 = vmatpush1.msra.mxu0 0.0
        %3209 = vmatprep.subr.mxu0 0.0
        %3210 = vmatpush1.msra.mxu0 0.0
        %3211 = vmatprep.subr.mxu0 0.0
        %3212 = vmatpush1.msra.mxu0 0.0
        %3213 = vmatprep.subr.mxu0 0.0
        %3214 = vmatpush1.msra.mxu0 0.0
        %3215 = vmatprep.subr.mxu0 0.0
        %3216 = vmatpush1.msra.mxu0 0.0
        %3217 = vmatprep.subr.mxu0 0.0
        %3218 = vmatpush1.msra.mxu0 0.0
        %3219 = vmatprep.subr.mxu0 0.0
        %3220 = vmatpush1.msra.mxu0 0.0
        %3221 = vmatprep.subr.mxu0 0.0
        %3222 = vmatpush1.msra.mxu0 0.0
        %3223 = vmatprep.subr.mxu0 0.0
        %3224 = vmatpush1.msra.mxu0 0.0
        %3225 = vmatprep.subr.mxu0 0.0
        %3226 = vmatpush1.msra.mxu0 0.0
        %3227 = vmatprep.subr.mxu0 0.0
        %3228 = vmatpush1.msra.mxu0 %v3192
        %3229 = vmatprep.subr.mxu0 0.0
        %3230 = vmatpush2.msra.mxu0 0.0
        %3231 = vmatprep.subr.mxu0 0.0
        %3232 = vmatpush2.msra.mxu0 0.0
        %3233 = vmatprep.subr.mxu0 0.0
        %3234 = vmatpush2.msra.mxu0 0.0
        %3235 = vmatprep.subr.mxu0 0.0
        %3236 = vmatpush2.msra.mxu0 0.0
        %3237 = vmatprep.subr.mxu0 0.0
        %3238 = vmatpush2.msra.mxu0 0.0
        %3239 = vmatprep.subr.mxu0 0.0
        %3240 = vmatpush2.msra.mxu0 0.0
        %3241 = vmatprep.subr.mxu0 0.0
        %3242 = vmatpush2.msra.mxu0 0.0
        %3243 = vmatprep.subr.mxu0 0.0
        %3244 = vmatpush2.msra.mxu0 0.0
        %3245 = vmatprep.subr.mxu0 0.0
        %3246 = vmatpush2.msra.mxu0 0.0
        %3247 = vmatprep.subr.mxu0 0.0
        %3248 = vmatpush2.msra.mxu0 0.0
        %3249 = vmatprep.subr.mxu0 0.0
        %3250 = vmatpush2.msra.mxu0 0.0
        %3251 = vmatprep.subr.mxu0 0.0
        %3252 = vmatpush2.msra.mxu0 0.0
        %3253 = vmatprep.subr.mxu0 0.0
        %3254 = vmatpush2.msra.mxu0 0.0
        %3255 = vmatprep.subr.mxu0 0.0
        %3256 = vmatpush2.msra.mxu0 0.0
        %3257 = vmatprep.subr.mxu0 0.0
        %3258 = vmatpush2.msra.mxu0 0.0
        %3259 = vmatprep.subr.mxu0 0.0
        %3260 = vmatpush2.msra.mxu0 0.0
        %3261 = vmatprep.mubr.f32.mxu0 0.0
        %3262 = vmatmul.mubr.f32.gmra.mxu0 %v3195
        %v3263 = vpop.f32.mrf.mxu0
        %v3264 = vadd.f32 0.0, %v3263
        %v3265 = vpop.f32.mrf.mxu0
        %3266 = vdwg.mxu0
        %3268 = vrot.lane.b32.xlu0 %v2274, 64
        %v3269 = vpop.permute.xlu0 %3268
        %3272 = vrot.lane.b32.xlu0 %v2604, 64
        %v3273 = vpop.permute.xlu0 %3272
        %3276 = vrot.lane.b32.xlu0 %v2934, 64
        %v3277 = vpop.permute.xlu0 %3276
        %3280 = vrot.lane.b32.xlu0 %v3264, 64
        %v3281 = vpop.permute.xlu0 %3280
        %v3283 = vsel %vm1942, %v2106, %v3269
        %v3284 = vsel %vm1942, %v2436, %v3273
        %v3285 = vsel %vm1942, %v2766, %v3277
        %v3286 = vsel %vm1942, %v3096, %v3281
        %v3287 = vpack.c.bf16 %v3283, %v3283
        %v3288 = vpack.c.bf16 %v3284, %v3284
        %v3289 = vpack.c.bf16 %v3285, %v3285
        %v3290 = vpack.c.bf16 %v3286, %v3286
        %v3291 = vld [vmem:[#allocation13] sm:$0xff]
        %v3292 = vld [vmem:[#allocation13 + $0x8] sm:$0xff]
        %v3293 = vld [vmem:[#allocation13 + $0x10] sm:$0xff]
        %v3294 = vld [vmem:[#allocation13 + $0x18] sm:$0xff]
        %v3295 = vld [vmem:[#allocation13 + $0x20] sm:$0xff]
        %v3296 = vld [vmem:[#allocation13 + $0x28] sm:$0xff]
        %v3297 = vld [vmem:[#allocation13 + $0x30] sm:$0xff]
        %v3298 = vld [vmem:[#allocation13 + $0x38] sm:$0xff]
        %v3299 = vld [vmem:[#allocation13 + $0x40] sm:$0xff]
        %v3300 = vld [vmem:[#allocation13 + $0x48] sm:$0xff]
        %v3301 = vld [vmem:[#allocation13 + $0x50] sm:$0xff]
        %v3302 = vld [vmem:[#allocation13 + $0x58] sm:$0xff]
        %v3303 = vld [vmem:[#allocation13 + $0x60] sm:$0xff]
        %v3304 = vld [vmem:[#allocation13 + $0x68] sm:$0xff]
        %v3305 = vld [vmem:[#allocation13 + $0x70] sm:$0xff]
        %v3306 = vld [vmem:[#allocation13 + $0x78] sm:$0xff]
        %v3307 = vld [vmem:[#allocation13 + $0x80] sm:$0xff]
        %v3308 = vld [vmem:[#allocation13 + $0x88] sm:$0xff]
        %v3309 = vld [vmem:[#allocation13 + $0x90] sm:$0xff]
        %v3310 = vld [vmem:[#allocation13 + $0x98] sm:$0xff]
        %v3311 = vld [vmem:[#allocation13 + $0xa0] sm:$0xff]
        %v3312 = vld [vmem:[#allocation13 + $0xa8] sm:$0xff]
        %v3313 = vld [vmem:[#allocation13 + $0xb0] sm:$0xff]
        %v3314 = vld [vmem:[#allocation13 + $0xb8] sm:$0xff]
        %v3315 = vld [vmem:[#allocation13 + $0xc0] sm:$0xff]
        %v3316 = vld [vmem:[#allocation13 + $0xc8] sm:$0xff]
        %v3317 = vld [vmem:[#allocation13 + $0xd0] sm:$0xff]
        %v3318 = vld [vmem:[#allocation13 + $0xd8] sm:$0xff]
        %v3319 = vld [vmem:[#allocation13 + $0xe0] sm:$0xff]
        %v3320 = vld [vmem:[#allocation13 + $0xe8] sm:$0xff]
        %v3321 = vld [vmem:[#allocation13 + $0xf0] sm:$0xff]
        %v3322 = vld [vmem:[#allocation13 + $0xf8] sm:$0xff]
        %v3323 = vld [vmem:[#allocation13 + $0x100] sm:$0xff]
        %v3324 = vld [vmem:[#allocation13 + $0x108] sm:$0xff]
        %v3325 = vld [vmem:[#allocation13 + $0x110] sm:$0xff]
        %v3326 = vld [vmem:[#allocation13 + $0x118] sm:$0xff]
        %v3327 = vld [vmem:[#allocation13 + $0x120] sm:$0xff]
        %v3328 = vld [vmem:[#allocation13 + $0x128] sm:$0xff]
        %v3329 = vld [vmem:[#allocation13 + $0x130] sm:$0xff]
        %v3330 = vld [vmem:[#allocation13 + $0x138] sm:$0xff]
        %v3331 = vld [vmem:[#allocation13 + $0x140] sm:$0xff]
        %v3332 = vld [vmem:[#allocation13 + $0x148] sm:$0xff]
        %v3333 = vld [vmem:[#allocation13 + $0x150] sm:$0xff]
        %v3334 = vld [vmem:[#allocation13 + $0x158] sm:$0xff]
        %v3335 = vld [vmem:[#allocation13 + $0x160] sm:$0xff]
        %v3336 = vld [vmem:[#allocation13 + $0x168] sm:$0xff]
        %v3337 = vld [vmem:[#allocation13 + $0x170] sm:$0xff]
        %v3338 = vld [vmem:[#allocation13 + $0x178] sm:$0xff]
        %v3339 = vld [vmem:[#allocation13 + $0x180] sm:$0xff]
        %v3340 = vld [vmem:[#allocation13 + $0x188] sm:$0xff]
        %v3341 = vld [vmem:[#allocation13 + $0x190] sm:$0xff]
        %v3342 = vld [vmem:[#allocation13 + $0x198] sm:$0xff]
        %v3343 = vld [vmem:[#allocation13 + $0x1a0] sm:$0xff]
        %v3344 = vld [vmem:[#allocation13 + $0x1a8] sm:$0xff]
        %v3345 = vld [vmem:[#allocation13 + $0x1b0] sm:$0xff]
        %v3346 = vld [vmem:[#allocation13 + $0x1b8] sm:$0xff]
        %v3347 = vld [vmem:[#allocation13 + $0x1c0] sm:$0xff]
        %v3348 = vld [vmem:[#allocation13 + $0x1c8] sm:$0xff]
        %v3349 = vld [vmem:[#allocation13 + $0x1d0] sm:$0xff]
        %v3350 = vld [vmem:[#allocation13 + $0x1d8] sm:$0xff]
        %v3351 = vld [vmem:[#allocation13 + $0x1e0] sm:$0xff]
        %v3352 = vld [vmem:[#allocation13 + $0x1e8] sm:$0xff]
        %v3353 = vld [vmem:[#allocation13 + $0x1f0] sm:$0xff]
        %v3354 = vld [vmem:[#allocation13 + $0x1f8] sm:$0xff]
        %v3419 = vunpack.c.l.b16 %v3291
        %v3420 = vunpack.c.h.b16 %v3291
        %v3421 = vunpack.c.l.b16 %v3292
        %v3422 = vunpack.c.h.b16 %v3292
        %v3423 = vunpack.c.l.b16 %v3293
        %v3424 = vunpack.c.h.b16 %v3293
        %v3425 = vunpack.c.l.b16 %v3294
        %v3426 = vunpack.c.h.b16 %v3294
        %v3427 = vunpack.c.l.b16 %v3295
        %v3428 = vunpack.c.h.b16 %v3295
        %v3429 = vunpack.c.l.b16 %v3296
        %v3430 = vunpack.c.h.b16 %v3296
        %v3431 = vunpack.c.l.b16 %v3297
        %v3432 = vunpack.c.h.b16 %v3297
        %v3433 = vunpack.c.l.b16 %v3298
        %v3434 = vunpack.c.h.b16 %v3298
        %v3435 = vunpack.c.l.b16 %v3299
        %v3436 = vunpack.c.h.b16 %v3299
        %v3437 = vunpack.c.l.b16 %v3300
        %v3438 = vunpack.c.h.b16 %v3300
        %v3439 = vunpack.c.l.b16 %v3301
        %v3440 = vunpack.c.h.b16 %v3301
        %v3441 = vunpack.c.l.b16 %v3302
        %v3442 = vunpack.c.h.b16 %v3302
        %v3443 = vunpack.c.l.b16 %v3303
        %v3444 = vunpack.c.h.b16 %v3303
        %v3445 = vunpack.c.l.b16 %v3304
        %v3446 = vunpack.c.h.b16 %v3304
        %v3447 = vunpack.c.l.b16 %v3305
        %v3448 = vunpack.c.h.b16 %v3305
        %v3449 = vunpack.c.l.b16 %v3306
        %v3450 = vunpack.c.h.b16 %v3306
        %v3451 = vunpack.c.l.b16 %v3307
        %v3452 = vunpack.c.h.b16 %v3307
        %v3453 = vunpack.c.l.b16 %v3308
        %v3454 = vunpack.c.h.b16 %v3308
        %v3455 = vunpack.c.l.b16 %v3309
        %v3456 = vunpack.c.h.b16 %v3309
        %v3457 = vunpack.c.l.b16 %v3310
        %v3458 = vunpack.c.h.b16 %v3310
        %v3459 = vunpack.c.l.b16 %v3311
        %v3460 = vunpack.c.h.b16 %v3311
        %v3461 = vunpack.c.l.b16 %v3312
        %v3462 = vunpack.c.h.b16 %v3312
        %v3463 = vunpack.c.l.b16 %v3313
        %v3464 = vunpack.c.h.b16 %v3313
        %v3465 = vunpack.c.l.b16 %v3314
        %v3466 = vunpack.c.h.b16 %v3314
        %v3467 = vunpack.c.l.b16 %v3315
        %v3468 = vunpack.c.h.b16 %v3315
        %v3469 = vunpack.c.l.b16 %v3316
        %v3470 = vunpack.c.h.b16 %v3316
        %v3471 = vunpack.c.l.b16 %v3317
        %v3472 = vunpack.c.h.b16 %v3317
        %v3473 = vunpack.c.l.b16 %v3318
        %v3474 = vunpack.c.h.b16 %v3318
        %v3475 = vunpack.c.l.b16 %v3319
        %v3476 = vunpack.c.h.b16 %v3319
        %v3477 = vunpack.c.l.b16 %v3320
        %v3478 = vunpack.c.h.b16 %v3320
        %v3479 = vunpack.c.l.b16 %v3321
        %v3480 = vunpack.c.h.b16 %v3321
        %v3481 = vunpack.c.l.b16 %v3322
        %v3482 = vunpack.c.h.b16 %v3322
        %v3483 = vunpack.c.l.b16 %v3323
        %v3484 = vunpack.c.h.b16 %v3323
        %v3485 = vunpack.c.l.b16 %v3324
        %v3486 = vunpack.c.h.b16 %v3324
        %v3487 = vunpack.c.l.b16 %v3325
        %v3488 = vunpack.c.h.b16 %v3325
        %v3489 = vunpack.c.l.b16 %v3326
        %v3490 = vunpack.c.h.b16 %v3326
        %v3491 = vunpack.c.l.b16 %v3327
        %v3492 = vunpack.c.h.b16 %v3327
        %v3493 = vunpack.c.l.b16 %v3328
        %v3494 = vunpack.c.h.b16 %v3328
        %v3495 = vunpack.c.l.b16 %v3329
        %v3496 = vunpack.c.h.b16 %v3329
        %v3497 = vunpack.c.l.b16 %v3330
        %v3498 = vunpack.c.h.b16 %v3330
        %v3499 = vunpack.c.l.b16 %v3331
        %v3500 = vunpack.c.h.b16 %v3331
        %v3501 = vunpack.c.l.b16 %v3332
        %v3502 = vunpack.c.h.b16 %v3332
        %v3503 = vunpack.c.l.b16 %v3333
        %v3504 = vunpack.c.h.b16 %v3333
        %v3505 = vunpack.c.l.b16 %v3334
        %v3506 = vunpack.c.h.b16 %v3334
        %v3507 = vunpack.c.l.b16 %v3335
        %v3508 = vunpack.c.h.b16 %v3335
        %v3509 = vunpack.c.l.b16 %v3336
        %v3510 = vunpack.c.h.b16 %v3336
        %v3511 = vunpack.c.l.b16 %v3337
        %v3512 = vunpack.c.h.b16 %v3337
        %v3513 = vunpack.c.l.b16 %v3338
        %v3514 = vunpack.c.h.b16 %v3338
        %v3515 = vunpack.c.l.b16 %v3339
        %v3516 = vunpack.c.h.b16 %v3339
        %v3517 = vunpack.c.l.b16 %v3340
        %v3518 = vunpack.c.h.b16 %v3340
        %v3519 = vunpack.c.l.b16 %v3341
        %v3520 = vunpack.c.h.b16 %v3341
        %v3521 = vunpack.c.l.b16 %v3342
        %v3522 = vunpack.c.h.b16 %v3342
        %v3523 = vunpack.c.l.b16 %v3343
        %v3524 = vunpack.c.h.b16 %v3343
        %v3525 = vunpack.c.l.b16 %v3344
        %v3526 = vunpack.c.h.b16 %v3344
        %v3527 = vunpack.c.l.b16 %v3345
        %v3528 = vunpack.c.h.b16 %v3345
        %v3529 = vunpack.c.l.b16 %v3346
        %v3530 = vunpack.c.h.b16 %v3346
        %v3531 = vunpack.c.l.b16 %v3347
        %v3532 = vunpack.c.h.b16 %v3347
        %v3533 = vunpack.c.l.b16 %v3348
        %v3534 = vunpack.c.h.b16 %v3348
        %v3535 = vunpack.c.l.b16 %v3349
        %v3536 = vunpack.c.h.b16 %v3349
        %v3537 = vunpack.c.l.b16 %v3350
        %v3538 = vunpack.c.h.b16 %v3350
        %v3539 = vunpack.c.l.b16 %v3351
        %v3540 = vunpack.c.h.b16 %v3351
        %v3541 = vunpack.c.l.b16 %v3352
        %v3542 = vunpack.c.h.b16 %v3352
        %v3543 = vunpack.c.l.b16 %v3353
        %v3544 = vunpack.c.h.b16 %v3353
        %v3545 = vunpack.c.l.b16 %v3354
        %v3546 = vunpack.c.h.b16 %v3354
        %v3547 = vpack.c.b16 %v3423, %v3419
        %v3548 = vpack.c.b16 %v3424, %v3420
        %v3549 = vpack.c.b16 %v3425, %v3421
        %v3550 = vpack.c.b16 %v3426, %v3422
        %v3551 = vpack.c.b16 %v3431, %v3427
        %v3552 = vpack.c.b16 %v3432, %v3428
        %v3553 = vpack.c.b16 %v3433, %v3429
        %v3554 = vpack.c.b16 %v3434, %v3430
        %v3555 = vpack.c.b16 %v3439, %v3435
        %v3556 = vpack.c.b16 %v3440, %v3436
        %v3557 = vpack.c.b16 %v3441, %v3437
        %v3558 = vpack.c.b16 %v3442, %v3438
        %v3559 = vpack.c.b16 %v3447, %v3443
        %v3560 = vpack.c.b16 %v3448, %v3444
        %v3561 = vpack.c.b16 %v3449, %v3445
        %v3562 = vpack.c.b16 %v3450, %v3446
        %v3563 = vpack.c.b16 %v3455, %v3451
        %v3564 = vpack.c.b16 %v3456, %v3452
        %v3565 = vpack.c.b16 %v3457, %v3453
        %v3566 = vpack.c.b16 %v3458, %v3454
        %v3567 = vpack.c.b16 %v3463, %v3459
        %v3568 = vpack.c.b16 %v3464, %v3460
        %v3569 = vpack.c.b16 %v3465, %v3461
        %v3570 = vpack.c.b16 %v3466, %v3462
        %v3571 = vpack.c.b16 %v3471, %v3467
        %v3572 = vpack.c.b16 %v3472, %v3468
        %v3573 = vpack.c.b16 %v3473, %v3469
        %v3574 = vpack.c.b16 %v3474, %v3470
        %v3575 = vpack.c.b16 %v3479, %v3475
        %v3576 = vpack.c.b16 %v3480, %v3476
        %v3577 = vpack.c.b16 %v3481, %v3477
        %v3578 = vpack.c.b16 %v3482, %v3478
        %v3579 = vpack.c.b16 %v3487, %v3483
        %v3580 = vpack.c.b16 %v3488, %v3484
        %v3581 = vpack.c.b16 %v3489, %v3485
        %v3582 = vpack.c.b16 %v3490, %v3486
        %v3583 = vpack.c.b16 %v3495, %v3491
        %v3584 = vpack.c.b16 %v3496, %v3492
        %v3585 = vpack.c.b16 %v3497, %v3493
        %v3586 = vpack.c.b16 %v3498, %v3494
        %v3587 = vpack.c.b16 %v3503, %v3499
        %v3588 = vpack.c.b16 %v3504, %v3500
        %v3589 = vpack.c.b16 %v3505, %v3501
        %v3590 = vpack.c.b16 %v3506, %v3502
        %v3591 = vpack.c.b16 %v3511, %v3507
        %v3592 = vpack.c.b16 %v3512, %v3508
        %v3593 = vpack.c.b16 %v3513, %v3509
        %v3594 = vpack.c.b16 %v3514, %v3510
        %v3595 = vpack.c.b16 %v3519, %v3515
        %v3596 = vpack.c.b16 %v3520, %v3516
        %v3597 = vpack.c.b16 %v3521, %v3517
        %v3598 = vpack.c.b16 %v3522, %v3518
        %v3599 = vpack.c.b16 %v3527, %v3523
        %v3600 = vpack.c.b16 %v3528, %v3524
        %v3601 = vpack.c.b16 %v3529, %v3525
        %v3602 = vpack.c.b16 %v3530, %v3526
        %v3603 = vpack.c.b16 %v3535, %v3531
        %v3604 = vpack.c.b16 %v3536, %v3532
        %v3605 = vpack.c.b16 %v3537, %v3533
        %v3606 = vpack.c.b16 %v3538, %v3534
        %v3607 = vpack.c.b16 %v3543, %v3539
        %v3608 = vpack.c.b16 %v3544, %v3540
        %v3609 = vpack.c.b16 %v3545, %v3541
        %v3610 = vpack.c.b16 %v3546, %v3542
        %3675 = vmatprep.subr.bf16.mxu0 %v3576
        %3676 = vmatpush1.bf16.xpose.msra.mxu0 %v3575
        %3677 = vmatprep.subr.bf16.mxu0 %v3572
        %3678 = vmatpush1.bf16.xpose.msra.mxu0 %v3571
        %3679 = vmatprep.subr.bf16.mxu0 %v3568
        %3680 = vmatpush1.bf16.xpose.msra.mxu0 %v3567
        %3681 = vmatprep.subr.bf16.mxu0 %v3564
        %3682 = vmatpush1.bf16.xpose.msra.mxu0 %v3563
        %3683 = vmatprep.subr.bf16.mxu0 %v3560
        %3684 = vmatpush1.bf16.xpose.msra.mxu0 %v3559
        %3685 = vmatprep.subr.bf16.mxu0 %v3556
        %3686 = vmatpush1.bf16.xpose.msra.mxu0 %v3555
        %3687 = vmatprep.subr.bf16.mxu0 %v3552
        %3688 = vmatpush1.bf16.xpose.msra.mxu0 %v3551
        %3689 = vmatprep.subr.bf16.mxu0 %v3548
        %3690 = vmatpush1.bf16.xpose.msra.mxu0 %v3547
        %3691 = vmatprep.subr.bf16.mxu0 %v3608
        %3692 = vmatpush2.bf16.xpose.msra.mxu0 %v3607
        %3693 = vmatprep.subr.bf16.mxu0 %v3604
        %3694 = vmatpush2.bf16.xpose.msra.mxu0 %v3603
        %3695 = vmatprep.subr.bf16.mxu0 %v3600
        %3696 = vmatpush2.bf16.xpose.msra.mxu0 %v3599
        %3697 = vmatprep.subr.bf16.mxu0 %v3596
        %3698 = vmatpush2.bf16.xpose.msra.mxu0 %v3595
        %3699 = vmatprep.subr.bf16.mxu0 %v3592
        %3700 = vmatpush2.bf16.xpose.msra.mxu0 %v3591
        %3701 = vmatprep.subr.bf16.mxu0 %v3588
        %3702 = vmatpush2.bf16.xpose.msra.mxu0 %v3587
        %3703 = vmatprep.subr.bf16.mxu0 %v3584
        %3704 = vmatpush2.bf16.xpose.msra.mxu0 %v3583
        %3705 = vmatprep.subr.bf16.mxu0 %v3580
        %3706 = vmatpush2.bf16.xpose.msra.mxu0 %v3579
        %3707 = vmatprep.mubr.bf16.mxu0 %v3288
        %3708 = vmatmul.mubr.bf16.gmra.mxu0 %v3287
        %v3709 = vpop.f32.mrf.mxu0
        %v3710 = vadd.f32 %v526, %v3709
        %v3711 = vpop.f32.mrf.mxu0
        %v3712 = vadd.f32 %v527, %v3711
        %v3713 = vpop.f32.mrf.mxu0
        %v3714 = vpop.f32.mrf.mxu0
        %3715 = vdwg.mxu0
        %3716 = vmatprep.subr.bf16.mxu0 %v3578
        %3717 = vmatpush1.bf16.xpose.msra.mxu0 %v3577
        %3718 = vmatprep.subr.bf16.mxu0 %v3574
        %3719 = vmatpush1.bf16.xpose.msra.mxu0 %v3573
        %3720 = vmatprep.subr.bf16.mxu0 %v3570
        %3721 = vmatpush1.bf16.xpose.msra.mxu0 %v3569
        %3722 = vmatprep.subr.bf16.mxu0 %v3566
        %3723 = vmatpush1.bf16.xpose.msra.mxu0 %v3565
        %3724 = vmatprep.subr.bf16.mxu0 %v3562
        %3725 = vmatpush1.bf16.xpose.msra.mxu0 %v3561
        %3726 = vmatprep.subr.bf16.mxu0 %v3558
        %3727 = vmatpush1.bf16.xpose.msra.mxu0 %v3557
        %3728 = vmatprep.subr.bf16.mxu0 %v3554
        %3729 = vmatpush1.bf16.xpose.msra.mxu0 %v3553
        %3730 = vmatprep.subr.bf16.mxu0 %v3550
        %3731 = vmatpush1.bf16.xpose.msra.mxu0 %v3549
        %3732 = vmatprep.subr.bf16.mxu0 %v3610
        %3733 = vmatpush2.bf16.xpose.msra.mxu0 %v3609
        %3734 = vmatprep.subr.bf16.mxu0 %v3606
        %3735 = vmatpush2.bf16.xpose.msra.mxu0 %v3605
        %3736 = vmatprep.subr.bf16.mxu0 %v3602
        %3737 = vmatpush2.bf16.xpose.msra.mxu0 %v3601
        %3738 = vmatprep.subr.bf16.mxu0 %v3598
        %3739 = vmatpush2.bf16.xpose.msra.mxu0 %v3597
        %3740 = vmatprep.subr.bf16.mxu0 %v3594
        %3741 = vmatpush2.bf16.xpose.msra.mxu0 %v3593
        %3742 = vmatprep.subr.bf16.mxu0 %v3590
        %3743 = vmatpush2.bf16.xpose.msra.mxu0 %v3589
        %3744 = vmatprep.subr.bf16.mxu0 %v3586
        %3745 = vmatpush2.bf16.xpose.msra.mxu0 %v3585
        %3746 = vmatprep.subr.bf16.mxu0 %v3582
        %3747 = vmatpush2.bf16.xpose.msra.mxu0 %v3581
        %3748 = vmatprep.mubr.bf16.mxu0 %v3290
        %3749 = vmatmul.mubr.bf16.gmra.mxu0 %v3289
        %v3750 = vpop.f32.mrf.mxu0
        %v3751 = vadd.f32 %v3710, %v3750
        %v3752 = vpop.f32.mrf.mxu0
        %v3753 = vadd.f32 %v3712, %v3752
        %v3754 = vpop.f32.mrf.mxu0
        %v3755 = vpop.f32.mrf.mxu0
        %3756 = vdwg.mxu0
        %v3757 = vadd.f32 %v3751, %v3753
        %3758 = vadd.xlane.f32.xlu0 %v3757
        %v3759 = vpop.xlane.xlu0 %3758
        %v3760 = vrcp.pop 256.0
        %v3761 = vmul.f32 %v3759, %v3760
        %v3762 = vsub.f32 %v3751, %v3761
        %v3763 = vsub.f32 %v3753, %v3761
        %v3764 = vmul.f32 %v3762, %v3762
        %v3765 = vmul.f32 %v3763, %v3763
        %v3766 = vadd.f32 %v3764, %v3765
        %3767 = vadd.xlane.f32.xlu0 %v3766
        %v3768 = vpop.xlane.xlu0 %3767
        %v3769 = vmul.f32 %v3768, %v3760
        %v3770 = vadd.f32 %v3769, 1e-05
        %v3771 = vrsqrt.pop %v3770
        %v3772 = vmul.f32 %v3762, %v3771
        %v3773 = vmul.f32 %v3763, %v3771
        %v3774 = vld [vmem:[%s8] sm:$0x3]
        %v3776 = vlaneseq
        %v3777 = vshrl.u32 %v3776, 7
        %v3778 = vsub.s32 0, %v3777
        %v3779 = vrot.slane %v3774, %v3778
        %v3780 = vlaneseq
        %v3781 = vshrl.u32 %v3780, 7
        %v3782 = vsub.s32 1, %v3781
        %v3783 = vrot.slane %v3774, %v3782
        %v3786 = vmul.f32 %v3772, %v3779
        %v3787 = vmul.f32 %v3773, %v3783
        %v3788 = vld [vmem:[%s9] sm:$0x3]
        %v3790 = vlaneseq
        %v3791 = vshrl.u32 %v3790, 7
        %v3792 = vsub.s32 0, %v3791
        %v3793 = vrot.slane %v3788, %v3792
        %v3794 = vlaneseq
        %v3795 = vshrl.u32 %v3794, 7
        %v3796 = vsub.s32 1, %v3795
        %v3797 = vrot.slane %v3788, %v3796
        %v3800 = vadd.f32 %v3786, %v3793
        %v3801 = vadd.f32 %v3787, %v3797
        %3802 = vst [vmem:[%s519] sm:$0xff] %v3800
        %3803 = vst [vmem:[%s519 + $0x8] sm:$0xff] %v3801
        %s3804 = sand.u32 %s270, 1
        %s3805 = scalar_lea.sflag [#allocation4], %s3804
        %s3806 = sand.u32 %s270, 1
        %s3807 = smul.addr %s3806, 16
        %s3808 = scalar_lea.vmem [#allocation14], %s3807
        // Predicated region
        $region89: #{tpu_custom_call.1} parent=59 // pred_check
          %p3809 = pneg %p280
        $region90: #{tpu_custom_call.1} parent=59 // pred_check_branch
          %3811 = sbr.rel (%p3809) target = $region92
        $region91: #{tpu_custom_call.1} parent=59 // pred_region
          %s3813 = ssub.s32 256, 256
          %3814 = vsyncadd %s3805, %s3813
          %s3815 = smul.addr %s32, 2
          %s3816 = smul.addr %s3815, 128
          %s3817 = scalar_lea.hbm %s10, %s3816
          %s3819 = sshll.u32 %s3808, 4
          %s3820 = int_to_ptr.vmem [resolvable:$true] %s3819
          %3822 = dma.vmem_to_hbm [thread:$0]  %s3820, 256, %s3817, %s3805
        $region92: #{tpu_custom_call.1} parent=59 // pred_fallthru
          _
      $region60: #{tpu_custom_call.1} parent=5 // pred_fallthru
        _
      %p3823 = scmp.le.s32.totalorder 2, %s27
      // Predicated region
      $region93: #{tpu_custom_call.1} parent=5 // pred_check
        %p3824 = pneg %p3823
      $region94: #{tpu_custom_call.1} parent=5 // pred_check_branch
        %3826 = sbr.rel (%p3824) target = $region96
      $region95: #{tpu_custom_call.1} parent=5 // pred_region
        %s3827 = ssub.s32 %s27, 2
        // Predicated region
        $region97: #{tpu_custom_call.1} parent=95 // pred_check
          %p3828 = pneg %p286
        $region98: #{tpu_custom_call.1} parent=95 // pred_check_branch
          %3830 = sbr.rel (%p3828) target = $region100
        $region99: #{tpu_custom_call.1} parent=95 // pred_region
          %s3831 = sand.u32 %s271, 1
          %s3832 = scalar_lea.sflag [#allocation4], %s3831
          %s3833 = sand.u32 %s271, 1
          %s3834 = smul.addr %s3833, 16
          %s3835 = scalar_lea.vmem [#allocation14], %s3834
          %3836 = dma.done %s3832, 256
        $region100: #{tpu_custom_call.1} parent=95 // pred_fallthru
          _
      $region96: #{tpu_custom_call.1} parent=5 // pred_fallthru
        _
    $region6: #{tpu_custom_call.1} parent=1 // loop_footer
      %s31 = sadd.s32 1, %s27
    $region7: #{tpu_custom_call.1} parent=1 // loop_footer_branch
      %26 = sbr.rel target = $region3
    $region8: #{tpu_custom_call.1} parent=1 // loop_exit
      _
    %3837 = vsyncpa [#allocation3], 1
    %s3838 = scalar_lea.sflag [#allocation3], 1
    %3839 = vsyncpa %s3838, 1
    %3840 = vsyncpa [#allocation6], 1
    %s3841 = scalar_lea.sflag [#allocation6], 1
    %3842 = vsyncpa %s3841, 1
    %3843 = vsyncpa [#allocation9], 1
    %3844 = vsyncpa [#allocation12], 1
    %3845 = vsyncpa [#allocation4], 1
    %s3846 = scalar_lea.sflag [#allocation4], 1
    %3847 = vsyncpa %s3846, 1

</llo_original>
